<compile_context>
chip_gen: v6e
topology: v6e:2x2x1
jax: 0.10.0
libtpu: 0.0.40
codegen_flags: <defaults>
</compile_context>

<pallas_src>
import numpy as np
import jax
import jax.numpy as jnp
from jax.experimental import pallas as pl
from jax.experimental.pallas import tpu as pltpu

# (kernel_size, padding, dilation) for large / sparse1 / sparse2 / sparse3
BRANCHES = ((49, 24, 1), (7, 144, 48), (6, 40, 16), (6, 20, 8))
PAD_MAX = max(p for _, p, _ in BRANCHES)              # 144
TOTAL_TAPS = sum(k for k, _, _ in BRANCHES)           # 68
XPAD_OFF = ((PAD_MAX + 127) // 128) * 128             # 256: lane-aligned left margin
BN_EPS = 1e-5


# ---------------------------------------------------------------------------
# Pallas kernel: fused ResidualG forward for one batch element
# ---------------------------------------------------------------------------
def _residual_g_kernel(x_ref, w_ref, scale_ref, shift_ref, o_ref,
                       xpad_ref, xs_ref):
    """
    x_ref     : (Cin, L)                 unpadded input
    w_ref     : (Cout, TOTAL_TAPS*Cin)   all branches' taps folded into one contraction
    scale_ref : (Cout, 1)                gamma / sqrt(running_var + eps)
    shift_ref : (Cout, 1)                beta + scale*(sum_of_conv_biases - running_mean)
    o_ref     : (Cin + Cout, L)          torch.cat((x, BN(sum of branches)), dim=1)
    xpad_ref  : (Cin, XPAD_OFF + L + PAD_MAX) VMEM scratch, zero-padded input
    xs_ref    : (TOTAL_TAPS*Cin, L)      VMEM scratch, im2col of all 68 taps
    """
    cin, L = x_ref.shape
    cout = w_ref.shape[0]

    # Zero-pad once with the max padding; x lands at a 128-aligned lane offset
    # so the center write is an unmasked, lane-dense store.
    xpad_ref[...] = jnp.zeros_like(xpad_ref)
    xpad_ref[:, pl.ds(XPAD_OFF, L)] = x_ref[...]

    # im2col: stack the 68 strided tap windows along the contraction axis so the
    # whole 4-branch dilated conv becomes a single MXU matmul.
    idx = 0
    for (k, pad, dil) in BRANCHES:
        off0 = XPAD_OFF - pad
        for t in range(k):                                     # static unroll
            xs_ref[pl.ds(idx * cin, cin), :] = xpad_ref[:, pl.ds(off0 + t * dil, L)]
            idx += 1

    # One contraction for all branches: (Cout, 68*Cin) x (68*Cin, L) -> (Cout, L)
    acc = jnp.dot(w_ref[...], xs_ref[...], preferred_element_type=jnp.float32)

    # BatchNorm1d (inference mode) with the conv biases pre-folded on the host.
    inception = acc * scale_ref[...] + shift_ref[...]

    # Residual concat: first Cin output channels are x passed through unchanged.
    o_ref[pl.ds(0, cin), :] = x_ref[...]
    o_ref[pl.ds(cin, cout), :] = inception.astype(o_ref.dtype)


def residual_g_forward(x, branch_ws, branch_bs, gamma, beta,
                       running_mean, running_var, eps=BN_EPS):
    """ResidualG.forward.  x: (B, Cin, L) f32 -> (B, Cin + Cout, L) f32.

    branch_ws : 4 conv weights, torch layout (Cout, Cin, K) per branch
    branch_bs : 4 conv biases, (Cout,) per branch
    BatchNorm is applied in inference mode with the given running stats.
    """
    # TODO(synk): training-mode BatchNorm (batch statistics) is not implemented;
    # eval-mode running stats are folded into a per-channel affine.
    B, cin, L = x.shape
    cout = int(branch_ws[0].shape[0])

    # ---- host-side parameter folding -------------------------------------
    cols = []
    for (k, pad, dil), w in zip(BRANCHES, branch_ws):
        w = np.asarray(w, dtype=np.float32)
        for t in range(k):
            cols.append(w[:, :, t])                            # (Cout, Cin)
    w_fused = jnp.asarray(np.concatenate(cols, axis=1))        # (Cout, 68*Cin)

    b_total = np.sum(np.stack([np.asarray(b, np.float32) for b in branch_bs]), axis=0)
    scale_np = np.asarray(gamma, np.float32) / np.sqrt(np.asarray(running_var, np.float32) + eps)
    shift_np = np.asarray(beta, np.float32) + scale_np * (b_total - np.asarray(running_mean, np.float32))
    scale = jnp.asarray(scale_np.reshape(cout, 1))
    shift = jnp.asarray(shift_np.reshape(cout, 1))

    return pl.pallas_call(
        _residual_g_kernel,
        out_shape=jax.ShapeDtypeStruct((B, cin + cout, L), jnp.float32),
        grid=(B,),
        in_specs=[
            pl.BlockSpec((None, cin, L), lambda b: (b, 0, 0)),
            pl.BlockSpec((cout, TOTAL_TAPS * cin), lambda b: (0, 0)),
            pl.BlockSpec((cout, 1), lambda b: (0, 0)),
            pl.BlockSpec((cout, 1), lambda b: (0, 0)),
        ],
        out_specs=pl.BlockSpec((None, cin + cout, L), lambda b: (b, 0, 0)),
        scratch_shapes=[
            pltpu.VMEM((cin, XPAD_OFF + L + PAD_MAX), jnp.float32),   # padded input
            pltpu.VMEM((TOTAL_TAPS * cin, L), jnp.float32),           # im2col stack
        ],
        compiler_params=pltpu.CompilerParams(
            dimension_semantics=("parallel",)),      # B=2 -> both TCs busy on v7x
    )(x, w_fused, scale, shift)


# ---------------------------------------------------------------------------
# Plain-JAX reference (numerically matches the PyTorch graph, eval-mode BN)
# ---------------------------------------------------------------------------
def reference_forward(x, branch_ws, branch_bs, gamma, beta,
                      running_mean, running_var, eps=BN_EPS):
    acc = None
    for (k, pad, dil), w, b in zip(BRANCHES, branch_ws, branch_bs):
        y = jax.lax.conv_general_dilated(
            x, jnp.asarray(w), window_strides=(1,), padding=[(pad, pad)],
            rhs_dilation=(dil,), dimension_numbers=("NCH", "OIH", "NCH"),
            precision=jax.lax.Precision.HIGHEST)
        y = y + jnp.asarray(b)[None, :, None]
        acc = y if acc is None else acc + y
    scale = jnp.asarray(gamma) / jnp.sqrt(jnp.asarray(running_var) + eps)
    inc = (scale[None, :, None] * (acc - jnp.asarray(running_mean)[None, :, None])
           + jnp.asarray(beta)[None, :, None])
    return jnp.concatenate([x, inc], axis=1)


if __name__ == "__main__":
    B, CIN, COUT, L = 2, 16, 32, 384          # L multiple of 128 -> lane-dense output

    x = jax.random.normal(jax.random.PRNGKey(0), (B, CIN, L), dtype=jnp.float32)

    rng = np.random.default_rng(0)            # deterministic synthetic parameters
    branch_ws, branch_bs = [], []
    for (k, pad, dil) in BRANCHES:
        branch_ws.append((0.05 * rng.standard_normal((COUT, CIN, k))).astype(np.float32))
        branch_bs.append((0.1 * rng.standard_normal((COUT,))).astype(np.float32))
    gamma = (1.0 + 0.1 * rng.standard_normal(COUT)).astype(np.float32)
    beta = (0.1 * rng.standard_normal(COUT)).astype(np.float32)
    running_mean = (0.1 * rng.standard_normal(COUT)).astype(np.float32)
    running_var = (1.0 + 0.3 * rng.random(COUT)).astype(np.float32)

    out = jax.block_until_ready(
        residual_g_forward(x, branch_ws, branch_bs, gamma, beta,
                           running_mean, running_var))
    assert out.shape == (B, CIN + COUT, L), out.shape

    ref = jax.block_until_ready(
        reference_forward(x, branch_ws, branch_bs, gamma, beta,
                          running_mean, running_var))
    np.testing.assert_allclose(np.asarray(out), np.asarray(ref), rtol=2e-3, atol=2e-3)
    print("KERNEL_OK")
</pallas_src>

<mosaic_0001>
module attributes {stable_mosaic.version = 11 : i64} {
  func.func @_residual_g_kernel(%arg0: i32, %arg1: memref<1x16x384xf32, #tpu.memory_space<vmem>>, %arg2: memref<32x1088xf32, #tpu.memory_space<vmem>>, %arg3: memref<32x1xf32, #tpu.memory_space<vmem>>, %arg4: memref<32x1xf32, #tpu.memory_space<vmem>>, %arg5: memref<1x48x384xf32, #tpu.memory_space<vmem>>, %arg6: memref<16x784xf32, #tpu.memory_space<vmem>>, %arg7: memref<1088x384xf32, #tpu.memory_space<vmem>>) attributes {dimension_semantics = [#tpu.dimension_semantics<parallel>], iteration_bounds = array<i64: 2>, scalar_prefetch = 0 : i64, scratch_operands = 2 : i64, tpu.core_type = #tpu.core_type<tc>, window_params = [{transform_indices = @transform_0, window_bounds = array<i64: 1, 16, 384>}, {pipeline_mode = #tpu.pipeline_mode<synchronous>, transform_indices = @transform_1, window_bounds = array<i64: 32, 1088>}, {pipeline_mode = #tpu.pipeline_mode<synchronous>, transform_indices = @transform_2, window_bounds = array<i64: 32, 1>}, {pipeline_mode = #tpu.pipeline_mode<synchronous>, transform_indices = @transform_3, window_bounds = array<i64: 32, 1>}, {transform_indices = @transform_4, window_bounds = array<i64: 1, 48, 384>}]} {
    %cst = arith.constant 0.000000e+00 : f32
    %0 = vector.broadcast %cst : f32 to vector<16x784xf32>
    %c0 = arith.constant 0 : index
    %c0_0 = arith.constant 0 : index
    %1 = vector.load %arg6[%c0, %c0_0] : memref<16x784xf32, #tpu.memory_space<vmem>>, vector<16x784xf32>
    tpu.vector_store %arg6[%c0, %c0_0], %0 {strides = array<i32>} : memref<16x784xf32, #tpu.memory_space<vmem>>, vector<16x784xf32>,
    %c0_1 = arith.constant 0 : index
    %c0_2 = arith.constant 0 : index
    %c0_3 = arith.constant 0 : index
    %2 = vector.load %arg1[%c0_1, %c0_2, %c0_3] : memref<1x16x384xf32, #tpu.memory_space<vmem>>, vector<1x16x384xf32>
    %3 = vector.shape_cast %2 : vector<1x16x384xf32> to vector<16x384xf32>
    %c0_4 = arith.constant 0 : index
    %c256 = arith.constant 256 : index
    %4 = vector.load %arg6[%c0_4, %c256] : memref<16x784xf32, #tpu.memory_space<vmem>>, vector<16x384xf32>
    tpu.vector_store %arg6[%c0_4, %c256], %3 {strides = array<i32>} : memref<16x784xf32, #tpu.memory_space<vmem>>, vector<16x384xf32>,
    %c0_5 = arith.constant 0 : index
    %c232 = arith.constant 232 : index
    %5 = vector.load %arg6[%c0_5, %c232] : memref<16x784xf32, #tpu.memory_space<vmem>>, vector<16x384xf32>
    %c0_6 = arith.constant 0 : index
    %c0_7 = arith.constant 0 : index
    %6 = vector.load %arg7[%c0_6, %c0_7] : memref<1088x384xf32, #tpu.memory_space<vmem>>, vector<16x384xf32>
    tpu.vector_store %arg7[%c0_6, %c0_7], %5 {strides = array<i32>} : memref<1088x384xf32, #tpu.memory_space<vmem>>, vector<16x384xf32>,
    %c0_8 = arith.constant 0 : index
    %c233 = arith.constant 233 : index
    %7 = vector.load %arg6[%c0_8, %c233] : memref<16x784xf32, #tpu.memory_space<vmem>>, vector<16x384xf32>
    %c16 = arith.constant 16 : index
    %c0_9 = arith.constant 0 : index
    %8 = vector.load %arg7[%c16, %c0_9] : memref<1088x384xf32, #tpu.memory_space<vmem>>, vector<16x384xf32>
    tpu.vector_store %arg7[%c16, %c0_9], %7 {strides = array<i32>} : memref<1088x384xf32, #tpu.memory_space<vmem>>, vector<16x384xf32>,
    %c0_10 = arith.constant 0 : index
    %c234 = arith.constant 234 : index
    %9 = vector.load %arg6[%c0_10, %c234] : memref<16x784xf32, #tpu.memory_space<vmem>>, vector<16x384xf32>
    %c32 = arith.constant 32 : index
    %c0_11 = arith.constant 0 : index
    %10 = vector.load %arg7[%c32, %c0_11] : memref<1088x384xf32, #tpu.memory_space<vmem>>, vector<16x384xf32>
    tpu.vector_store %arg7[%c32, %c0_11], %9 {strides = array<i32>} : memref<1088x384xf32, #tpu.memory_space<vmem>>, vector<16x384xf32>,
    %c0_12 = arith.constant 0 : index
    %c235 = arith.constant 235 : index
    %11 = vector.load %arg6[%c0_12, %c235] : memref<16x784xf32, #tpu.memory_space<vmem>>, vector<16x384xf32>
    %c48 = arith.constant 48 : index
    %c0_13 = arith.constant 0 : index
    %12 = vector.load %arg7[%c48, %c0_13] : memref<1088x384xf32, #tpu.memory_space<vmem>>, vector<16x384xf32>
    tpu.vector_store %arg7[%c48, %c0_13], %11 {strides = array<i32>} : memref<1088x384xf32, #tpu.memory_space<vmem>>, vector<16x384xf32>,
    %c0_14 = arith.constant 0 : index
    %c236 = arith.constant 236 : index
    %13 = vector.load %arg6[%c0_14, %c236] : memref<16x784xf32, #tpu.memory_space<vmem>>, vector<16x384xf32>
    %c64 = arith.constant 64 : index
    %c0_15 = arith.constant 0 : index
    %14 = vector.load %arg7[%c64, %c0_15] : memref<1088x384xf32, #tpu.memory_space<vmem>>, vector<16x384xf32>
    tpu.vector_store %arg7[%c64, %c0_15], %13 {strides = array<i32>} : memref<1088x384xf32, #tpu.memory_space<vmem>>, vector<16x384xf32>,
    %c0_16 = arith.constant 0 : index
    %c237 = arith.constant 237 : index
    %15 = vector.load %arg6[%c0_16, %c237] : memref<16x784xf32, #tpu.memory_space<vmem>>, vector<16x384xf32>
    %c80 = arith.constant 80 : index
    %c0_17 = arith.constant 0 : index
    %16 = vector.load %arg7[%c80, %c0_17] : memref<1088x384xf32, #tpu.memory_space<vmem>>, vector<16x384xf32>
    tpu.vector_store %arg7[%c80, %c0_17], %15 {strides = array<i32>} : memref<1088x384xf32, #tpu.memory_space<vmem>>, vector<16x384xf32>,
    %c0_18 = arith.constant 0 : index
    %c238 = arith.constant 238 : index
    %17 = vector.load %arg6[%c0_18, %c238] : memref<16x784xf32, #tpu.memory_space<vmem>>, vector<16x384xf32>
    %c96 = arith.constant 96 : index
    %c0_19 = arith.constant 0 : index
    %18 = vector.load %arg7[%c96, %c0_19] : memref<1088x384xf32, #tpu.memory_space<vmem>>, vector<16x384xf32>
    tpu.vector_store %arg7[%c96, %c0_19], %17 {strides = array<i32>} : memref<1088x384xf32, #tpu.memory_space<vmem>>, vector<16x384xf32>,
    %c0_20 = arith.constant 0 : index
    %c239 = arith.constant 239 : index
    %19 = vector.load %arg6[%c0_20, %c239] : memref<16x784xf32, #tpu.memory_space<vmem>>, vector<16x384xf32>
    %c112 = arith.constant 112 : index
    %c0_21 = arith.constant 0 : index
    %20 = vector.load %arg7[%c112, %c0_21] : memref<1088x384xf32, #tpu.memory_space<vmem>>, vector<16x384xf32>
    tpu.vector_store %arg7[%c112, %c0_21], %19 {strides = array<i32>} : memref<1088x384xf32, #tpu.memory_space<vmem>>, vector<16x384xf32>,
    %c0_22 = arith.constant 0 : index
    %c240 = arith.constant 240 : index
    %21 = vector.load %arg6[%c0_22, %c240] : memref<16x784xf32, #tpu.memory_space<vmem>>, vector<16x384xf32>
    %c128 = arith.constant 128 : index
    %c0_23 = arith.constant 0 : index
    %22 = vector.load %arg7[%c128, %c0_23] : memref<1088x384xf32, #tpu.memory_space<vmem>>, vector<16x384xf32>
    tpu.vector_store %arg7[%c128, %c0_23], %21 {strides = array<i32>} : memref<1088x384xf32, #tpu.memory_space<vmem>>, vector<16x384xf32>,
    %c0_24 = arith.constant 0 : index
    %c241 = arith.constant 241 : index
    %23 = vector.load %arg6[%c0_24, %c241] : memref<16x784xf32, #tpu.memory_space<vmem>>, vector<16x384xf32>
    %c144 = arith.constant 144 : index
    %c0_25 = arith.constant 0 : index
    %24 = vector.load %arg7[%c144, %c0_25] : memref<1088x384xf32, #tpu.memory_space<vmem>>, vector<16x384xf32>
    tpu.vector_store %arg7[%c144, %c0_25], %23 {strides = array<i32>} : memref<1088x384xf32, #tpu.memory_space<vmem>>, vector<16x384xf32>,
    %c0_26 = arith.constant 0 : index
    %c242 = arith.constant 242 : index
    %25 = vector.load %arg6[%c0_26, %c242] : memref<16x784xf32, #tpu.memory_space<vmem>>, vector<16x384xf32>
    %c160 = arith.constant 160 : index
    %c0_27 = arith.constant 0 : index
    %26 = vector.load %arg7[%c160, %c0_27] : memref<1088x384xf32, #tpu.memory_space<vmem>>, vector<16x384xf32>
    tpu.vector_store %arg7[%c160, %c0_27], %25 {strides = array<i32>} : memref<1088x384xf32, #tpu.memory_space<vmem>>, vector<16x384xf32>,
    %c0_28 = arith.constant 0 : index
    %c243 = arith.constant 243 : index
    %27 = vector.load %arg6[%c0_28, %c243] : memref<16x784xf32, #tpu.memory_space<vmem>>, vector<16x384xf32>
    %c176 = arith.constant 176 : index
    %c0_29 = arith.constant 0 : index
    %28 = vector.load %arg7[%c176, %c0_29] : memref<1088x384xf32, #tpu.memory_space<vmem>>, vector<16x384xf32>
    tpu.vector_store %arg7[%c176, %c0_29], %27 {strides = array<i32>} : memref<1088x384xf32, #tpu.memory_space<vmem>>, vector<16x384xf32>,
    %c0_30 = arith.constant 0 : index
    %c244 = arith.constant 244 : index
    %29 = vector.load %arg6[%c0_30, %c244] : memref<16x784xf32, #tpu.memory_space<vmem>>, vector<16x384xf32>
    %c192 = arith.constant 192 : index
    %c0_31 = arith.constant 0 : index
    %30 = vector.load %arg7[%c192, %c0_31] : memref<1088x384xf32, #tpu.memory_space<vmem>>, vector<16x384xf32>
    tpu.vector_store %arg7[%c192, %c0_31], %29 {strides = array<i32>} : memref<1088x384xf32, #tpu.memory_space<vmem>>, vector<16x384xf32>,
    %c0_32 = arith.constant 0 : index
    %c245 = arith.constant 245 : index
    %31 = vector.load %arg6[%c0_32, %c245] : memref<16x784xf32, #tpu.memory_space<vmem>>, vector<16x384xf32>
    %c208 = arith.constant 208 : index
    %c0_33 = arith.constant 0 : index
    %32 = vector.load %arg7[%c208, %c0_33] : memref<1088x384xf32, #tpu.memory_space<vmem>>, vector<16x384xf32>
    tpu.vector_store %arg7[%c208, %c0_33], %31 {strides = array<i32>} : memref<1088x384xf32, #tpu.memory_space<vmem>>, vector<16x384xf32>,
    %c0_34 = arith.constant 0 : index
    %c246 = arith.constant 246 : index
    %33 = vector.load %arg6[%c0_34, %c246] : memref<16x784xf32, #tpu.memory_space<vmem>>, vector<16x384xf32>
    %c224 = arith.constant 224 : index
    %c0_35 = arith.constant 0 : index
    %34 = vector.load %arg7[%c224, %c0_35] : memref<1088x384xf32, #tpu.memory_space<vmem>>, vector<16x384xf32>
    tpu.vector_store %arg7[%c224, %c0_35], %33 {strides = array<i32>} : memref<1088x384xf32, #tpu.memory_space<vmem>>, vector<16x384xf32>,
    %c0_36 = arith.constant 0 : index
    %c247 = arith.constant 247 : index
    %35 = vector.load %arg6[%c0_36, %c247] : memref<16x784xf32, #tpu.memory_space<vmem>>, vector<16x384xf32>
    %c240_37 = arith.constant 240 : index
    %c0_38 = arith.constant 0 : index
    %36 = vector.load %arg7[%c240_37, %c0_38] : memref<1088x384xf32, #tpu.memory_space<vmem>>, vector<16x384xf32>
    tpu.vector_store %arg7[%c240_37, %c0_38], %35 {strides = array<i32>} : memref<1088x384xf32, #tpu.memory_space<vmem>>, vector<16x384xf32>,
    %c0_39 = arith.constant 0 : index
    %c248 = arith.constant 248 : index
    %37 = vector.load %arg6[%c0_39, %c248] : memref<16x784xf32, #tpu.memory_space<vmem>>, vector<16x384xf32>
    %c256_40 = arith.constant 256 : index
    %c0_41 = arith.constant 0 : index
    %38 = vector.load %arg7[%c256_40, %c0_41] : memref<1088x384xf32, #tpu.memory_space<vmem>>, vector<16x384xf32>
    tpu.vector_store %arg7[%c256_40, %c0_41], %37 {strides = array<i32>} : memref<1088x384xf32, #tpu.memory_space<vmem>>, vector<16x384xf32>,
    %c0_42 = arith.constant 0 : index
    %c249 = arith.constant 249 : index
    %39 = vector.load %arg6[%c0_42, %c249] : memref<16x784xf32, #tpu.memory_space<vmem>>, vector<16x384xf32>
    %c272 = arith.constant 272 : index
    %c0_43 = arith.constant 0 : index
    %40 = vector.load %arg7[%c272, %c0_43] : memref<1088x384xf32, #tpu.memory_space<vmem>>, vector<16x384xf32>
    tpu.vector_store %arg7[%c272, %c0_43], %39 {strides = array<i32>} : memref<1088x384xf32, #tpu.memory_space<vmem>>, vector<16x384xf32>,
    %c0_44 = arith.constant 0 : index
    %c250 = arith.constant 250 : index
    %41 = vector.load %arg6[%c0_44, %c250] : memref<16x784xf32, #tpu.memory_space<vmem>>, vector<16x384xf32>
    %c288 = arith.constant 288 : index
    %c0_45 = arith.constant 0 : index
    %42 = vector.load %arg7[%c288, %c0_45] : memref<1088x384xf32, #tpu.memory_space<vmem>>, vector<16x384xf32>
    tpu.vector_store %arg7[%c288, %c0_45], %41 {strides = array<i32>} : memref<1088x384xf32, #tpu.memory_space<vmem>>, vector<16x384xf32>,
    %c0_46 = arith.constant 0 : index
    %c251 = arith.constant 251 : index
    %43 = vector.load %arg6[%c0_46, %c251] : memref<16x784xf32, #tpu.memory_space<vmem>>, vector<16x384xf32>
    %c304 = arith.constant 304 : index
    %c0_47 = arith.constant 0 : index
    %44 = vector.load %arg7[%c304, %c0_47] : memref<1088x384xf32, #tpu.memory_space<vmem>>, vector<16x384xf32>
    tpu.vector_store %arg7[%c304, %c0_47], %43 {strides = array<i32>} : memref<1088x384xf32, #tpu.memory_space<vmem>>, vector<16x384xf32>,
    %c0_48 = arith.constant 0 : index
    %c252 = arith.constant 252 : index
    %45 = vector.load %arg6[%c0_48, %c252] : memref<16x784xf32, #tpu.memory_space<vmem>>, vector<16x384xf32>
    %c320 = arith.constant 320 : index
    %c0_49 = arith.constant 0 : index
    %46 = vector.load %arg7[%c320, %c0_49] : memref<1088x384xf32, #tpu.memory_space<vmem>>, vector<16x384xf32>
    tpu.vector_store %arg7[%c320, %c0_49], %45 {strides = array<i32>} : memref<1088x384xf32, #tpu.memory_space<vmem>>, vector<16x384xf32>,
    %c0_50 = arith.constant 0 : index
    %c253 = arith.constant 253 : index
    %47 = vector.load %arg6[%c0_50, %c253] : memref<16x784xf32, #tpu.memory_space<vmem>>, vector<16x384xf32>
    %c336 = arith.constant 336 : index
    %c0_51 = arith.constant 0 : index
    %48 = vector.load %arg7[%c336, %c0_51] : memref<1088x384xf32, #tpu.memory_space<vmem>>, vector<16x384xf32>
    tpu.vector_store %arg7[%c336, %c0_51], %47 {strides = array<i32>} : memref<1088x384xf32, #tpu.memory_space<vmem>>, vector<16x384xf32>,
    %c0_52 = arith.constant 0 : index
    %c254 = arith.constant 254 : index
    %49 = vector.load %arg6[%c0_52, %c254] : memref<16x784xf32, #tpu.memory_space<vmem>>, vector<16x384xf32>
    %c352 = arith.constant 352 : index
    %c0_53 = arith.constant 0 : index
    %50 = vector.load %arg7[%c352, %c0_53] : memref<1088x384xf32, #tpu.memory_space<vmem>>, vector<16x384xf32>
    tpu.vector_store %arg7[%c352, %c0_53], %49 {strides = array<i32>} : memref<1088x384xf32, #tpu.memory_space<vmem>>, vector<16x384xf32>,
    %c0_54 = arith.constant 0 : index
    %c255 = arith.constant 255 : index
    %51 = vector.load %arg6[%c0_54, %c255] : memref<16x784xf32, #tpu.memory_space<vmem>>, vector<16x384xf32>
    %c368 = arith.constant 368 : index
    %c0_55 = arith.constant 0 : index
    %52 = vector.load %arg7[%c368, %c0_55] : memref<1088x384xf32, #tpu.memory_space<vmem>>, vector<16x384xf32>
    tpu.vector_store %arg7[%c368, %c0_55], %51 {strides = array<i32>} : memref<1088x384xf32, #tpu.memory_space<vmem>>, vector<16x384xf32>,
    %c0_56 = arith.constant 0 : index
    %c256_57 = arith.constant 256 : index
    %53 = vector.load %arg6[%c0_56, %c256_57] : memref<16x784xf32, #tpu.memory_space<vmem>>, vector<16x384xf32>
    %c384 = arith.constant 384 : index
    %c0_58 = arith.constant 0 : index
    %54 = vector.load %arg7[%c384, %c0_58] : memref<1088x384xf32, #tpu.memory_space<vmem>>, vector<16x384xf32>
    tpu.vector_store %arg7[%c384, %c0_58], %53 {strides = array<i32>} : memref<1088x384xf32, #tpu.memory_space<vmem>>, vector<16x384xf32>,
    %c0_59 = arith.constant 0 : index
    %c257 = arith.constant 257 : index
    %55 = vector.load %arg6[%c0_59, %c257] : memref<16x784xf32, #tpu.memory_space<vmem>>, vector<16x384xf32>
    %c400 = arith.constant 400 : index
    %c0_60 = arith.constant 0 : index
    %56 = vector.load %arg7[%c400, %c0_60] : memref<1088x384xf32, #tpu.memory_space<vmem>>, vector<16x384xf32>
    tpu.vector_store %arg7[%c400, %c0_60], %55 {strides = array<i32>} : memref<1088x384xf32, #tpu.memory_space<vmem>>, vector<16x384xf32>,
    %c0_61 = arith.constant 0 : index
    %c258 = arith.constant 258 : index
    %57 = vector.load %arg6[%c0_61, %c258] : memref<16x784xf32, #tpu.memory_space<vmem>>, vector<16x384xf32>
    %c416 = arith.constant 416 : index
    %c0_62 = arith.constant 0 : index
    %58 = vector.load %arg7[%c416, %c0_62] : memref<1088x384xf32, #tpu.memory_space<vmem>>, vector<16x384xf32>
    tpu.vector_store %arg7[%c416, %c0_62], %57 {strides = array<i32>} : memref<1088x384xf32, #tpu.memory_space<vmem>>, vector<16x384xf32>,
    %c0_63 = arith.constant 0 : index
    %c259 = arith.constant 259 : index
    %59 = vector.load %arg6[%c0_63, %c259] : memref<16x784xf32, #tpu.memory_space<vmem>>, vector<16x384xf32>
    %c432 = arith.constant 432 : index
    %c0_64 = arith.constant 0 : index
    %60 = vector.load %arg7[%c432, %c0_64] : memref<1088x384xf32, #tpu.memory_space<vmem>>, vector<16x384xf32>
    tpu.vector_store %arg7[%c432, %c0_64], %59 {strides = array<i32>} : memref<1088x384xf32, #tpu.memory_space<vmem>>, vector<16x384xf32>,
    %c0_65 = arith.constant 0 : index
    %c260 = arith.constant 260 : index
    %61 = vector.load %arg6[%c0_65, %c260] : memref<16x784xf32, #tpu.memory_space<vmem>>, vector<16x384xf32>
    %c448 = arith.constant 448 : index
    %c0_66 = arith.constant 0 : index
    %62 = vector.load %arg7[%c448, %c0_66] : memref<1088x384xf32, #tpu.memory_space<vmem>>, vector<16x384xf32>
    tpu.vector_store %arg7[%c448, %c0_66], %61 {strides = array<i32>} : memref<1088x384xf32, #tpu.memory_space<vmem>>, vector<16x384xf32>,
    %c0_67 = arith.constant 0 : index
    %c261 = arith.constant 261 : index
    %63 = vector.load %arg6[%c0_67, %c261] : memref<16x784xf32, #tpu.memory_space<vmem>>, vector<16x384xf32>
    %c464 = arith.constant 464 : index
    %c0_68 = arith.constant 0 : index
    %64 = vector.load %arg7[%c464, %c0_68] : memref<1088x384xf32, #tpu.memory_space<vmem>>, vector<16x384xf32>
    tpu.vector_store %arg7[%c464, %c0_68], %63 {strides = array<i32>} : memref<1088x384xf32, #tpu.memory_space<vmem>>, vector<16x384xf32>,
    %c0_69 = arith.constant 0 : index
    %c262 = arith.constant 262 : index
    %65 = vector.load %arg6[%c0_69, %c262] : memref<16x784xf32, #tpu.memory_space<vmem>>, vector<16x384xf32>
    %c480 = arith.constant 480 : index
    %c0_70 = arith.constant 0 : index
    %66 = vector.load %arg7[%c480, %c0_70] : memref<1088x384xf32, #tpu.memory_space<vmem>>, vector<16x384xf32>
    tpu.vector_store %arg7[%c480, %c0_70], %65 {strides = array<i32>} : memref<1088x384xf32, #tpu.memory_space<vmem>>, vector<16x384xf32>,
    %c0_71 = arith.constant 0 : index
    %c263 = arith.constant 263 : index
    %67 = vector.load %arg6[%c0_71, %c263] : memref<16x784xf32, #tpu.memory_space<vmem>>, vector<16x384xf32>
    %c496 = arith.constant 496 : index
    %c0_72 = arith.constant 0 : index
    %68 = vector.load %arg7[%c496, %c0_72] : memref<1088x384xf32, #tpu.memory_space<vmem>>, vector<16x384xf32>
    tpu.vector_store %arg7[%c496, %c0_72], %67 {strides = array<i32>} : memref<1088x384xf32, #tpu.memory_space<vmem>>, vector<16x384xf32>,
    %c0_73 = arith.constant 0 : index
    %c264 = arith.constant 264 : index
    %69 = vector.load %arg6[%c0_73, %c264] : memref<16x784xf32, #tpu.memory_space<vmem>>, vector<16x384xf32>
    %c512 = arith.constant 512 : index
    %c0_74 = arith.constant 0 : index
    %70 = vector.load %arg7[%c512, %c0_74] : memref<1088x384xf32, #tpu.memory_space<vmem>>, vector<16x384xf32>
    tpu.vector_store %arg7[%c512, %c0_74], %69 {strides = array<i32>} : memref<1088x384xf32, #tpu.memory_space<vmem>>, vector<16x384xf32>,
    %c0_75 = arith.constant 0 : index
    %c265 = arith.constant 265 : index
    %71 = vector.load %arg6[%c0_75, %c265] : memref<16x784xf32, #tpu.memory_space<vmem>>, vector<16x384xf32>
    %c528 = arith.constant 528 : index
    %c0_76 = arith.constant 0 : index
    %72 = vector.load %arg7[%c528, %c0_76] : memref<1088x384xf32, #tpu.memory_space<vmem>>, vector<16x384xf32>
    tpu.vector_store %arg7[%c528, %c0_76], %71 {strides = array<i32>} : memref<1088x384xf32, #tpu.memory_space<vmem>>, vector<16x384xf32>,
    %c0_77 = arith.constant 0 : index
    %c266 = arith.constant 266 : index
    %73 = vector.load %arg6[%c0_77, %c266] : memref<16x784xf32, #tpu.memory_space<vmem>>, vector<16x384xf32>
    %c544 = arith.constant 544 : index
    %c0_78 = arith.constant 0 : index
    %74 = vector.load %arg7[%c544, %c0_78] : memref<1088x384xf32, #tpu.memory_space<vmem>>, vector<16x384xf32>
    tpu.vector_store %arg7[%c544, %c0_78], %73 {strides = array<i32>} : memref<1088x384xf32, #tpu.memory_space<vmem>>, vector<16x384xf32>,
    %c0_79 = arith.constant 0 : index
    %c267 = arith.constant 267 : index
    %75 = vector.load %arg6[%c0_79, %c267] : memref<16x784xf32, #tpu.memory_space<vmem>>, vector<16x384xf32>
    %c560 = arith.constant 560 : index
    %c0_80 = arith.constant 0 : index
    %76 = vector.load %arg7[%c560, %c0_80] : memref<1088x384xf32, #tpu.memory_space<vmem>>, vector<16x384xf32>
    tpu.vector_store %arg7[%c560, %c0_80], %75 {strides = array<i32>} : memref<1088x384xf32, #tpu.memory_space<vmem>>, vector<16x384xf32>,
    %c0_81 = arith.constant 0 : index
    %c268 = arith.constant 268 : index
    %77 = vector.load %arg6[%c0_81, %c268] : memref<16x784xf32, #tpu.memory_space<vmem>>, vector<16x384xf32>
    %c576 = arith.constant 576 : index
    %c0_82 = arith.constant 0 : index
    %78 = vector.load %arg7[%c576, %c0_82] : memref<1088x384xf32, #tpu.memory_space<vmem>>, vector<16x384xf32>
    tpu.vector_store %arg7[%c576, %c0_82], %77 {strides = array<i32>} : memref<1088x384xf32, #tpu.memory_space<vmem>>, vector<16x384xf32>,
    %c0_83 = arith.constant 0 : index
    %c269 = arith.constant 269 : index
    %79 = vector.load %arg6[%c0_83, %c269] : memref<16x784xf32, #tpu.memory_space<vmem>>, vector<16x384xf32>
    %c592 = arith.constant 592 : index
    %c0_84 = arith.constant 0 : index
    %80 = vector.load %arg7[%c592, %c0_84] : memref<1088x384xf32, #tpu.memory_space<vmem>>, vector<16x384xf32>
    tpu.vector_store %arg7[%c592, %c0_84], %79 {strides = array<i32>} : memref<1088x384xf32, #tpu.memory_space<vmem>>, vector<16x384xf32>,
    %c0_85 = arith.constant 0 : index
    %c270 = arith.constant 270 : index
    %81 = vector.load %arg6[%c0_85, %c270] : memref<16x784xf32, #tpu.memory_space<vmem>>, vector<16x384xf32>
    %c608 = arith.constant 608 : index
    %c0_86 = arith.constant 0 : index
    %82 = vector.load %arg7[%c608, %c0_86] : memref<1088x384xf32, #tpu.memory_space<vmem>>, vector<16x384xf32>
    tpu.vector_store %arg7[%c608, %c0_86], %81 {strides = array<i32>} : memref<1088x384xf32, #tpu.memory_space<vmem>>, vector<16x384xf32>,
    %c0_87 = arith.constant 0 : index
    %c271 = arith.constant 271 : index
    %83 = vector.load %arg6[%c0_87, %c271] : memref<16x784xf32, #tpu.memory_space<vmem>>, vector<16x384xf32>
    %c624 = arith.constant 624 : index
    %c0_88 = arith.constant 0 : index
    %84 = vector.load %arg7[%c624, %c0_88] : memref<1088x384xf32, #tpu.memory_space<vmem>>, vector<16x384xf32>
    tpu.vector_store %arg7[%c624, %c0_88], %83 {strides = array<i32>} : memref<1088x384xf32, #tpu.memory_space<vmem>>, vector<16x384xf32>,
    %c0_89 = arith.constant 0 : index
    %c272_90 = arith.constant 272 : index
    %85 = vector.load %arg6[%c0_89, %c272_90] : memref<16x784xf32, #tpu.memory_space<vmem>>, vector<16x384xf32>
    %c640 = arith.constant 640 : index
    %c0_91 = arith.constant 0 : index
    %86 = vector.load %arg7[%c640, %c0_91] : memref<1088x384xf32, #tpu.memory_space<vmem>>, vector<16x384xf32>
    tpu.vector_store %arg7[%c640, %c0_91], %85 {strides = array<i32>} : memref<1088x384xf32, #tpu.memory_space<vmem>>, vector<16x384xf32>,
    %c0_92 = arith.constant 0 : index
    %c273 = arith.constant 273 : index
    %87 = vector.load %arg6[%c0_92, %c273] : memref<16x784xf32, #tpu.memory_space<vmem>>, vector<16x384xf32>
    %c656 = arith.constant 656 : index
    %c0_93 = arith.constant 0 : index
    %88 = vector.load %arg7[%c656, %c0_93] : memref<1088x384xf32, #tpu.memory_space<vmem>>, vector<16x384xf32>
    tpu.vector_store %arg7[%c656, %c0_93], %87 {strides = array<i32>} : memref<1088x384xf32, #tpu.memory_space<vmem>>, vector<16x384xf32>,
    %c0_94 = arith.constant 0 : index
    %c274 = arith.constant 274 : index
    %89 = vector.load %arg6[%c0_94, %c274] : memref<16x784xf32, #tpu.memory_space<vmem>>, vector<16x384xf32>
    %c672 = arith.constant 672 : index
    %c0_95 = arith.constant 0 : index
    %90 = vector.load %arg7[%c672, %c0_95] : memref<1088x384xf32, #tpu.memory_space<vmem>>, vector<16x384xf32>
    tpu.vector_store %arg7[%c672, %c0_95], %89 {strides = array<i32>} : memref<1088x384xf32, #tpu.memory_space<vmem>>, vector<16x384xf32>,
    %c0_96 = arith.constant 0 : index
    %c275 = arith.constant 275 : index
    %91 = vector.load %arg6[%c0_96, %c275] : memref<16x784xf32, #tpu.memory_space<vmem>>, vector<16x384xf32>
    %c688 = arith.constant 688 : index
    %c0_97 = arith.constant 0 : index
    %92 = vector.load %arg7[%c688, %c0_97] : memref<1088x384xf32, #tpu.memory_space<vmem>>, vector<16x384xf32>
    tpu.vector_store %arg7[%c688, %c0_97], %91 {strides = array<i32>} : memref<1088x384xf32, #tpu.memory_space<vmem>>, vector<16x384xf32>,
    %c0_98 = arith.constant 0 : index
    %c276 = arith.constant 276 : index
    %93 = vector.load %arg6[%c0_98, %c276] : memref<16x784xf32, #tpu.memory_space<vmem>>, vector<16x384xf32>
    %c704 = arith.constant 704 : index
    %c0_99 = arith.constant 0 : index
    %94 = vector.load %arg7[%c704, %c0_99] : memref<1088x384xf32, #tpu.memory_space<vmem>>, vector<16x384xf32>
    tpu.vector_store %arg7[%c704, %c0_99], %93 {strides = array<i32>} : memref<1088x384xf32, #tpu.memory_space<vmem>>, vector<16x384xf32>,
    %c0_100 = arith.constant 0 : index
    %c277 = arith.constant 277 : index
    %95 = vector.load %arg6[%c0_100, %c277] : memref<16x784xf32, #tpu.memory_space<vmem>>, vector<16x384xf32>
    %c720 = arith.constant 720 : index
    %c0_101 = arith.constant 0 : index
    %96 = vector.load %arg7[%c720, %c0_101] : memref<1088x384xf32, #tpu.memory_space<vmem>>, vector<16x384xf32>
    tpu.vector_store %arg7[%c720, %c0_101], %95 {strides = array<i32>} : memref<1088x384xf32, #tpu.memory_space<vmem>>, vector<16x384xf32>,
    %c0_102 = arith.constant 0 : index
    %c278 = arith.constant 278 : index
    %97 = vector.load %arg6[%c0_102, %c278] : memref<16x784xf32, #tpu.memory_space<vmem>>, vector<16x384xf32>
    %c736 = arith.constant 736 : index
    %c0_103 = arith.constant 0 : index
    %98 = vector.load %arg7[%c736, %c0_103] : memref<1088x384xf32, #tpu.memory_space<vmem>>, vector<16x384xf32>
    tpu.vector_store %arg7[%c736, %c0_103], %97 {strides = array<i32>} : memref<1088x384xf32, #tpu.memory_space<vmem>>, vector<16x384xf32>,
    %c0_104 = arith.constant 0 : index
    %c279 = arith.constant 279 : index
    %99 = vector.load %arg6[%c0_104, %c279] : memref<16x784xf32, #tpu.memory_space<vmem>>, vector<16x384xf32>
    %c752 = arith.constant 752 : index
    %c0_105 = arith.constant 0 : index
    %100 = vector.load %arg7[%c752, %c0_105] : memref<1088x384xf32, #tpu.memory_space<vmem>>, vector<16x384xf32>
    tpu.vector_store %arg7[%c752, %c0_105], %99 {strides = array<i32>} : memref<1088x384xf32, #tpu.memory_space<vmem>>, vector<16x384xf32>,
    %c0_106 = arith.constant 0 : index
    %c280 = arith.constant 280 : index
    %101 = vector.load %arg6[%c0_106, %c280] : memref<16x784xf32, #tpu.memory_space<vmem>>, vector<16x384xf32>
    %c768 = arith.constant 768 : index
    %c0_107 = arith.constant 0 : index
    %102 = vector.load %arg7[%c768, %c0_107] : memref<1088x384xf32, #tpu.memory_space<vmem>>, vector<16x384xf32>
    tpu.vector_store %arg7[%c768, %c0_107], %101 {strides = array<i32>} : memref<1088x384xf32, #tpu.memory_space<vmem>>, vector<16x384xf32>,
    %c0_108 = arith.constant 0 : index
    %c112_109 = arith.constant 112 : index
    %103 = vector.load %arg6[%c0_108, %c112_109] : memref<16x784xf32, #tpu.memory_space<vmem>>, vector<16x384xf32>
    %c784 = arith.constant 784 : index
    %c0_110 = arith.constant 0 : index
    %104 = vector.load %arg7[%c784, %c0_110] : memref<1088x384xf32, #tpu.memory_space<vmem>>, vector<16x384xf32>
    tpu.vector_store %arg7[%c784, %c0_110], %103 {strides = array<i32>} : memref<1088x384xf32, #tpu.memory_space<vmem>>, vector<16x384xf32>,
    %c0_111 = arith.constant 0 : index
    %c160_112 = arith.constant 160 : index
    %105 = vector.load %arg6[%c0_111, %c160_112] : memref<16x784xf32, #tpu.memory_space<vmem>>, vector<16x384xf32>
    %c800 = arith.constant 800 : index
    %c0_113 = arith.constant 0 : index
    %106 = vector.load %arg7[%c800, %c0_113] : memref<1088x384xf32, #tpu.memory_space<vmem>>, vector<16x384xf32>
    tpu.vector_store %arg7[%c800, %c0_113], %105 {strides = array<i32>} : memref<1088x384xf32, #tpu.memory_space<vmem>>, vector<16x384xf32>,
    %c0_114 = arith.constant 0 : index
    %c208_115 = arith.constant 208 : index
    %107 = vector.load %arg6[%c0_114, %c208_115] : memref<16x784xf32, #tpu.memory_space<vmem>>, vector<16x384xf32>
    %c816 = arith.constant 816 : index
    %c0_116 = arith.constant 0 : index
    %108 = vector.load %arg7[%c816, %c0_116] : memref<1088x384xf32, #tpu.memory_space<vmem>>, vector<16x384xf32>
    tpu.vector_store %arg7[%c816, %c0_116], %107 {strides = array<i32>} : memref<1088x384xf32, #tpu.memory_space<vmem>>, vector<16x384xf32>,
    %c0_117 = arith.constant 0 : index
    %c256_118 = arith.constant 256 : index
    %109 = vector.load %arg6[%c0_117, %c256_118] : memref<16x784xf32, #tpu.memory_space<vmem>>, vector<16x384xf32>
    %c832 = arith.constant 832 : index
    %c0_119 = arith.constant 0 : index
    %110 = vector.load %arg7[%c832, %c0_119] : memref<1088x384xf32, #tpu.memory_space<vmem>>, vector<16x384xf32>
    tpu.vector_store %arg7[%c832, %c0_119], %109 {strides = array<i32>} : memref<1088x384xf32, #tpu.memory_space<vmem>>, vector<16x384xf32>,
    %c0_120 = arith.constant 0 : index
    %c304_121 = arith.constant 304 : index
    %111 = vector.load %arg6[%c0_120, %c304_121] : memref<16x784xf32, #tpu.memory_space<vmem>>, vector<16x384xf32>
    %c848 = arith.constant 848 : index
    %c0_122 = arith.constant 0 : index
    %112 = vector.load %arg7[%c848, %c0_122] : memref<1088x384xf32, #tpu.memory_space<vmem>>, vector<16x384xf32>
    tpu.vector_store %arg7[%c848, %c0_122], %111 {strides = array<i32>} : memref<1088x384xf32, #tpu.memory_space<vmem>>, vector<16x384xf32>,
    %c0_123 = arith.constant 0 : index
    %c352_124 = arith.constant 352 : index
    %113 = vector.load %arg6[%c0_123, %c352_124] : memref<16x784xf32, #tpu.memory_space<vmem>>, vector<16x384xf32>
    %c864 = arith.constant 864 : index
    %c0_125 = arith.constant 0 : index
    %114 = vector.load %arg7[%c864, %c0_125] : memref<1088x384xf32, #tpu.memory_space<vmem>>, vector<16x384xf32>
    tpu.vector_store %arg7[%c864, %c0_125], %113 {strides = array<i32>} : memref<1088x384xf32, #tpu.memory_space<vmem>>, vector<16x384xf32>,
    %c0_126 = arith.constant 0 : index
    %c400_127 = arith.constant 400 : index
    %115 = vector.load %arg6[%c0_126, %c400_127] : memref<16x784xf32, #tpu.memory_space<vmem>>, vector<16x384xf32>
    %c880 = arith.constant 880 : index
    %c0_128 = arith.constant 0 : index
    %116 = vector.load %arg7[%c880, %c0_128] : memref<1088x384xf32, #tpu.memory_space<vmem>>, vector<16x384xf32>
    tpu.vector_store %arg7[%c880, %c0_128], %115 {strides = array<i32>} : memref<1088x384xf32, #tpu.memory_space<vmem>>, vector<16x384xf32>,
    %c0_129 = arith.constant 0 : index
    %c216 = arith.constant 216 : index
    %117 = vector.load %arg6[%c0_129, %c216] : memref<16x784xf32, #tpu.memory_space<vmem>>, vector<16x384xf32>
    %c896 = arith.constant 896 : index
    %c0_130 = arith.constant 0 : index
    %118 = vector.load %arg7[%c896, %c0_130] : memref<1088x384xf32, #tpu.memory_space<vmem>>, vector<16x384xf32>
    tpu.vector_store %arg7[%c896, %c0_130], %117 {strides = array<i32>} : memref<1088x384xf32, #tpu.memory_space<vmem>>, vector<16x384xf32>,
    %c0_131 = arith.constant 0 : index
    %c232_132 = arith.constant 232 : index
    %119 = vector.load %arg6[%c0_131, %c232_132] : memref<16x784xf32, #tpu.memory_space<vmem>>, vector<16x384xf32>
    %c912 = arith.constant 912 : index
    %c0_133 = arith.constant 0 : index
    %120 = vector.load %arg7[%c912, %c0_133] : memref<1088x384xf32, #tpu.memory_space<vmem>>, vector<16x384xf32>
    tpu.vector_store %arg7[%c912, %c0_133], %119 {strides = array<i32>} : memref<1088x384xf32, #tpu.memory_space<vmem>>, vector<16x384xf32>,
    %c0_134 = arith.constant 0 : index
    %c248_135 = arith.constant 248 : index
    %121 = vector.load %arg6[%c0_134, %c248_135] : memref<16x784xf32, #tpu.memory_space<vmem>>, vector<16x384xf32>
    %c928 = arith.constant 928 : index
    %c0_136 = arith.constant 0 : index
    %122 = vector.load %arg7[%c928, %c0_136] : memref<1088x384xf32, #tpu.memory_space<vmem>>, vector<16x384xf32>
    tpu.vector_store %arg7[%c928, %c0_136], %121 {strides = array<i32>} : memref<1088x384xf32, #tpu.memory_space<vmem>>, vector<16x384xf32>,
    %c0_137 = arith.constant 0 : index
    %c264_138 = arith.constant 264 : index
    %123 = vector.load %arg6[%c0_137, %c264_138] : memref<16x784xf32, #tpu.memory_space<vmem>>, vector<16x384xf32>
    %c944 = arith.constant 944 : index
    %c0_139 = arith.constant 0 : index
    %124 = vector.load %arg7[%c944, %c0_139] : memref<1088x384xf32, #tpu.memory_space<vmem>>, vector<16x384xf32>
    tpu.vector_store %arg7[%c944, %c0_139], %123 {strides = array<i32>} : memref<1088x384xf32, #tpu.memory_space<vmem>>, vector<16x384xf32>,
    %c0_140 = arith.constant 0 : index
    %c280_141 = arith.constant 280 : index
    %125 = vector.load %arg6[%c0_140, %c280_141] : memref<16x784xf32, #tpu.memory_space<vmem>>, vector<16x384xf32>
    %c960 = arith.constant 960 : index
    %c0_142 = arith.constant 0 : index
    %126 = vector.load %arg7[%c960, %c0_142] : memref<1088x384xf32, #tpu.memory_space<vmem>>, vector<16x384xf32>
    tpu.vector_store %arg7[%c960, %c0_142], %125 {strides = array<i32>} : memref<1088x384xf32, #tpu.memory_space<vmem>>, vector<16x384xf32>,
    %c0_143 = arith.constant 0 : index
    %c296 = arith.constant 296 : index
    %127 = vector.load %arg6[%c0_143, %c296] : memref<16x784xf32, #tpu.memory_space<vmem>>, vector<16x384xf32>
    %c976 = arith.constant 976 : index
    %c0_144 = arith.constant 0 : index
    %128 = vector.load %arg7[%c976, %c0_144] : memref<1088x384xf32, #tpu.memory_space<vmem>>, vector<16x384xf32>
    tpu.vector_store %arg7[%c976, %c0_144], %127 {strides = array<i32>} : memref<1088x384xf32, #tpu.memory_space<vmem>>, vector<16x384xf32>,
    %c0_145 = arith.constant 0 : index
    %c236_146 = arith.constant 236 : index
    %129 = vector.load %arg6[%c0_145, %c236_146] : memref<16x784xf32, #tpu.memory_space<vmem>>, vector<16x384xf32>
    %c992 = arith.constant 992 : index
    %c0_147 = arith.constant 0 : index
    %130 = vector.load %arg7[%c992, %c0_147] : memref<1088x384xf32, #tpu.memory_space<vmem>>, vector<16x384xf32>
    tpu.vector_store %arg7[%c992, %c0_147], %129 {strides = array<i32>} : memref<1088x384xf32, #tpu.memory_space<vmem>>, vector<16x384xf32>,
    %c0_148 = arith.constant 0 : index
    %c244_149 = arith.constant 244 : index
    %131 = vector.load %arg6[%c0_148, %c244_149] : memref<16x784xf32, #tpu.memory_space<vmem>>, vector<16x384xf32>
    %c1008 = arith.constant 1008 : index
    %c0_150 = arith.constant 0 : index
    %132 = vector.load %arg7[%c1008, %c0_150] : memref<1088x384xf32, #tpu.memory_space<vmem>>, vector<16x384xf32>
    tpu.vector_store %arg7[%c1008, %c0_150], %131 {strides = array<i32>} : memref<1088x384xf32, #tpu.memory_space<vmem>>, vector<16x384xf32>,
    %c0_151 = arith.constant 0 : index
    %c252_152 = arith.constant 252 : index
    %133 = vector.load %arg6[%c0_151, %c252_152] : memref<16x784xf32, #tpu.memory_space<vmem>>, vector<16x384xf32>
    %c1024 = arith.constant 1024 : index
    %c0_153 = arith.constant 0 : index
    %134 = vector.load %arg7[%c1024, %c0_153] : memref<1088x384xf32, #tpu.memory_space<vmem>>, vector<16x384xf32>
    tpu.vector_store %arg7[%c1024, %c0_153], %133 {strides = array<i32>} : memref<1088x384xf32, #tpu.memory_space<vmem>>, vector<16x384xf32>,
    %c0_154 = arith.constant 0 : index
    %c260_155 = arith.constant 260 : index
    %135 = vector.load %arg6[%c0_154, %c260_155] : memref<16x784xf32, #tpu.memory_space<vmem>>, vector<16x384xf32>
    %c1040 = arith.constant 1040 : index
    %c0_156 = arith.constant 0 : index
    %136 = vector.load %arg7[%c1040, %c0_156] : memref<1088x384xf32, #tpu.memory_space<vmem>>, vector<16x384xf32>
    tpu.vector_store %arg7[%c1040, %c0_156], %135 {strides = array<i32>} : memref<1088x384xf32, #tpu.memory_space<vmem>>, vector<16x384xf32>,
    %c0_157 = arith.constant 0 : index
    %c268_158 = arith.constant 268 : index
    %137 = vector.load %arg6[%c0_157, %c268_158] : memref<16x784xf32, #tpu.memory_space<vmem>>, vector<16x384xf32>
    %c1056 = arith.constant 1056 : index
    %c0_159 = arith.constant 0 : index
    %138 = vector.load %arg7[%c1056, %c0_159] : memref<1088x384xf32, #tpu.memory_space<vmem>>, vector<16x384xf32>
    tpu.vector_store %arg7[%c1056, %c0_159], %137 {strides = array<i32>} : memref<1088x384xf32, #tpu.memory_space<vmem>>, vector<16x384xf32>,
    %c0_160 = arith.constant 0 : index
    %c276_161 = arith.constant 276 : index
    %139 = vector.load %arg6[%c0_160, %c276_161] : memref<16x784xf32, #tpu.memory_space<vmem>>, vector<16x384xf32>
    %c1072 = arith.constant 1072 : index
    %c0_162 = arith.constant 0 : index
    %140 = vector.load %arg7[%c1072, %c0_162] : memref<1088x384xf32, #tpu.memory_space<vmem>>, vector<16x384xf32>
    tpu.vector_store %arg7[%c1072, %c0_162], %139 {strides = array<i32>} : memref<1088x384xf32, #tpu.memory_space<vmem>>, vector<16x384xf32>,
    %c0_163 = arith.constant 0 : index
    %c0_164 = arith.constant 0 : index
    %141 = vector.load %arg2[%c0_163, %c0_164] : memref<32x1088xf32, #tpu.memory_space<vmem>>, vector<32x1088xf32>
    %c0_165 = arith.constant 0 : index
    %c0_166 = arith.constant 0 : index
    %142 = vector.load %arg7[%c0_165, %c0_166] : memref<1088x384xf32, #tpu.memory_space<vmem>>, vector<1088x384xf32>
    %cst_167 = arith.constant dense<0.000000e+00> : vector<32x384xf32>
    %143 = tpu.matmul %141, %142, %cst_167 {dimension_numbers = #tpu.dot_dimension_numbers<[1], [0], [0], [1], [0, 0, 1, 1], [], []>} : vector<32x1088xf32>, vector<1088x384xf32>, vector<32x384xf32> -> vector<32x384xf32>
    %c0_168 = arith.constant 0 : index
    %c0_169 = arith.constant 0 : index
    %144 = vector.load %arg3[%c0_168, %c0_169] : memref<32x1xf32, #tpu.memory_space<vmem>>, vector<32x1xf32>
    %145 = vector.broadcast %144 : vector<32x1xf32> to vector<32x384xf32>
    %146 = arith.mulf %143, %145 : vector<32x384xf32>
    %c0_170 = arith.constant 0 : index
    %c0_171 = arith.constant 0 : index
    %147 = vector.load %arg4[%c0_170, %c0_171] : memref<32x1xf32, #tpu.memory_space<vmem>>, vector<32x1xf32>
    %148 = vector.broadcast %147 : vector<32x1xf32> to vector<32x384xf32>
    %149 = arith.addf %146, %148 : vector<32x384xf32>
    %c0_172 = arith.constant 0 : index
    %c0_173 = arith.constant 0 : index
    %c0_174 = arith.constant 0 : index
    %150 = vector.load %arg1[%c0_172, %c0_173, %c0_174] : memref<1x16x384xf32, #tpu.memory_space<vmem>>, vector<1x16x384xf32>
    %151 = vector.shape_cast %150 : vector<1x16x384xf32> to vector<16x384xf32>
    %c0_175 = arith.constant 0 : index
    %c0_176 = arith.constant 0 : index
    %c0_177 = arith.constant 0 : index
    %152 = vector.load %arg5[%c0_175, %c0_176, %c0_177] : memref<1x48x384xf32, #tpu.memory_space<vmem>>, vector<1x16x384xf32>
    %153 = vector.shape_cast %152 : vector<1x16x384xf32> to vector<16x384xf32>
    %154 = vector.shape_cast %151 : vector<16x384xf32> to vector<1x16x384xf32>
    tpu.vector_store %arg5[%c0_175, %c0_176, %c0_177], %154 {strides = array<i32>} : memref<1x48x384xf32, #tpu.memory_space<vmem>>, vector<1x16x384xf32>,
    %c0_178 = arith.constant 0 : index
    %c16_179 = arith.constant 16 : index
    %c0_180 = arith.constant 0 : index
    %155 = vector.load %arg5[%c0_178, %c16_179, %c0_180] : memref<1x48x384xf32, #tpu.memory_space<vmem>>, vector<1x32x384xf32>
    %156 = vector.shape_cast %155 : vector<1x32x384xf32> to vector<32x384xf32>
    %157 = vector.shape_cast %149 : vector<32x384xf32> to vector<1x32x384xf32>
    tpu.vector_store %arg5[%c0_178, %c16_179, %c0_180], %157 {strides = array<i32>} : memref<1x48x384xf32, #tpu.memory_space<vmem>>, vector<1x32x384xf32>,
    return
  }
  func.func @transform_0(%arg0: i32) -> (i32, i32, i32) {
    %c0_i32 = arith.constant 0 : i32
    %c0_i32_0 = arith.constant 0 : i32
    %c0_i32_1 = arith.constant 0 : i32
    return %arg0, %c0_i32, %c0_i32_0 : i32, i32, i32
  }
  func.func @transform_1(%arg0: i32) -> (i32, i32) {
    %c0_i32 = arith.constant 0 : i32
    %c0_i32_0 = arith.constant 0 : i32
    %c0_i32_1 = arith.constant 0 : i32
    return %c0_i32, %c0_i32_0 : i32, i32
  }
  func.func @transform_2(%arg0: i32) -> (i32, i32) {
    %c0_i32 = arith.constant 0 : i32
    %c0_i32_0 = arith.constant 0 : i32
    %c0_i32_1 = arith.constant 0 : i32
    return %c0_i32, %c0_i32_0 : i32, i32
  }
  func.func @transform_3(%arg0: i32) -> (i32, i32) {
    %c0_i32 = arith.constant 0 : i32
    %c0_i32_0 = arith.constant 0 : i32
    %c0_i32_1 = arith.constant 0 : i32
    return %c0_i32, %c0_i32_0 : i32, i32
  }
  func.func @transform_4(%arg0: i32) -> (i32, i32, i32) {
    %c0_i32 = arith.constant 0 : i32
    %c0_i32_0 = arith.constant 0 : i32
    %c0_i32_1 = arith.constant 0 : i32
    return %arg0, %c0_i32, %c0_i32_0 : i32, i32, i32
  }
}

</mosaic_0001>

<llo_original>
// kernel: tpu_custom_call.1
$region0: #{tpu_custom_call.1}
  #allocation0 [shape = 'u32[]', space=smem, size = 0x4, offset = 0x4, fixed_abs, tag = 'smem constant byte address 0x4 - core index']
  #allocation1 [shape = 'u32[144,128]{1,0:T(1,128)}', space=vmem, size = 0x12000, scoped, tag = 'internal scratch']
  #allocation2 [shape = 'f32[16,784]{1,0:T(8,128)}', space=vmem, size = 0xe000, scoped, tag = 'scratch operand']
  #allocation3 [shape = 'f32[1088,384]{1,0:T(8,128)}', space=vmem, size = 0x198000, scoped, tag = 'scratch operand']
  %s0 = inlined_call_operand.hbm [shape: f32[2,16,384], index: 0, kind: input, shape index: {}]
  %s1 = inlined_call_operand.hbm [shape: f32[32,1088], index: 1, kind: input, shape index: {}]
  %s2 = inlined_call_operand.vmem [shape: f32[32,1], index: 2, kind: input, shape index: {}]
  %s3 = inlined_call_operand.vmem [shape: f32[32,1], index: 3, kind: input, shape index: {}]
  %s4 = inlined_call_operand.hbm [shape: f32[2,48,384], index: 4, kind: output, shape index: {}]
  %s5 = sld [smem:[#allocation0]]
  $region57: #{tpu_custom_call.1} parent=0
    _
  %s7 = ssub.s32 1, %s5
  %s8 = scalar_select 0, %s7, %s5
  $region1: #{tpu_custom_call.1} parent=0
    #allocation4 [shape = 'u8[49152]{0}', space=vmem, size = 0xc000, scoped, tag = 'input window, operand 0']
    #allocation5 [shape = 's32[2]{0}', space=sflag, size = 0x8, scoped, tag = 'scoped memory for tpu_custom_call.1']
    #allocation6 [shape = 's32[2]{0}', space=sflag, size = 0x8, scoped, tag = 'scoped memory for tpu_custom_call.1']
    #allocation7 [shape = 'u8[147456]{0}', space=vmem, size = 0x24000, scoped, tag = 'input window, operand 1, single buffered']
    #allocation8 [shape = 's32[1]{0}', space=sflag, size = 0x4, scoped, tag = 'scoped memory for tpu_custom_call.1']
    #allocation9 [shape = 'u8[147456]{0}', space=vmem, size = 0x24000, scoped, tag = 'output window, operand 0']
    %9 = vsyncpa [#allocation5], 0
    %s10 = scalar_lea.sflag [#allocation5], 1
    %11 = vsyncpa %s10, 0
    %12 = vsyncpa [#allocation8], 0
    %13 = vsyncpa [#allocation6], 0
    %s14 = scalar_lea.sflag [#allocation6], 1
    %15 = vsyncpa %s14, 0
    loop: start=0, step=1, limit=4
    $region2: #{tpu_custom_call.1} parent=1 // loop_pre_header
      _
    $region3: #{tpu_custom_call.1} parent=1 // loop_header
      %s17 = sphi 0, %s21
      %p18 = scmp.ge.s32.totalorder %s17, 4
      %s27 = sphi 0, %s29
      %s30 = sphi 0, %s27
      %s31 = sphi 0, %s30
      %s47 = sphi 0, %s31
      %s51 = sphi 0, %s51
      %s53 = sphi 0, %s51
      %s54 = sphi 0, %s53
      %s68 = sphi 0, %s54
      %s72 = sphi 0, %s72
      %s74 = sphi 0, %s72
      %s75 = sphi 0, %s74
      %s89 = sphi 0, %s75
      %s93 = sphi 0, %s93
      %s95 = sphi 0, %s93
      %s96 = sphi 0, %s95
      %s110 = sphi 0, %s96
      %s116 = sphi 0, %s118
      %s119 = sphi 0, %s116
      %s120 = sphi 0, %s119
      %s136 = sphi 0, %s120
    $region4: #{tpu_custom_call.1} parent=1 // loop_header_branch
      %20 = sbr.rel (%p18) target = $region8
    $region5: #{tpu_custom_call.1} parent=1 // loop_body
      %s22 = ssub.s32 %s17, 1
      %s23 = ssub.s32 %s17, 2
      %s24 = sadd.s32 %s17, 1
      %s25 = ssub.s32 %s17, %s24
      %p26 = scmp.eq.s32.totalorder %s25, 0
      %s28 = sadd.s32 %s27, 1
      %s29 = scalar_select %p26, %s27, %s28
      %p32 = pneg %p26
      %p33 = scmp.eq.s32.totalorder %s17, 1
      %p34 = por %p32, %p33
      %p35 = scmp.ne.s32.totalorder %s27, %s30
      %p36 = scmp.eq.s32.totalorder %s17, 0
      %p37 = por %p35, %p36
      %p38 = scmp.ne.s32.totalorder %s27, %s30
      %p39 = scmp.eq.s32.totalorder %s22, 1
      %p40 = por %p38, %p39
      %p41 = scmp.ne.s32.totalorder %s30, %s31
      %p42 = scmp.eq.s32.totalorder %s22, 0
      %p43 = por %p41, %p42
      %p44 = scmp.ne.s32.totalorder %s30, %s31
      %p45 = scmp.eq.s32.totalorder %s23, 1
      %p46 = por %p44, %p45
      %p48 = scmp.ne.s32.totalorder %s31, %s47
      %p49 = scmp.eq.s32.totalorder %s23, 0
      %p50 = por %p48, %p49
      %s52 = sadd.s32 %s51, 1
      %p55 = scmp.eq.s32.totalorder %s17, 1
      %p56 = scmp.ne.s32.totalorder %s51, %s53
      %p57 = scmp.eq.s32.totalorder %s17, 0
      %p58 = por %p56, %p57
      %p59 = scmp.ne.s32.totalorder %s51, %s53
      %p60 = scmp.eq.s32.totalorder %s22, 1
      %p61 = por %p59, %p60
      %p62 = scmp.ne.s32.totalorder %s53, %s54
      %p63 = scmp.eq.s32.totalorder %s22, 0
      %p64 = por %p62, %p63
      %p65 = scmp.ne.s32.totalorder %s53, %s54
      %p66 = scmp.eq.s32.totalorder %s23, 1
      %p67 = por %p65, %p66
      %p69 = scmp.ne.s32.totalorder %s54, %s68
      %p70 = scmp.eq.s32.totalorder %s23, 0
      %p71 = por %p69, %p70
      %s73 = sadd.s32 %s72, 1
      %p76 = scmp.eq.s32.totalorder %s17, 1
      %p77 = scmp.ne.s32.totalorder %s72, %s74
      %p78 = scmp.eq.s32.totalorder %s17, 0
      %p79 = por %p77, %p78
      %p80 = scmp.ne.s32.totalorder %s72, %s74
      %p81 = scmp.eq.s32.totalorder %s22, 1
      %p82 = por %p80, %p81
      %p83 = scmp.ne.s32.totalorder %s74, %s75
      %p84 = scmp.eq.s32.totalorder %s22, 0
      %p85 = por %p83, %p84
      %p86 = scmp.ne.s32.totalorder %s74, %s75
      %p87 = scmp.eq.s32.totalorder %s23, 1
      %p88 = por %p86, %p87
      %p90 = scmp.ne.s32.totalorder %s75, %s89
      %p91 = scmp.eq.s32.totalorder %s23, 0
      %p92 = por %p90, %p91
      %s94 = sadd.s32 %s93, 1
      %p97 = scmp.eq.s32.totalorder %s17, 1
      %p98 = scmp.ne.s32.totalorder %s93, %s95
      %p99 = scmp.eq.s32.totalorder %s17, 0
      %p100 = por %p98, %p99
      %p101 = scmp.ne.s32.totalorder %s93, %s95
      %p102 = scmp.eq.s32.totalorder %s22, 1
      %p103 = por %p101, %p102
      %p104 = scmp.ne.s32.totalorder %s95, %s96
      %p105 = scmp.eq.s32.totalorder %s22, 0
      %p106 = por %p104, %p105
      %p107 = scmp.ne.s32.totalorder %s95, %s96
      %p108 = scmp.eq.s32.totalorder %s23, 1
      %p109 = por %p107, %p108
      %p111 = scmp.ne.s32.totalorder %s96, %s110
      %p112 = scmp.eq.s32.totalorder %s23, 0
      %p113 = por %p111, %p112
      %s114 = ssub.s32 %s17, %s24
      %p115 = scmp.eq.s32.totalorder %s114, 0
      %s117 = sadd.s32 %s116, 1
      %s118 = scalar_select %p115, %s116, %s117
      %p121 = pneg %p115
      %p122 = scmp.eq.s32.totalorder %s17, 1
      %p123 = por %p121, %p122
      %p124 = scmp.ne.s32.totalorder %s116, %s119
      %p125 = scmp.eq.s32.totalorder %s17, 0
      %p126 = por %p124, %p125
      %p127 = scmp.ne.s32.totalorder %s116, %s119
      %p128 = scmp.eq.s32.totalorder %s22, 1
      %p129 = por %p127, %p128
      %p130 = scmp.ne.s32.totalorder %s119, %s120
      %p131 = scmp.eq.s32.totalorder %s22, 0
      %p132 = por %p130, %p131
      %p133 = scmp.ne.s32.totalorder %s119, %s120
      %p134 = scmp.eq.s32.totalorder %s23, 1
      %p135 = por %p133, %p134
      %p137 = scmp.ne.s32.totalorder %s120, %s136
      %p138 = scmp.eq.s32.totalorder %s23, 0
      %p139 = por %p137, %p138
      %p140 = scmp.le.s32.totalorder 1, %s17
      %p141 = scmp.lt.s32.totalorder %s17, 3
      %p142 = pnand %p140, %p141
      %p143 = pneg %p142
      // Predicated region
      $region9: #{tpu_custom_call.1} parent=5 // pred_check
        _
      $region10: #{tpu_custom_call.1} parent=5 // pred_check_branch
        %145 = sbr.rel (%p142) target = $region12
      $region11: #{tpu_custom_call.1} parent=5 // pred_region
        %s146 = ssub.s32 %s17, 1
        // Predicated region
        $region13: #{tpu_custom_call.1} parent=11 // pred_check
          %p147 = pneg %p64
        $region14: #{tpu_custom_call.1} parent=11 // pred_check_branch
          %149 = sbr.rel (%p147) target = $region16
        $region15: #{tpu_custom_call.1} parent=11 // pred_region
          %s151 = ssub.s32 4608, 4608
          %152 = vsyncadd [#allocation8], %s151
          %s153 = sshll.u32 [#allocation7], 4
          %s154 = int_to_ptr.vmem [resolvable:$true] %s153
          %159 = dma.hbm_to_vmem [thread:$0]  %s1, 4608, %s154, [#allocation8], 1152, 1152, 72
        $region16: #{tpu_custom_call.1} parent=11 // pred_fallthru
          _
        // Predicated region
        $region17: #{tpu_custom_call.1} parent=11 // pred_check
          %p160 = pneg %p85
        $region18: #{tpu_custom_call.1} parent=11 // pred_check_branch
          %162 = sbr.rel (%p160) target = $region20
        $region19: #{tpu_custom_call.1} parent=11 // pred_region
          _
        $region20: #{tpu_custom_call.1} parent=11 // pred_fallthru
          _
        // Predicated region
        $region21: #{tpu_custom_call.1} parent=11 // pred_check
          %p163 = pneg %p106
        $region22: #{tpu_custom_call.1} parent=11 // pred_check_branch
          %165 = sbr.rel (%p163) target = $region24
        $region23: #{tpu_custom_call.1} parent=11 // pred_region
          _
        $region24: #{tpu_custom_call.1} parent=11 // pred_fallthru
          _
      $region12: #{tpu_custom_call.1} parent=5 // pred_fallthru
        _
      %p166 = scmp.lt.s32.totalorder %s17, 2
      // Predicated region
      $region25: #{tpu_custom_call.1} parent=5 // pred_check
        %p167 = pneg %p166
      $region26: #{tpu_custom_call.1} parent=5 // pred_check_branch
        %169 = sbr.rel (%p167) target = $region28
      $region27: #{tpu_custom_call.1} parent=5 // pred_region
        // Predicated region
        $region29: #{tpu_custom_call.1} parent=27 // pred_check
          %p170 = pneg %p37
        $region30: #{tpu_custom_call.1} parent=27 // pred_check_branch
          %172 = sbr.rel (%p170) target = $region32
        $region31: #{tpu_custom_call.1} parent=27 // pred_region
          %s173 = sand.u32 %s27, 1
          %s174 = scalar_lea.sflag [#allocation5], %s173
          %s175 = sand.u32 %s27, 1
          %s176 = smul.addr %s175, 48
          %s177 = scalar_lea.vmem [#allocation4], %s176
          %s179 = ssub.s32 768, 768
          %180 = vsyncadd %s174, %s179
          %s181 = smul.addr %s17, 6
          %s182 = smul.addr %s181, 128
          %s183 = scalar_lea.hbm %s0, %s182
          %s184 = sshll.u32 %s177, 4
          %s185 = int_to_ptr.vmem [resolvable:$true] %s184
          %190 = dma.hbm_to_vmem [thread:$0]  %s183, 768, %s185, %s174, 384, 384, 24
        $region32: #{tpu_custom_call.1} parent=27 // pred_fallthru
          _
      $region28: #{tpu_custom_call.1} parent=5 // pred_fallthru
        _
      %p191 = scmp.le.s32.totalorder 1, %s17
      %p192 = scmp.lt.s32.totalorder %s17, 3
      %p193 = pnand %p191, %p192
      %p194 = pneg %p193
      // Predicated region
      $region33: #{tpu_custom_call.1} parent=5 // pred_check
        _
      $region34: #{tpu_custom_call.1} parent=5 // pred_check_branch
        %196 = sbr.rel (%p193) target = $region36
      $region35: #{tpu_custom_call.1} parent=5 // pred_region
        %s197 = ssub.s32 %s17, 1
        %s198 = sand.u32 %s30, 1
        %s199 = scalar_lea.sflag [#allocation5], %s198
        %s200 = sand.u32 %s30, 1
        %s201 = smul.addr %s200, 48
        %s202 = scalar_lea.vmem [#allocation4], %s201
        // Predicated region
        $region37: #{tpu_custom_call.1} parent=35 // pred_check
          %p203 = pneg %p43
        $region38: #{tpu_custom_call.1} parent=35 // pred_check_branch
          %205 = sbr.rel (%p203) target = $region40
        $region39: #{tpu_custom_call.1} parent=35 // pred_region
          %206 = dma.done %s199, 768
        $region40: #{tpu_custom_call.1} parent=35 // pred_fallthru
          _
        // Predicated region
        $region41: #{tpu_custom_call.1} parent=35 // pred_check
          %p207 = pneg %p64
        $region42: #{tpu_custom_call.1} parent=35 // pred_check_branch
          %209 = sbr.rel (%p207) target = $region44
        $region43: #{tpu_custom_call.1} parent=35 // pred_region
          %210 = dma.done [#allocation8], 4608
        $region44: #{tpu_custom_call.1} parent=35 // pred_fallthru
          _
        %s211 = sand.u32 %s30, 1
        %s212 = scalar_lea.sflag [#allocation5], %s211
        %s213 = sand.u32 %s30, 1
        %s214 = smul.addr %s213, 48
        %s215 = scalar_lea.vmem [#allocation4], %s214
        %p216 = pneg %p43
        %p217 = pneg %p40
        %p218 = pneg %p64
        %p219 = pneg %p61
        %p220 = pneg %p85
        %p221 = pneg %p82
        %p222 = pneg %p106
        %p223 = pneg %p103
        %p224 = pneg %p132
        %p225 = pneg %p129
        %s226 = sand.u32 %s119, 1
        %s227 = scalar_lea.sflag [#allocation6], %s226
        %s228 = sand.u32 %s119, 1
        %s229 = smul.addr %s228, 144
        %s230 = scalar_lea.vmem [#allocation9], %s229
        %231 = vst [vmem:[#allocation2] sm:$0xff] 0.0
        %232 = vst [vmem:[#allocation2 + $0x8] sm:$0xff] 0.0
        %233 = vst [vmem:[#allocation2 + $0x10] sm:$0xff] 0.0
        %234 = vst [vmem:[#allocation2 + $0x18] sm:$0xff] 0.0
        %235 = vst [vmem:[#allocation2 + $0x20] sm:$0xff] 0.0
        %236 = vst [vmem:[#allocation2 + $0x28] sm:$0xff] 0.0
        %vm237 = vcmask 130048
        %238 = vst.msk [vmem:[#allocation2 + $0x30] sm:$0xff] %vm237, 0.0
        %239 = vst [vmem:[#allocation2 + $0x38] sm:$0xff] 0.0
        %240 = vst [vmem:[#allocation2 + $0x40] sm:$0xff] 0.0
        %241 = vst [vmem:[#allocation2 + $0x48] sm:$0xff] 0.0
        %242 = vst [vmem:[#allocation2 + $0x50] sm:$0xff] 0.0
        %243 = vst [vmem:[#allocation2 + $0x58] sm:$0xff] 0.0
        %244 = vst [vmem:[#allocation2 + $0x60] sm:$0xff] 0.0
        %245 = vst.msk [vmem:[#allocation2 + $0x68] sm:$0xff] %vm237, 0.0
        %v246 = vld [vmem:[%s202] sm:$0xff]
        %v247 = vld [vmem:[%s202 + $0x8] sm:$0xff]
        %v248 = vld [vmem:[%s202 + $0x10] sm:$0xff]
        %v249 = vld [vmem:[%s202 + $0x18] sm:$0xff]
        %v250 = vld [vmem:[%s202 + $0x20] sm:$0xff]
        %v251 = vld [vmem:[%s202 + $0x28] sm:$0xff]
        %252 = vst [vmem:[#allocation2 + $0x10] sm:$0xff] %v246
        %253 = vst [vmem:[#allocation2 + $0x18] sm:$0xff] %v247
        %254 = vst [vmem:[#allocation2 + $0x20] sm:$0xff] %v248
        %255 = vst [vmem:[#allocation2 + $0x48] sm:$0xff] %v249
        %256 = vst [vmem:[#allocation2 + $0x50] sm:$0xff] %v250
        %257 = vst [vmem:[#allocation2 + $0x58] sm:$0xff] %v251
        %v258 = vld [vmem:[#allocation2 + $0x8] sm:$0xff]
        %v259 = vld [vmem:[#allocation2 + $0x10] sm:$0xff]
        %v260 = vld [vmem:[#allocation2 + $0x18] sm:$0xff]
        %v261 = vld [vmem:[#allocation2 + $0x20] sm:$0xff]
        %v262 = vld [vmem:[#allocation2 + $0x40] sm:$0xff]
        %v263 = vld [vmem:[#allocation2 + $0x48] sm:$0xff]
        %v264 = vld [vmem:[#allocation2 + $0x50] sm:$0xff]
        %v265 = vld [vmem:[#allocation2 + $0x58] sm:$0xff]
        %274 = vrot.lane.b32.xlu0 %v258, 24
        %v275 = vpop.permute.xlu0 %274
        %276 = vrot.lane.b32.xlu0 %v259, 24
        %v277 = vpop.permute.xlu0 %276
        %278 = vrot.lane.b32.xlu0 %v260, 24
        %v279 = vpop.permute.xlu0 %278
        %280 = vrot.lane.b32.xlu0 %v261, 24
        %v281 = vpop.permute.xlu0 %280
        %282 = vrot.lane.b32.xlu0 %v262, 24
        %v283 = vpop.permute.xlu0 %282
        %284 = vrot.lane.b32.xlu0 %v263, 24
        %v285 = vpop.permute.xlu0 %284
        %286 = vrot.lane.b32.xlu0 %v264, 24
        %v287 = vpop.permute.xlu0 %286
        %288 = vrot.lane.b32.xlu0 %v265, 24
        %v289 = vpop.permute.xlu0 %288
        %vm290 = vcmask 195584
        %v291 = vsel %vm290, %v275, %v277
        %v292 = vsel %vm290, %v277, %v279
        %v293 = vsel %vm290, %v279, %v281
        %v294 = vsel %vm290, %v283, %v285
        %v295 = vsel %vm290, %v285, %v287
        %v296 = vsel %vm290, %v287, %v289
        %303 = vst [vmem:[#allocation3] sm:$0xff] %v291
        %304 = vst [vmem:[#allocation3 + $0x8] sm:$0xff] %v292
        %305 = vst [vmem:[#allocation3 + $0x10] sm:$0xff] %v293
        %306 = vst [vmem:[#allocation3 + $0x18] sm:$0xff] %v294
        %307 = vst [vmem:[#allocation3 + $0x20] sm:$0xff] %v295
        %308 = vst [vmem:[#allocation3 + $0x28] sm:$0xff] %v296
        %v309 = vld [vmem:[#allocation2 + $0x8] sm:$0xff]
        %v310 = vld [vmem:[#allocation2 + $0x10] sm:$0xff]
        %v311 = vld [vmem:[#allocation2 + $0x18] sm:$0xff]
        %v312 = vld [vmem:[#allocation2 + $0x20] sm:$0xff]
        %v313 = vld [vmem:[#allocation2 + $0x40] sm:$0xff]
        %v314 = vld [vmem:[#allocation2 + $0x48] sm:$0xff]
        %v315 = vld [vmem:[#allocation2 + $0x50] sm:$0xff]
        %v316 = vld [vmem:[#allocation2 + $0x58] sm:$0xff]
        %325 = vrot.lane.b32.xlu0 %v309, 23
        %v326 = vpop.permute.xlu0 %325
        %327 = vrot.lane.b32.xlu0 %v310, 23
        %v328 = vpop.permute.xlu0 %327
        %329 = vrot.lane.b32.xlu0 %v311, 23
        %v330 = vpop.permute.xlu0 %329
        %331 = vrot.lane.b32.xlu0 %v312, 23
        %v332 = vpop.permute.xlu0 %331
        %333 = vrot.lane.b32.xlu0 %v313, 23
        %v334 = vpop.permute.xlu0 %333
        %335 = vrot.lane.b32.xlu0 %v314, 23
        %v336 = vpop.permute.xlu0 %335
        %337 = vrot.lane.b32.xlu0 %v315, 23
        %v338 = vpop.permute.xlu0 %337
        %339 = vrot.lane.b32.xlu0 %v316, 23
        %v340 = vpop.permute.xlu0 %339
        %vm341 = vcmask 187392
        %v342 = vsel %vm341, %v326, %v328
        %v343 = vsel %vm341, %v328, %v330
        %v344 = vsel %vm341, %v330, %v332
        %v345 = vsel %vm341, %v334, %v336
        %v346 = vsel %vm341, %v336, %v338
        %v347 = vsel %vm341, %v338, %v340
        %354 = vst [vmem:[#allocation3 + $0x30] sm:$0xff] %v342
        %355 = vst [vmem:[#allocation3 + $0x38] sm:$0xff] %v343
        %356 = vst [vmem:[#allocation3 + $0x40] sm:$0xff] %v344
        %357 = vst [vmem:[#allocation3 + $0x48] sm:$0xff] %v345
        %358 = vst [vmem:[#allocation3 + $0x50] sm:$0xff] %v346
        %359 = vst [vmem:[#allocation3 + $0x58] sm:$0xff] %v347
        %v360 = vld [vmem:[#allocation2 + $0x8] sm:$0xff]
        %v361 = vld [vmem:[#allocation2 + $0x10] sm:$0xff]
        %v362 = vld [vmem:[#allocation2 + $0x18] sm:$0xff]
        %v363 = vld [vmem:[#allocation2 + $0x20] sm:$0xff]
        %v364 = vld [vmem:[#allocation2 + $0x40] sm:$0xff]
        %v365 = vld [vmem:[#allocation2 + $0x48] sm:$0xff]
        %v366 = vld [vmem:[#allocation2 + $0x50] sm:$0xff]
        %v367 = vld [vmem:[#allocation2 + $0x58] sm:$0xff]
        %376 = vrot.lane.b32.xlu0 %v360, 22
        %v377 = vpop.permute.xlu0 %376
        %378 = vrot.lane.b32.xlu0 %v361, 22
        %v379 = vpop.permute.xlu0 %378
        %380 = vrot.lane.b32.xlu0 %v362, 22
        %v381 = vpop.permute.xlu0 %380
        %382 = vrot.lane.b32.xlu0 %v363, 22
        %v383 = vpop.permute.xlu0 %382
        %384 = vrot.lane.b32.xlu0 %v364, 22
        %v385 = vpop.permute.xlu0 %384
        %386 = vrot.lane.b32.xlu0 %v365, 22
        %v387 = vpop.permute.xlu0 %386
        %388 = vrot.lane.b32.xlu0 %v366, 22
        %v389 = vpop.permute.xlu0 %388
        %390 = vrot.lane.b32.xlu0 %v367, 22
        %v391 = vpop.permute.xlu0 %390
        %vm392 = vcmask 179200
        %v393 = vsel %vm392, %v377, %v379
        %v394 = vsel %vm392, %v379, %v381
        %v395 = vsel %vm392, %v381, %v383
        %v396 = vsel %vm392, %v385, %v387
        %v397 = vsel %vm392, %v387, %v389
        %v398 = vsel %vm392, %v389, %v391
        %405 = vst [vmem:[#allocation3 + $0x60] sm:$0xff] %v393
        %406 = vst [vmem:[#allocation3 + $0x68] sm:$0xff] %v394
        %407 = vst [vmem:[#allocation3 + $0x70] sm:$0xff] %v395
        %408 = vst [vmem:[#allocation3 + $0x78] sm:$0xff] %v396
        %409 = vst [vmem:[#allocation3 + $0x80] sm:$0xff] %v397
        %410 = vst [vmem:[#allocation3 + $0x88] sm:$0xff] %v398
        %v411 = vld [vmem:[#allocation2 + $0x8] sm:$0xff]
        %v412 = vld [vmem:[#allocation2 + $0x10] sm:$0xff]
        %v413 = vld [vmem:[#allocation2 + $0x18] sm:$0xff]
        %v414 = vld [vmem:[#allocation2 + $0x20] sm:$0xff]
        %v415 = vld [vmem:[#allocation2 + $0x40] sm:$0xff]
        %v416 = vld [vmem:[#allocation2 + $0x48] sm:$0xff]
        %v417 = vld [vmem:[#allocation2 + $0x50] sm:$0xff]
        %v418 = vld [vmem:[#allocation2 + $0x58] sm:$0xff]
        %427 = vrot.lane.b32.xlu0 %v411, 21
        %v428 = vpop.permute.xlu0 %427
        %429 = vrot.lane.b32.xlu0 %v412, 21
        %v430 = vpop.permute.xlu0 %429
        %431 = vrot.lane.b32.xlu0 %v413, 21
        %v432 = vpop.permute.xlu0 %431
        %433 = vrot.lane.b32.xlu0 %v414, 21
        %v434 = vpop.permute.xlu0 %433
        %435 = vrot.lane.b32.xlu0 %v415, 21
        %v436 = vpop.permute.xlu0 %435
        %437 = vrot.lane.b32.xlu0 %v416, 21
        %v438 = vpop.permute.xlu0 %437
        %439 = vrot.lane.b32.xlu0 %v417, 21
        %v440 = vpop.permute.xlu0 %439
        %441 = vrot.lane.b32.xlu0 %v418, 21
        %v442 = vpop.permute.xlu0 %441
        %vm443 = vcmask 171008
        %v444 = vsel %vm443, %v428, %v430
        %v445 = vsel %vm443, %v430, %v432
        %v446 = vsel %vm443, %v432, %v434
        %v447 = vsel %vm443, %v436, %v438
        %v448 = vsel %vm443, %v438, %v440
        %v449 = vsel %vm443, %v440, %v442
        %456 = vst [vmem:[#allocation3 + $0x90] sm:$0xff] %v444
        %457 = vst [vmem:[#allocation3 + $0x98] sm:$0xff] %v445
        %458 = vst [vmem:[#allocation3 + $0xa0] sm:$0xff] %v446
        %459 = vst [vmem:[#allocation3 + $0xa8] sm:$0xff] %v447
        %460 = vst [vmem:[#allocation3 + $0xb0] sm:$0xff] %v448
        %461 = vst [vmem:[#allocation3 + $0xb8] sm:$0xff] %v449
        %v462 = vld [vmem:[#allocation2 + $0x8] sm:$0xff]
        %v463 = vld [vmem:[#allocation2 + $0x10] sm:$0xff]
        %v464 = vld [vmem:[#allocation2 + $0x18] sm:$0xff]
        %v465 = vld [vmem:[#allocation2 + $0x20] sm:$0xff]
        %v466 = vld [vmem:[#allocation2 + $0x40] sm:$0xff]
        %v467 = vld [vmem:[#allocation2 + $0x48] sm:$0xff]
        %v468 = vld [vmem:[#allocation2 + $0x50] sm:$0xff]
        %v469 = vld [vmem:[#allocation2 + $0x58] sm:$0xff]
        %478 = vrot.lane.b32.xlu0 %v462, 20
        %v479 = vpop.permute.xlu0 %478
        %480 = vrot.lane.b32.xlu0 %v463, 20
        %v481 = vpop.permute.xlu0 %480
        %482 = vrot.lane.b32.xlu0 %v464, 20
        %v483 = vpop.permute.xlu0 %482
        %484 = vrot.lane.b32.xlu0 %v465, 20
        %v485 = vpop.permute.xlu0 %484
        %486 = vrot.lane.b32.xlu0 %v466, 20
        %v487 = vpop.permute.xlu0 %486
        %488 = vrot.lane.b32.xlu0 %v467, 20
        %v489 = vpop.permute.xlu0 %488
        %490 = vrot.lane.b32.xlu0 %v468, 20
        %v491 = vpop.permute.xlu0 %490
        %492 = vrot.lane.b32.xlu0 %v469, 20
        %v493 = vpop.permute.xlu0 %492
        %vm494 = vcmask 162816
        %v495 = vsel %vm494, %v479, %v481
        %v496 = vsel %vm494, %v481, %v483
        %v497 = vsel %vm494, %v483, %v485
        %v498 = vsel %vm494, %v487, %v489
        %v499 = vsel %vm494, %v489, %v491
        %v500 = vsel %vm494, %v491, %v493
        %507 = vst [vmem:[#allocation3 + $0xc0] sm:$0xff] %v495
        %508 = vst [vmem:[#allocation3 + $0xc8] sm:$0xff] %v496
        %509 = vst [vmem:[#allocation3 + $0xd0] sm:$0xff] %v497
        %510 = vst [vmem:[#allocation3 + $0xd8] sm:$0xff] %v498
        %511 = vst [vmem:[#allocation3 + $0xe0] sm:$0xff] %v499
        %512 = vst [vmem:[#allocation3 + $0xe8] sm:$0xff] %v500
        %v513 = vld [vmem:[#allocation2 + $0x8] sm:$0xff]
        %v514 = vld [vmem:[#allocation2 + $0x10] sm:$0xff]
        %v515 = vld [vmem:[#allocation2 + $0x18] sm:$0xff]
        %v516 = vld [vmem:[#allocation2 + $0x20] sm:$0xff]
        %v517 = vld [vmem:[#allocation2 + $0x40] sm:$0xff]
        %v518 = vld [vmem:[#allocation2 + $0x48] sm:$0xff]
        %v519 = vld [vmem:[#allocation2 + $0x50] sm:$0xff]
        %v520 = vld [vmem:[#allocation2 + $0x58] sm:$0xff]
        %529 = vrot.lane.b32.xlu0 %v513, 19
        %v530 = vpop.permute.xlu0 %529
        %531 = vrot.lane.b32.xlu0 %v514, 19
        %v532 = vpop.permute.xlu0 %531
        %533 = vrot.lane.b32.xlu0 %v515, 19
        %v534 = vpop.permute.xlu0 %533
        %535 = vrot.lane.b32.xlu0 %v516, 19
        %v536 = vpop.permute.xlu0 %535
        %537 = vrot.lane.b32.xlu0 %v517, 19
        %v538 = vpop.permute.xlu0 %537
        %539 = vrot.lane.b32.xlu0 %v518, 19
        %v540 = vpop.permute.xlu0 %539
        %541 = vrot.lane.b32.xlu0 %v519, 19
        %v542 = vpop.permute.xlu0 %541
        %543 = vrot.lane.b32.xlu0 %v520, 19
        %v544 = vpop.permute.xlu0 %543
        %vm545 = vcmask 154624
        %v546 = vsel %vm545, %v530, %v532
        %v547 = vsel %vm545, %v532, %v534
        %v548 = vsel %vm545, %v534, %v536
        %v549 = vsel %vm545, %v538, %v540
        %v550 = vsel %vm545, %v540, %v542
        %v551 = vsel %vm545, %v542, %v544
        %558 = vst [vmem:[#allocation3 + $0xf0] sm:$0xff] %v546
        %559 = vst [vmem:[#allocation3 + $0xf8] sm:$0xff] %v547
        %560 = vst [vmem:[#allocation3 + $0x100] sm:$0xff] %v548
        %561 = vst [vmem:[#allocation3 + $0x108] sm:$0xff] %v549
        %562 = vst [vmem:[#allocation3 + $0x110] sm:$0xff] %v550
        %563 = vst [vmem:[#allocation3 + $0x118] sm:$0xff] %v551
        %v564 = vld [vmem:[#allocation2 + $0x8] sm:$0xff]
        %v565 = vld [vmem:[#allocation2 + $0x10] sm:$0xff]
        %v566 = vld [vmem:[#allocation2 + $0x18] sm:$0xff]
        %v567 = vld [vmem:[#allocation2 + $0x20] sm:$0xff]
        %v568 = vld [vmem:[#allocation2 + $0x40] sm:$0xff]
        %v569 = vld [vmem:[#allocation2 + $0x48] sm:$0xff]
        %v570 = vld [vmem:[#allocation2 + $0x50] sm:$0xff]
        %v571 = vld [vmem:[#allocation2 + $0x58] sm:$0xff]
        %580 = vrot.lane.b32.xlu0 %v564, 18
        %v581 = vpop.permute.xlu0 %580
        %582 = vrot.lane.b32.xlu0 %v565, 18
        %v583 = vpop.permute.xlu0 %582
        %584 = vrot.lane.b32.xlu0 %v566, 18
        %v585 = vpop.permute.xlu0 %584
        %586 = vrot.lane.b32.xlu0 %v567, 18
        %v587 = vpop.permute.xlu0 %586
        %588 = vrot.lane.b32.xlu0 %v568, 18
        %v589 = vpop.permute.xlu0 %588
        %590 = vrot.lane.b32.xlu0 %v569, 18
        %v591 = vpop.permute.xlu0 %590
        %592 = vrot.lane.b32.xlu0 %v570, 18
        %v593 = vpop.permute.xlu0 %592
        %594 = vrot.lane.b32.xlu0 %v571, 18
        %v595 = vpop.permute.xlu0 %594
        %vm596 = vcmask 146432
        %v597 = vsel %vm596, %v581, %v583
        %v598 = vsel %vm596, %v583, %v585
        %v599 = vsel %vm596, %v585, %v587
        %v600 = vsel %vm596, %v589, %v591
        %v601 = vsel %vm596, %v591, %v593
        %v602 = vsel %vm596, %v593, %v595
        %609 = vst [vmem:[#allocation3 + $0x120] sm:$0xff] %v597
        %610 = vst [vmem:[#allocation3 + $0x128] sm:$0xff] %v598
        %611 = vst [vmem:[#allocation3 + $0x130] sm:$0xff] %v599
        %612 = vst [vmem:[#allocation3 + $0x138] sm:$0xff] %v600
        %613 = vst [vmem:[#allocation3 + $0x140] sm:$0xff] %v601
        %614 = vst [vmem:[#allocation3 + $0x148] sm:$0xff] %v602
        %v615 = vld [vmem:[#allocation2 + $0x8] sm:$0xff]
        %v616 = vld [vmem:[#allocation2 + $0x10] sm:$0xff]
        %v617 = vld [vmem:[#allocation2 + $0x18] sm:$0xff]
        %v618 = vld [vmem:[#allocation2 + $0x20] sm:$0xff]
        %v619 = vld [vmem:[#allocation2 + $0x40] sm:$0xff]
        %v620 = vld [vmem:[#allocation2 + $0x48] sm:$0xff]
        %v621 = vld [vmem:[#allocation2 + $0x50] sm:$0xff]
        %v622 = vld [vmem:[#allocation2 + $0x58] sm:$0xff]
        %631 = vrot.lane.b32.xlu0 %v615, 17
        %v632 = vpop.permute.xlu0 %631
        %633 = vrot.lane.b32.xlu0 %v616, 17
        %v634 = vpop.permute.xlu0 %633
        %635 = vrot.lane.b32.xlu0 %v617, 17
        %v636 = vpop.permute.xlu0 %635
        %637 = vrot.lane.b32.xlu0 %v618, 17
        %v638 = vpop.permute.xlu0 %637
        %639 = vrot.lane.b32.xlu0 %v619, 17
        %v640 = vpop.permute.xlu0 %639
        %641 = vrot.lane.b32.xlu0 %v620, 17
        %v642 = vpop.permute.xlu0 %641
        %643 = vrot.lane.b32.xlu0 %v621, 17
        %v644 = vpop.permute.xlu0 %643
        %645 = vrot.lane.b32.xlu0 %v622, 17
        %v646 = vpop.permute.xlu0 %645
        %vm647 = vcmask 138240
        %v648 = vsel %vm647, %v632, %v634
        %v649 = vsel %vm647, %v634, %v636
        %v650 = vsel %vm647, %v636, %v638
        %v651 = vsel %vm647, %v640, %v642
        %v652 = vsel %vm647, %v642, %v644
        %v653 = vsel %vm647, %v644, %v646
        %660 = vst [vmem:[#allocation3 + $0x150] sm:$0xff] %v648
        %661 = vst [vmem:[#allocation3 + $0x158] sm:$0xff] %v649
        %662 = vst [vmem:[#allocation3 + $0x160] sm:$0xff] %v650
        %663 = vst [vmem:[#allocation3 + $0x168] sm:$0xff] %v651
        %664 = vst [vmem:[#allocation3 + $0x170] sm:$0xff] %v652
        %665 = vst [vmem:[#allocation3 + $0x178] sm:$0xff] %v653
        %v666 = vld [vmem:[#allocation2 + $0x8] sm:$0xff]
        %v667 = vld [vmem:[#allocation2 + $0x10] sm:$0xff]
        %v668 = vld [vmem:[#allocation2 + $0x18] sm:$0xff]
        %v669 = vld [vmem:[#allocation2 + $0x20] sm:$0xff]
        %v670 = vld [vmem:[#allocation2 + $0x40] sm:$0xff]
        %v671 = vld [vmem:[#allocation2 + $0x48] sm:$0xff]
        %v672 = vld [vmem:[#allocation2 + $0x50] sm:$0xff]
        %v673 = vld [vmem:[#allocation2 + $0x58] sm:$0xff]
        %682 = vrot.lane.b32.xlu0 %v666, 16
        %v683 = vpop.permute.xlu0 %682
        %684 = vrot.lane.b32.xlu0 %v667, 16
        %v685 = vpop.permute.xlu0 %684
        %686 = vrot.lane.b32.xlu0 %v668, 16
        %v687 = vpop.permute.xlu0 %686
        %688 = vrot.lane.b32.xlu0 %v669, 16
        %v689 = vpop.permute.xlu0 %688
        %690 = vrot.lane.b32.xlu0 %v670, 16
        %v691 = vpop.permute.xlu0 %690
        %692 = vrot.lane.b32.xlu0 %v671, 16
        %v693 = vpop.permute.xlu0 %692
        %694 = vrot.lane.b32.xlu0 %v672, 16
        %v695 = vpop.permute.xlu0 %694
        %696 = vrot.lane.b32.xlu0 %v673, 16
        %v697 = vpop.permute.xlu0 %696
        %v698 = vsel %vm237, %v683, %v685
        %v699 = vsel %vm237, %v685, %v687
        %v700 = vsel %vm237, %v687, %v689
        %v701 = vsel %vm237, %v691, %v693
        %v702 = vsel %vm237, %v693, %v695
        %v703 = vsel %vm237, %v695, %v697
        %710 = vst [vmem:[#allocation3 + $0x180] sm:$0xff] %v698
        %711 = vst [vmem:[#allocation3 + $0x188] sm:$0xff] %v699
        %712 = vst [vmem:[#allocation3 + $0x190] sm:$0xff] %v700
        %713 = vst [vmem:[#allocation3 + $0x198] sm:$0xff] %v701
        %714 = vst [vmem:[#allocation3 + $0x1a0] sm:$0xff] %v702
        %715 = vst [vmem:[#allocation3 + $0x1a8] sm:$0xff] %v703
        %v716 = vld [vmem:[#allocation2 + $0x8] sm:$0xff]
        %v717 = vld [vmem:[#allocation2 + $0x10] sm:$0xff]
        %v718 = vld [vmem:[#allocation2 + $0x18] sm:$0xff]
        %v719 = vld [vmem:[#allocation2 + $0x20] sm:$0xff]
        %v720 = vld [vmem:[#allocation2 + $0x40] sm:$0xff]
        %v721 = vld [vmem:[#allocation2 + $0x48] sm:$0xff]
        %v722 = vld [vmem:[#allocation2 + $0x50] sm:$0xff]
        %v723 = vld [vmem:[#allocation2 + $0x58] sm:$0xff]
        %732 = vrot.lane.b32.xlu0 %v716, 15
        %v733 = vpop.permute.xlu0 %732
        %734 = vrot.lane.b32.xlu0 %v717, 15
        %v735 = vpop.permute.xlu0 %734
        %736 = vrot.lane.b32.xlu0 %v718, 15
        %v737 = vpop.permute.xlu0 %736
        %738 = vrot.lane.b32.xlu0 %v719, 15
        %v739 = vpop.permute.xlu0 %738
        %740 = vrot.lane.b32.xlu0 %v720, 15
        %v741 = vpop.permute.xlu0 %740
        %742 = vrot.lane.b32.xlu0 %v721, 15
        %v743 = vpop.permute.xlu0 %742
        %744 = vrot.lane.b32.xlu0 %v722, 15
        %v745 = vpop.permute.xlu0 %744
        %746 = vrot.lane.b32.xlu0 %v723, 15
        %v747 = vpop.permute.xlu0 %746
        %vm748 = vcmask 121856
        %v749 = vsel %vm748, %v733, %v735
        %v750 = vsel %vm748, %v735, %v737
        %v751 = vsel %vm748, %v737, %v739
        %v752 = vsel %vm748, %v741, %v743
        %v753 = vsel %vm748, %v743, %v745
        %v754 = vsel %vm748, %v745, %v747
        %761 = vst [vmem:[#allocation3 + $0x1b0] sm:$0xff] %v749
        %762 = vst [vmem:[#allocation3 + $0x1b8] sm:$0xff] %v750
        %763 = vst [vmem:[#allocation3 + $0x1c0] sm:$0xff] %v751
        %764 = vst [vmem:[#allocation3 + $0x1c8] sm:$0xff] %v752
        %765 = vst [vmem:[#allocation3 + $0x1d0] sm:$0xff] %v753
        %766 = vst [vmem:[#allocation3 + $0x1d8] sm:$0xff] %v754
        %v767 = vld [vmem:[#allocation2 + $0x8] sm:$0xff]
        %v768 = vld [vmem:[#allocation2 + $0x10] sm:$0xff]
        %v769 = vld [vmem:[#allocation2 + $0x18] sm:$0xff]
        %v770 = vld [vmem:[#allocation2 + $0x20] sm:$0xff]
        %v771 = vld [vmem:[#allocation2 + $0x40] sm:$0xff]
        %v772 = vld [vmem:[#allocation2 + $0x48] sm:$0xff]
        %v773 = vld [vmem:[#allocation2 + $0x50] sm:$0xff]
        %v774 = vld [vmem:[#allocation2 + $0x58] sm:$0xff]
        %783 = vrot.lane.b32.xlu0 %v767, 14
        %v784 = vpop.permute.xlu0 %783
        %785 = vrot.lane.b32.xlu0 %v768, 14
        %v786 = vpop.permute.xlu0 %785
        %787 = vrot.lane.b32.xlu0 %v769, 14
        %v788 = vpop.permute.xlu0 %787
        %789 = vrot.lane.b32.xlu0 %v770, 14
        %v790 = vpop.permute.xlu0 %789
        %791 = vrot.lane.b32.xlu0 %v771, 14
        %v792 = vpop.permute.xlu0 %791
        %793 = vrot.lane.b32.xlu0 %v772, 14
        %v794 = vpop.permute.xlu0 %793
        %795 = vrot.lane.b32.xlu0 %v773, 14
        %v796 = vpop.permute.xlu0 %795
        %797 = vrot.lane.b32.xlu0 %v774, 14
        %v798 = vpop.permute.xlu0 %797
        %vm799 = vcmask 113664
        %v800 = vsel %vm799, %v784, %v786
        %v801 = vsel %vm799, %v786, %v788
        %v802 = vsel %vm799, %v788, %v790
        %v803 = vsel %vm799, %v792, %v794
        %v804 = vsel %vm799, %v794, %v796
        %v805 = vsel %vm799, %v796, %v798
        %812 = vst [vmem:[#allocation3 + $0x1e0] sm:$0xff] %v800
        %813 = vst [vmem:[#allocation3 + $0x1e8] sm:$0xff] %v801
        %814 = vst [vmem:[#allocation3 + $0x1f0] sm:$0xff] %v802
        %815 = vst [vmem:[#allocation3 + $0x1f8] sm:$0xff] %v803
        %816 = vst [vmem:[#allocation3 + $0x200] sm:$0xff] %v804
        %817 = vst [vmem:[#allocation3 + $0x208] sm:$0xff] %v805
        %v818 = vld [vmem:[#allocation2 + $0x8] sm:$0xff]
        %v819 = vld [vmem:[#allocation2 + $0x10] sm:$0xff]
        %v820 = vld [vmem:[#allocation2 + $0x18] sm:$0xff]
        %v821 = vld [vmem:[#allocation2 + $0x20] sm:$0xff]
        %v822 = vld [vmem:[#allocation2 + $0x40] sm:$0xff]
        %v823 = vld [vmem:[#allocation2 + $0x48] sm:$0xff]
        %v824 = vld [vmem:[#allocation2 + $0x50] sm:$0xff]
        %v825 = vld [vmem:[#allocation2 + $0x58] sm:$0xff]
        %834 = vrot.lane.b32.xlu0 %v818, 13
        %v835 = vpop.permute.xlu0 %834
        %836 = vrot.lane.b32.xlu0 %v819, 13
        %v837 = vpop.permute.xlu0 %836
        %838 = vrot.lane.b32.xlu0 %v820, 13
        %v839 = vpop.permute.xlu0 %838
        %840 = vrot.lane.b32.xlu0 %v821, 13
        %v841 = vpop.permute.xlu0 %840
        %842 = vrot.lane.b32.xlu0 %v822, 13
        %v843 = vpop.permute.xlu0 %842
        %844 = vrot.lane.b32.xlu0 %v823, 13
        %v845 = vpop.permute.xlu0 %844
        %846 = vrot.lane.b32.xlu0 %v824, 13
        %v847 = vpop.permute.xlu0 %846
        %848 = vrot.lane.b32.xlu0 %v825, 13
        %v849 = vpop.permute.xlu0 %848
        %vm850 = vcmask 105472
        %v851 = vsel %vm850, %v835, %v837
        %v852 = vsel %vm850, %v837, %v839
        %v853 = vsel %vm850, %v839, %v841
        %v854 = vsel %vm850, %v843, %v845
        %v855 = vsel %vm850, %v845, %v847
        %v856 = vsel %vm850, %v847, %v849
        %863 = vst [vmem:[#allocation3 + $0x210] sm:$0xff] %v851
        %864 = vst [vmem:[#allocation3 + $0x218] sm:$0xff] %v852
        %865 = vst [vmem:[#allocation3 + $0x220] sm:$0xff] %v853
        %866 = vst [vmem:[#allocation3 + $0x228] sm:$0xff] %v854
        %867 = vst [vmem:[#allocation3 + $0x230] sm:$0xff] %v855
        %868 = vst [vmem:[#allocation3 + $0x238] sm:$0xff] %v856
        %v869 = vld [vmem:[#allocation2 + $0x8] sm:$0xff]
        %v870 = vld [vmem:[#allocation2 + $0x10] sm:$0xff]
        %v871 = vld [vmem:[#allocation2 + $0x18] sm:$0xff]
        %v872 = vld [vmem:[#allocation2 + $0x20] sm:$0xff]
        %v873 = vld [vmem:[#allocation2 + $0x40] sm:$0xff]
        %v874 = vld [vmem:[#allocation2 + $0x48] sm:$0xff]
        %v875 = vld [vmem:[#allocation2 + $0x50] sm:$0xff]
        %v876 = vld [vmem:[#allocation2 + $0x58] sm:$0xff]
        %885 = vrot.lane.b32.xlu0 %v869, 12
        %v886 = vpop.permute.xlu0 %885
        %887 = vrot.lane.b32.xlu0 %v870, 12
        %v888 = vpop.permute.xlu0 %887
        %889 = vrot.lane.b32.xlu0 %v871, 12
        %v890 = vpop.permute.xlu0 %889
        %891 = vrot.lane.b32.xlu0 %v872, 12
        %v892 = vpop.permute.xlu0 %891
        %893 = vrot.lane.b32.xlu0 %v873, 12
        %v894 = vpop.permute.xlu0 %893
        %895 = vrot.lane.b32.xlu0 %v874, 12
        %v896 = vpop.permute.xlu0 %895
        %897 = vrot.lane.b32.xlu0 %v875, 12
        %v898 = vpop.permute.xlu0 %897
        %899 = vrot.lane.b32.xlu0 %v876, 12
        %v900 = vpop.permute.xlu0 %899
        %vm901 = vcmask 97280
        %v902 = vsel %vm901, %v886, %v888
        %v903 = vsel %vm901, %v888, %v890
        %v904 = vsel %vm901, %v890, %v892
        %v905 = vsel %vm901, %v894, %v896
        %v906 = vsel %vm901, %v896, %v898
        %v907 = vsel %vm901, %v898, %v900
        %914 = vst [vmem:[#allocation3 + $0x240] sm:$0xff] %v902
        %915 = vst [vmem:[#allocation3 + $0x248] sm:$0xff] %v903
        %916 = vst [vmem:[#allocation3 + $0x250] sm:$0xff] %v904
        %917 = vst [vmem:[#allocation3 + $0x258] sm:$0xff] %v905
        %918 = vst [vmem:[#allocation3 + $0x260] sm:$0xff] %v906
        %919 = vst [vmem:[#allocation3 + $0x268] sm:$0xff] %v907
        %v920 = vld [vmem:[#allocation2 + $0x8] sm:$0xff]
        %v921 = vld [vmem:[#allocation2 + $0x10] sm:$0xff]
        %v922 = vld [vmem:[#allocation2 + $0x18] sm:$0xff]
        %v923 = vld [vmem:[#allocation2 + $0x20] sm:$0xff]
        %v924 = vld [vmem:[#allocation2 + $0x40] sm:$0xff]
        %v925 = vld [vmem:[#allocation2 + $0x48] sm:$0xff]
        %v926 = vld [vmem:[#allocation2 + $0x50] sm:$0xff]
        %v927 = vld [vmem:[#allocation2 + $0x58] sm:$0xff]
        %936 = vrot.lane.b32.xlu0 %v920, 11
        %v937 = vpop.permute.xlu0 %936
        %938 = vrot.lane.b32.xlu0 %v921, 11
        %v939 = vpop.permute.xlu0 %938
        %940 = vrot.lane.b32.xlu0 %v922, 11
        %v941 = vpop.permute.xlu0 %940
        %942 = vrot.lane.b32.xlu0 %v923, 11
        %v943 = vpop.permute.xlu0 %942
        %944 = vrot.lane.b32.xlu0 %v924, 11
        %v945 = vpop.permute.xlu0 %944
        %946 = vrot.lane.b32.xlu0 %v925, 11
        %v947 = vpop.permute.xlu0 %946
        %948 = vrot.lane.b32.xlu0 %v926, 11
        %v949 = vpop.permute.xlu0 %948
        %950 = vrot.lane.b32.xlu0 %v927, 11
        %v951 = vpop.permute.xlu0 %950
        %vm952 = vcmask 89088
        %v953 = vsel %vm952, %v937, %v939
        %v954 = vsel %vm952, %v939, %v941
        %v955 = vsel %vm952, %v941, %v943
        %v956 = vsel %vm952, %v945, %v947
        %v957 = vsel %vm952, %v947, %v949
        %v958 = vsel %vm952, %v949, %v951
        %965 = vst [vmem:[#allocation3 + $0x270] sm:$0xff] %v953
        %966 = vst [vmem:[#allocation3 + $0x278] sm:$0xff] %v954
        %967 = vst [vmem:[#allocation3 + $0x280] sm:$0xff] %v955
        %968 = vst [vmem:[#allocation3 + $0x288] sm:$0xff] %v956
        %969 = vst [vmem:[#allocation3 + $0x290] sm:$0xff] %v957
        %970 = vst [vmem:[#allocation3 + $0x298] sm:$0xff] %v958
        %v971 = vld [vmem:[#allocation2 + $0x8] sm:$0xff]
        %v972 = vld [vmem:[#allocation2 + $0x10] sm:$0xff]
        %v973 = vld [vmem:[#allocation2 + $0x18] sm:$0xff]
        %v974 = vld [vmem:[#allocation2 + $0x20] sm:$0xff]
        %v975 = vld [vmem:[#allocation2 + $0x40] sm:$0xff]
        %v976 = vld [vmem:[#allocation2 + $0x48] sm:$0xff]
        %v977 = vld [vmem:[#allocation2 + $0x50] sm:$0xff]
        %v978 = vld [vmem:[#allocation2 + $0x58] sm:$0xff]
        %987 = vrot.lane.b32.xlu0 %v971, 10
        %v988 = vpop.permute.xlu0 %987
        %989 = vrot.lane.b32.xlu0 %v972, 10
        %v990 = vpop.permute.xlu0 %989
        %991 = vrot.lane.b32.xlu0 %v973, 10
        %v992 = vpop.permute.xlu0 %991
        %993 = vrot.lane.b32.xlu0 %v974, 10
        %v994 = vpop.permute.xlu0 %993
        %995 = vrot.lane.b32.xlu0 %v975, 10
        %v996 = vpop.permute.xlu0 %995
        %997 = vrot.lane.b32.xlu0 %v976, 10
        %v998 = vpop.permute.xlu0 %997
        %999 = vrot.lane.b32.xlu0 %v977, 10
        %v1000 = vpop.permute.xlu0 %999
        %1001 = vrot.lane.b32.xlu0 %v978, 10
        %v1002 = vpop.permute.xlu0 %1001
        %vm1003 = vcmask 80896
        %v1004 = vsel %vm1003, %v988, %v990
        %v1005 = vsel %vm1003, %v990, %v992
        %v1006 = vsel %vm1003, %v992, %v994
        %v1007 = vsel %vm1003, %v996, %v998
        %v1008 = vsel %vm1003, %v998, %v1000
        %v1009 = vsel %vm1003, %v1000, %v1002
        %1016 = vst [vmem:[#allocation3 + $0x2a0] sm:$0xff] %v1004
        %1017 = vst [vmem:[#allocation3 + $0x2a8] sm:$0xff] %v1005
        %1018 = vst [vmem:[#allocation3 + $0x2b0] sm:$0xff] %v1006
        %1019 = vst [vmem:[#allocation3 + $0x2b8] sm:$0xff] %v1007
        %1020 = vst [vmem:[#allocation3 + $0x2c0] sm:$0xff] %v1008
        %1021 = vst [vmem:[#allocation3 + $0x2c8] sm:$0xff] %v1009
        %v1022 = vld [vmem:[#allocation2 + $0x8] sm:$0xff]
        %v1023 = vld [vmem:[#allocation2 + $0x10] sm:$0xff]
        %v1024 = vld [vmem:[#allocation2 + $0x18] sm:$0xff]
        %v1025 = vld [vmem:[#allocation2 + $0x20] sm:$0xff]
        %v1026 = vld [vmem:[#allocation2 + $0x40] sm:$0xff]
        %v1027 = vld [vmem:[#allocation2 + $0x48] sm:$0xff]
        %v1028 = vld [vmem:[#allocation2 + $0x50] sm:$0xff]
        %v1029 = vld [vmem:[#allocation2 + $0x58] sm:$0xff]
        %1038 = vrot.lane.b32.xlu0 %v1022, 9
        %v1039 = vpop.permute.xlu0 %1038
        %1040 = vrot.lane.b32.xlu0 %v1023, 9
        %v1041 = vpop.permute.xlu0 %1040
        %1042 = vrot.lane.b32.xlu0 %v1024, 9
        %v1043 = vpop.permute.xlu0 %1042
        %1044 = vrot.lane.b32.xlu0 %v1025, 9
        %v1045 = vpop.permute.xlu0 %1044
        %1046 = vrot.lane.b32.xlu0 %v1026, 9
        %v1047 = vpop.permute.xlu0 %1046
        %1048 = vrot.lane.b32.xlu0 %v1027, 9
        %v1049 = vpop.permute.xlu0 %1048
        %1050 = vrot.lane.b32.xlu0 %v1028, 9
        %v1051 = vpop.permute.xlu0 %1050
        %1052 = vrot.lane.b32.xlu0 %v1029, 9
        %v1053 = vpop.permute.xlu0 %1052
        %vm1054 = vcmask 72704
        %v1055 = vsel %vm1054, %v1039, %v1041
        %v1056 = vsel %vm1054, %v1041, %v1043
        %v1057 = vsel %vm1054, %v1043, %v1045
        %v1058 = vsel %vm1054, %v1047, %v1049
        %v1059 = vsel %vm1054, %v1049, %v1051
        %v1060 = vsel %vm1054, %v1051, %v1053
        %1067 = vst [vmem:[#allocation3 + $0x2d0] sm:$0xff] %v1055
        %1068 = vst [vmem:[#allocation3 + $0x2d8] sm:$0xff] %v1056
        %1069 = vst [vmem:[#allocation3 + $0x2e0] sm:$0xff] %v1057
        %1070 = vst [vmem:[#allocation3 + $0x2e8] sm:$0xff] %v1058
        %1071 = vst [vmem:[#allocation3 + $0x2f0] sm:$0xff] %v1059
        %1072 = vst [vmem:[#allocation3 + $0x2f8] sm:$0xff] %v1060
        %v1073 = vld [vmem:[#allocation2 + $0x8] sm:$0xff]
        %v1074 = vld [vmem:[#allocation2 + $0x10] sm:$0xff]
        %v1075 = vld [vmem:[#allocation2 + $0x18] sm:$0xff]
        %v1076 = vld [vmem:[#allocation2 + $0x20] sm:$0xff]
        %v1077 = vld [vmem:[#allocation2 + $0x40] sm:$0xff]
        %v1078 = vld [vmem:[#allocation2 + $0x48] sm:$0xff]
        %v1079 = vld [vmem:[#allocation2 + $0x50] sm:$0xff]
        %v1080 = vld [vmem:[#allocation2 + $0x58] sm:$0xff]
        %1089 = vrot.lane.b32.xlu0 %v1073, 8
        %v1090 = vpop.permute.xlu0 %1089
        %1091 = vrot.lane.b32.xlu0 %v1074, 8
        %v1092 = vpop.permute.xlu0 %1091
        %1093 = vrot.lane.b32.xlu0 %v1075, 8
        %v1094 = vpop.permute.xlu0 %1093
        %1095 = vrot.lane.b32.xlu0 %v1076, 8
        %v1096 = vpop.permute.xlu0 %1095
        %1097 = vrot.lane.b32.xlu0 %v1077, 8
        %v1098 = vpop.permute.xlu0 %1097
        %1099 = vrot.lane.b32.xlu0 %v1078, 8
        %v1100 = vpop.permute.xlu0 %1099
        %1101 = vrot.lane.b32.xlu0 %v1079, 8
        %v1102 = vpop.permute.xlu0 %1101
        %1103 = vrot.lane.b32.xlu0 %v1080, 8
        %v1104 = vpop.permute.xlu0 %1103
        %vm1105 = vcmask 64512
        %v1106 = vsel %vm1105, %v1090, %v1092
        %v1107 = vsel %vm1105, %v1092, %v1094
        %v1108 = vsel %vm1105, %v1094, %v1096
        %v1109 = vsel %vm1105, %v1098, %v1100
        %v1110 = vsel %vm1105, %v1100, %v1102
        %v1111 = vsel %vm1105, %v1102, %v1104
        %1118 = vst [vmem:[#allocation3 + $0x300] sm:$0xff] %v1106
        %1119 = vst [vmem:[#allocation3 + $0x308] sm:$0xff] %v1107
        %1120 = vst [vmem:[#allocation3 + $0x310] sm:$0xff] %v1108
        %1121 = vst [vmem:[#allocation3 + $0x318] sm:$0xff] %v1109
        %1122 = vst [vmem:[#allocation3 + $0x320] sm:$0xff] %v1110
        %1123 = vst [vmem:[#allocation3 + $0x328] sm:$0xff] %v1111
        %v1124 = vld [vmem:[#allocation2 + $0x8] sm:$0xff]
        %v1125 = vld [vmem:[#allocation2 + $0x10] sm:$0xff]
        %v1126 = vld [vmem:[#allocation2 + $0x18] sm:$0xff]
        %v1127 = vld [vmem:[#allocation2 + $0x20] sm:$0xff]
        %v1128 = vld [vmem:[#allocation2 + $0x40] sm:$0xff]
        %v1129 = vld [vmem:[#allocation2 + $0x48] sm:$0xff]
        %v1130 = vld [vmem:[#allocation2 + $0x50] sm:$0xff]
        %v1131 = vld [vmem:[#allocation2 + $0x58] sm:$0xff]
        %1140 = vrot.lane.b32.xlu0 %v1124, 7
        %v1141 = vpop.permute.xlu0 %1140
        %1142 = vrot.lane.b32.xlu0 %v1125, 7
        %v1143 = vpop.permute.xlu0 %1142
        %1144 = vrot.lane.b32.xlu0 %v1126, 7
        %v1145 = vpop.permute.xlu0 %1144
        %1146 = vrot.lane.b32.xlu0 %v1127, 7
        %v1147 = vpop.permute.xlu0 %1146
        %1148 = vrot.lane.b32.xlu0 %v1128, 7
        %v1149 = vpop.permute.xlu0 %1148
        %1150 = vrot.lane.b32.xlu0 %v1129, 7
        %v1151 = vpop.permute.xlu0 %1150
        %1152 = vrot.lane.b32.xlu0 %v1130, 7
        %v1153 = vpop.permute.xlu0 %1152
        %1154 = vrot.lane.b32.xlu0 %v1131, 7
        %v1155 = vpop.permute.xlu0 %1154
        %vm1156 = vcmask 56320
        %v1157 = vsel %vm1156, %v1141, %v1143
        %v1158 = vsel %vm1156, %v1143, %v1145
        %v1159 = vsel %vm1156, %v1145, %v1147
        %v1160 = vsel %vm1156, %v1149, %v1151
        %v1161 = vsel %vm1156, %v1151, %v1153
        %v1162 = vsel %vm1156, %v1153, %v1155
        %1169 = vst [vmem:[#allocation3 + $0x330] sm:$0xff] %v1157
        %1170 = vst [vmem:[#allocation3 + $0x338] sm:$0xff] %v1158
        %1171 = vst [vmem:[#allocation3 + $0x340] sm:$0xff] %v1159
        %1172 = vst [vmem:[#allocation3 + $0x348] sm:$0xff] %v1160
        %1173 = vst [vmem:[#allocation3 + $0x350] sm:$0xff] %v1161
        %1174 = vst [vmem:[#allocation3 + $0x358] sm:$0xff] %v1162
        %v1175 = vld [vmem:[#allocation2 + $0x8] sm:$0xff]
        %v1176 = vld [vmem:[#allocation2 + $0x10] sm:$0xff]
        %v1177 = vld [vmem:[#allocation2 + $0x18] sm:$0xff]
        %v1178 = vld [vmem:[#allocation2 + $0x20] sm:$0xff]
        %v1179 = vld [vmem:[#allocation2 + $0x40] sm:$0xff]
        %v1180 = vld [vmem:[#allocation2 + $0x48] sm:$0xff]
        %v1181 = vld [vmem:[#allocation2 + $0x50] sm:$0xff]
        %v1182 = vld [vmem:[#allocation2 + $0x58] sm:$0xff]
        %1191 = vrot.lane.b32.xlu0 %v1175, 6
        %v1192 = vpop.permute.xlu0 %1191
        %1193 = vrot.lane.b32.xlu0 %v1176, 6
        %v1194 = vpop.permute.xlu0 %1193
        %1195 = vrot.lane.b32.xlu0 %v1177, 6
        %v1196 = vpop.permute.xlu0 %1195
        %1197 = vrot.lane.b32.xlu0 %v1178, 6
        %v1198 = vpop.permute.xlu0 %1197
        %1199 = vrot.lane.b32.xlu0 %v1179, 6
        %v1200 = vpop.permute.xlu0 %1199
        %1201 = vrot.lane.b32.xlu0 %v1180, 6
        %v1202 = vpop.permute.xlu0 %1201
        %1203 = vrot.lane.b32.xlu0 %v1181, 6
        %v1204 = vpop.permute.xlu0 %1203
        %1205 = vrot.lane.b32.xlu0 %v1182, 6
        %v1206 = vpop.permute.xlu0 %1205
        %vm1207 = vcmask 48128
        %v1208 = vsel %vm1207, %v1192, %v1194
        %v1209 = vsel %vm1207, %v1194, %v1196
        %v1210 = vsel %vm1207, %v1196, %v1198
        %v1211 = vsel %vm1207, %v1200, %v1202
        %v1212 = vsel %vm1207, %v1202, %v1204
        %v1213 = vsel %vm1207, %v1204, %v1206
        %1220 = vst [vmem:[#allocation3 + $0x360] sm:$0xff] %v1208
        %1221 = vst [vmem:[#allocation3 + $0x368] sm:$0xff] %v1209
        %1222 = vst [vmem:[#allocation3 + $0x370] sm:$0xff] %v1210
        %1223 = vst [vmem:[#allocation3 + $0x378] sm:$0xff] %v1211
        %1224 = vst [vmem:[#allocation3 + $0x380] sm:$0xff] %v1212
        %1225 = vst [vmem:[#allocation3 + $0x388] sm:$0xff] %v1213
        %v1226 = vld [vmem:[#allocation2 + $0x8] sm:$0xff]
        %v1227 = vld [vmem:[#allocation2 + $0x10] sm:$0xff]
        %v1228 = vld [vmem:[#allocation2 + $0x18] sm:$0xff]
        %v1229 = vld [vmem:[#allocation2 + $0x20] sm:$0xff]
        %v1230 = vld [vmem:[#allocation2 + $0x40] sm:$0xff]
        %v1231 = vld [vmem:[#allocation2 + $0x48] sm:$0xff]
        %v1232 = vld [vmem:[#allocation2 + $0x50] sm:$0xff]
        %v1233 = vld [vmem:[#allocation2 + $0x58] sm:$0xff]
        %1242 = vrot.lane.b32.xlu0 %v1226, 5
        %v1243 = vpop.permute.xlu0 %1242
        %1244 = vrot.lane.b32.xlu0 %v1227, 5
        %v1245 = vpop.permute.xlu0 %1244
        %1246 = vrot.lane.b32.xlu0 %v1228, 5
        %v1247 = vpop.permute.xlu0 %1246
        %1248 = vrot.lane.b32.xlu0 %v1229, 5
        %v1249 = vpop.permute.xlu0 %1248
        %1250 = vrot.lane.b32.xlu0 %v1230, 5
        %v1251 = vpop.permute.xlu0 %1250
        %1252 = vrot.lane.b32.xlu0 %v1231, 5
        %v1253 = vpop.permute.xlu0 %1252
        %1254 = vrot.lane.b32.xlu0 %v1232, 5
        %v1255 = vpop.permute.xlu0 %1254
        %1256 = vrot.lane.b32.xlu0 %v1233, 5
        %v1257 = vpop.permute.xlu0 %1256
        %vm1258 = vcmask 39936
        %v1259 = vsel %vm1258, %v1243, %v1245
        %v1260 = vsel %vm1258, %v1245, %v1247
        %v1261 = vsel %vm1258, %v1247, %v1249
        %v1262 = vsel %vm1258, %v1251, %v1253
        %v1263 = vsel %vm1258, %v1253, %v1255
        %v1264 = vsel %vm1258, %v1255, %v1257
        %1271 = vst [vmem:[#allocation3 + $0x390] sm:$0xff] %v1259
        %1272 = vst [vmem:[#allocation3 + $0x398] sm:$0xff] %v1260
        %1273 = vst [vmem:[#allocation3 + $0x3a0] sm:$0xff] %v1261
        %1274 = vst [vmem:[#allocation3 + $0x3a8] sm:$0xff] %v1262
        %1275 = vst [vmem:[#allocation3 + $0x3b0] sm:$0xff] %v1263
        %1276 = vst [vmem:[#allocation3 + $0x3b8] sm:$0xff] %v1264
        %v1277 = vld [vmem:[#allocation2 + $0x8] sm:$0xff]
        %v1278 = vld [vmem:[#allocation2 + $0x10] sm:$0xff]
        %v1279 = vld [vmem:[#allocation2 + $0x18] sm:$0xff]
        %v1280 = vld [vmem:[#allocation2 + $0x20] sm:$0xff]
        %v1281 = vld [vmem:[#allocation2 + $0x40] sm:$0xff]
        %v1282 = vld [vmem:[#allocation2 + $0x48] sm:$0xff]
        %v1283 = vld [vmem:[#allocation2 + $0x50] sm:$0xff]
        %v1284 = vld [vmem:[#allocation2 + $0x58] sm:$0xff]
        %1293 = vrot.lane.b32.xlu0 %v1277, 4
        %v1294 = vpop.permute.xlu0 %1293
        %1295 = vrot.lane.b32.xlu0 %v1278, 4
        %v1296 = vpop.permute.xlu0 %1295
        %1297 = vrot.lane.b32.xlu0 %v1279, 4
        %v1298 = vpop.permute.xlu0 %1297
        %1299 = vrot.lane.b32.xlu0 %v1280, 4
        %v1300 = vpop.permute.xlu0 %1299
        %1301 = vrot.lane.b32.xlu0 %v1281, 4
        %v1302 = vpop.permute.xlu0 %1301
        %1303 = vrot.lane.b32.xlu0 %v1282, 4
        %v1304 = vpop.permute.xlu0 %1303
        %1305 = vrot.lane.b32.xlu0 %v1283, 4
        %v1306 = vpop.permute.xlu0 %1305
        %1307 = vrot.lane.b32.xlu0 %v1284, 4
        %v1308 = vpop.permute.xlu0 %1307
        %vm1309 = vcmask 31744
        %v1310 = vsel %vm1309, %v1294, %v1296
        %v1311 = vsel %vm1309, %v1296, %v1298
        %v1312 = vsel %vm1309, %v1298, %v1300
        %v1313 = vsel %vm1309, %v1302, %v1304
        %v1314 = vsel %vm1309, %v1304, %v1306
        %v1315 = vsel %vm1309, %v1306, %v1308
        %1322 = vst [vmem:[#allocation3 + $0x3c0] sm:$0xff] %v1310
        %1323 = vst [vmem:[#allocation3 + $0x3c8] sm:$0xff] %v1311
        %1324 = vst [vmem:[#allocation3 + $0x3d0] sm:$0xff] %v1312
        %1325 = vst [vmem:[#allocation3 + $0x3d8] sm:$0xff] %v1313
        %1326 = vst [vmem:[#allocation3 + $0x3e0] sm:$0xff] %v1314
        %1327 = vst [vmem:[#allocation3 + $0x3e8] sm:$0xff] %v1315
        %v1328 = vld [vmem:[#allocation2 + $0x8] sm:$0xff]
        %v1329 = vld [vmem:[#allocation2 + $0x10] sm:$0xff]
        %v1330 = vld [vmem:[#allocation2 + $0x18] sm:$0xff]
        %v1331 = vld [vmem:[#allocation2 + $0x20] sm:$0xff]
        %v1332 = vld [vmem:[#allocation2 + $0x40] sm:$0xff]
        %v1333 = vld [vmem:[#allocation2 + $0x48] sm:$0xff]
        %v1334 = vld [vmem:[#allocation2 + $0x50] sm:$0xff]
        %v1335 = vld [vmem:[#allocation2 + $0x58] sm:$0xff]
        %1344 = vrot.lane.b32.xlu0 %v1328, 3
        %v1345 = vpop.permute.xlu0 %1344
        %1346 = vrot.lane.b32.xlu0 %v1329, 3
        %v1347 = vpop.permute.xlu0 %1346
        %1348 = vrot.lane.b32.xlu0 %v1330, 3
        %v1349 = vpop.permute.xlu0 %1348
        %1350 = vrot.lane.b32.xlu0 %v1331, 3
        %v1351 = vpop.permute.xlu0 %1350
        %1352 = vrot.lane.b32.xlu0 %v1332, 3
        %v1353 = vpop.permute.xlu0 %1352
        %1354 = vrot.lane.b32.xlu0 %v1333, 3
        %v1355 = vpop.permute.xlu0 %1354
        %1356 = vrot.lane.b32.xlu0 %v1334, 3
        %v1357 = vpop.permute.xlu0 %1356
        %1358 = vrot.lane.b32.xlu0 %v1335, 3
        %v1359 = vpop.permute.xlu0 %1358
        %vm1360 = vcmask 23552
        %v1361 = vsel %vm1360, %v1345, %v1347
        %v1362 = vsel %vm1360, %v1347, %v1349
        %v1363 = vsel %vm1360, %v1349, %v1351
        %v1364 = vsel %vm1360, %v1353, %v1355
        %v1365 = vsel %vm1360, %v1355, %v1357
        %v1366 = vsel %vm1360, %v1357, %v1359
        %1373 = vst [vmem:[#allocation3 + $0x3f0] sm:$0xff] %v1361
        %1374 = vst [vmem:[#allocation3 + $0x3f8] sm:$0xff] %v1362
        %1375 = vst [vmem:[#allocation3 + $0x400] sm:$0xff] %v1363
        %1376 = vst [vmem:[#allocation3 + $0x408] sm:$0xff] %v1364
        %1377 = vst [vmem:[#allocation3 + $0x410] sm:$0xff] %v1365
        %1378 = vst [vmem:[#allocation3 + $0x418] sm:$0xff] %v1366
        %v1379 = vld [vmem:[#allocation2 + $0x8] sm:$0xff]
        %v1380 = vld [vmem:[#allocation2 + $0x10] sm:$0xff]
        %v1381 = vld [vmem:[#allocation2 + $0x18] sm:$0xff]
        %v1382 = vld [vmem:[#allocation2 + $0x20] sm:$0xff]
        %v1383 = vld [vmem:[#allocation2 + $0x40] sm:$0xff]
        %v1384 = vld [vmem:[#allocation2 + $0x48] sm:$0xff]
        %v1385 = vld [vmem:[#allocation2 + $0x50] sm:$0xff]
        %v1386 = vld [vmem:[#allocation2 + $0x58] sm:$0xff]
        %1395 = vrot.lane.b32.xlu0 %v1379, 2
        %v1396 = vpop.permute.xlu0 %1395
        %1397 = vrot.lane.b32.xlu0 %v1380, 2
        %v1398 = vpop.permute.xlu0 %1397
        %1399 = vrot.lane.b32.xlu0 %v1381, 2
        %v1400 = vpop.permute.xlu0 %1399
        %1401 = vrot.lane.b32.xlu0 %v1382, 2
        %v1402 = vpop.permute.xlu0 %1401
        %1403 = vrot.lane.b32.xlu0 %v1383, 2
        %v1404 = vpop.permute.xlu0 %1403
        %1405 = vrot.lane.b32.xlu0 %v1384, 2
        %v1406 = vpop.permute.xlu0 %1405
        %1407 = vrot.lane.b32.xlu0 %v1385, 2
        %v1408 = vpop.permute.xlu0 %1407
        %1409 = vrot.lane.b32.xlu0 %v1386, 2
        %v1410 = vpop.permute.xlu0 %1409
        %vm1411 = vcmask 15360
        %v1412 = vsel %vm1411, %v1396, %v1398
        %v1413 = vsel %vm1411, %v1398, %v1400
        %v1414 = vsel %vm1411, %v1400, %v1402
        %v1415 = vsel %vm1411, %v1404, %v1406
        %v1416 = vsel %vm1411, %v1406, %v1408
        %v1417 = vsel %vm1411, %v1408, %v1410
        %1424 = vst [vmem:[#allocation3 + $0x420] sm:$0xff] %v1412
        %1425 = vst [vmem:[#allocation3 + $0x428] sm:$0xff] %v1413
        %1426 = vst [vmem:[#allocation3 + $0x430] sm:$0xff] %v1414
        %1427 = vst [vmem:[#allocation3 + $0x438] sm:$0xff] %v1415
        %1428 = vst [vmem:[#allocation3 + $0x440] sm:$0xff] %v1416
        %1429 = vst [vmem:[#allocation3 + $0x448] sm:$0xff] %v1417
        %v1430 = vld [vmem:[#allocation2 + $0x8] sm:$0xff]
        %v1431 = vld [vmem:[#allocation2 + $0x10] sm:$0xff]
        %v1432 = vld [vmem:[#allocation2 + $0x18] sm:$0xff]
        %v1433 = vld [vmem:[#allocation2 + $0x20] sm:$0xff]
        %v1434 = vld [vmem:[#allocation2 + $0x40] sm:$0xff]
        %v1435 = vld [vmem:[#allocation2 + $0x48] sm:$0xff]
        %v1436 = vld [vmem:[#allocation2 + $0x50] sm:$0xff]
        %v1437 = vld [vmem:[#allocation2 + $0x58] sm:$0xff]
        %1446 = vrot.lane.b32.xlu0 %v1430, 1
        %v1447 = vpop.permute.xlu0 %1446
        %1448 = vrot.lane.b32.xlu0 %v1431, 1
        %v1449 = vpop.permute.xlu0 %1448
        %1450 = vrot.lane.b32.xlu0 %v1432, 1
        %v1451 = vpop.permute.xlu0 %1450
        %1452 = vrot.lane.b32.xlu0 %v1433, 1
        %v1453 = vpop.permute.xlu0 %1452
        %1454 = vrot.lane.b32.xlu0 %v1434, 1
        %v1455 = vpop.permute.xlu0 %1454
        %1456 = vrot.lane.b32.xlu0 %v1435, 1
        %v1457 = vpop.permute.xlu0 %1456
        %1458 = vrot.lane.b32.xlu0 %v1436, 1
        %v1459 = vpop.permute.xlu0 %1458
        %1460 = vrot.lane.b32.xlu0 %v1437, 1
        %v1461 = vpop.permute.xlu0 %1460
        %vm1462 = vcmask 7168
        %v1463 = vsel %vm1462, %v1447, %v1449
        %v1464 = vsel %vm1462, %v1449, %v1451
        %v1465 = vsel %vm1462, %v1451, %v1453
        %v1466 = vsel %vm1462, %v1455, %v1457
        %v1467 = vsel %vm1462, %v1457, %v1459
        %v1468 = vsel %vm1462, %v1459, %v1461
        %1475 = vst [vmem:[#allocation3 + $0x450] sm:$0xff] %v1463
        %1476 = vst [vmem:[#allocation3 + $0x458] sm:$0xff] %v1464
        %1477 = vst [vmem:[#allocation3 + $0x460] sm:$0xff] %v1465
        %1478 = vst [vmem:[#allocation3 + $0x468] sm:$0xff] %v1466
        %1479 = vst [vmem:[#allocation3 + $0x470] sm:$0xff] %v1467
        %1480 = vst [vmem:[#allocation3 + $0x478] sm:$0xff] %v1468
        %v1481 = vld [vmem:[#allocation2 + $0x10] sm:$0xff]
        %v1482 = vld [vmem:[#allocation2 + $0x18] sm:$0xff]
        %v1483 = vld [vmem:[#allocation2 + $0x20] sm:$0xff]
        %v1484 = vld [vmem:[#allocation2 + $0x48] sm:$0xff]
        %v1485 = vld [vmem:[#allocation2 + $0x50] sm:$0xff]
        %v1486 = vld [vmem:[#allocation2 + $0x58] sm:$0xff]
        %1487 = vst [vmem:[#allocation3 + $0x480] sm:$0xff] %v1481
        %1488 = vst [vmem:[#allocation3 + $0x488] sm:$0xff] %v1482
        %1489 = vst [vmem:[#allocation3 + $0x490] sm:$0xff] %v1483
        %1490 = vst [vmem:[#allocation3 + $0x498] sm:$0xff] %v1484
        %1491 = vst [vmem:[#allocation3 + $0x4a0] sm:$0xff] %v1485
        %1492 = vst [vmem:[#allocation3 + $0x4a8] sm:$0xff] %v1486
        %v1493 = vld [vmem:[#allocation2 + $0x10] sm:$0xff]
        %v1494 = vld [vmem:[#allocation2 + $0x18] sm:$0xff]
        %v1495 = vld [vmem:[#allocation2 + $0x20] sm:$0xff]
        %v1496 = vld [vmem:[#allocation2 + $0x28] sm:$0xff]
        %v1497 = vld [vmem:[#allocation2 + $0x48] sm:$0xff]
        %v1498 = vld [vmem:[#allocation2 + $0x50] sm:$0xff]
        %v1499 = vld [vmem:[#allocation2 + $0x58] sm:$0xff]
        %v1500 = vld [vmem:[#allocation2 + $0x60] sm:$0xff]
        %1509 = vrot.lane.b32.xlu0 %v1493, 127
        %v1510 = vpop.permute.xlu0 %1509
        %1511 = vrot.lane.b32.xlu0 %v1494, 127
        %v1512 = vpop.permute.xlu0 %1511
        %1513 = vrot.lane.b32.xlu0 %v1495, 127
        %v1514 = vpop.permute.xlu0 %1513
        %1515 = vrot.lane.b32.xlu0 %v1496, 127
        %v1516 = vpop.permute.xlu0 %1515
        %1517 = vrot.lane.b32.xlu0 %v1497, 127
        %v1518 = vpop.permute.xlu0 %1517
        %1519 = vrot.lane.b32.xlu0 %v1498, 127
        %v1520 = vpop.permute.xlu0 %1519
        %1521 = vrot.lane.b32.xlu0 %v1499, 127
        %v1522 = vpop.permute.xlu0 %1521
        %1523 = vrot.lane.b32.xlu0 %v1500, 127
        %v1524 = vpop.permute.xlu0 %1523
        %vm1525 = vcmask 1039360
        %v1526 = vsel %vm1525, %v1510, %v1512
        %v1527 = vsel %vm1525, %v1512, %v1514
        %v1528 = vsel %vm1525, %v1514, %v1516
        %v1529 = vsel %vm1525, %v1518, %v1520
        %v1530 = vsel %vm1525, %v1520, %v1522
        %v1531 = vsel %vm1525, %v1522, %v1524
        %1538 = vst [vmem:[#allocation3 + $0x4b0] sm:$0xff] %v1526
        %1539 = vst [vmem:[#allocation3 + $0x4b8] sm:$0xff] %v1527
        %1540 = vst [vmem:[#allocation3 + $0x4c0] sm:$0xff] %v1528
        %1541 = vst [vmem:[#allocation3 + $0x4c8] sm:$0xff] %v1529
        %1542 = vst [vmem:[#allocation3 + $0x4d0] sm:$0xff] %v1530
        %1543 = vst [vmem:[#allocation3 + $0x4d8] sm:$0xff] %v1531
        %v1544 = vld [vmem:[#allocation2 + $0x10] sm:$0xff]
        %v1545 = vld [vmem:[#allocation2 + $0x18] sm:$0xff]
        %v1546 = vld [vmem:[#allocation2 + $0x20] sm:$0xff]
        %v1547 = vld [vmem:[#allocation2 + $0x28] sm:$0xff]
        %v1548 = vld [vmem:[#allocation2 + $0x48] sm:$0xff]
        %v1549 = vld [vmem:[#allocation2 + $0x50] sm:$0xff]
        %v1550 = vld [vmem:[#allocation2 + $0x58] sm:$0xff]
        %v1551 = vld [vmem:[#allocation2 + $0x60] sm:$0xff]
        %1560 = vrot.lane.b32.xlu0 %v1544, 126
        %v1561 = vpop.permute.xlu0 %1560
        %1562 = vrot.lane.b32.xlu0 %v1545, 126
        %v1563 = vpop.permute.xlu0 %1562
        %1564 = vrot.lane.b32.xlu0 %v1546, 126
        %v1565 = vpop.permute.xlu0 %1564
        %1566 = vrot.lane.b32.xlu0 %v1547, 126
        %v1567 = vpop.permute.xlu0 %1566
        %1568 = vrot.lane.b32.xlu0 %v1548, 126
        %v1569 = vpop.permute.xlu0 %1568
        %1570 = vrot.lane.b32.xlu0 %v1549, 126
        %v1571 = vpop.permute.xlu0 %1570
        %1572 = vrot.lane.b32.xlu0 %v1550, 126
        %v1573 = vpop.permute.xlu0 %1572
        %1574 = vrot.lane.b32.xlu0 %v1551, 126
        %v1575 = vpop.permute.xlu0 %1574
        %vm1576 = vcmask 1031168
        %v1577 = vsel %vm1576, %v1561, %v1563
        %v1578 = vsel %vm1576, %v1563, %v1565
        %v1579 = vsel %vm1576, %v1565, %v1567
        %v1580 = vsel %vm1576, %v1569, %v1571
        %v1581 = vsel %vm1576, %v1571, %v1573
        %v1582 = vsel %vm1576, %v1573, %v1575
        %1589 = vst [vmem:[#allocation3 + $0x4e0] sm:$0xff] %v1577
        %1590 = vst [vmem:[#allocation3 + $0x4e8] sm:$0xff] %v1578
        %1591 = vst [vmem:[#allocation3 + $0x4f0] sm:$0xff] %v1579
        %1592 = vst [vmem:[#allocation3 + $0x4f8] sm:$0xff] %v1580
        %1593 = vst [vmem:[#allocation3 + $0x500] sm:$0xff] %v1581
        %1594 = vst [vmem:[#allocation3 + $0x508] sm:$0xff] %v1582
        %v1595 = vld [vmem:[#allocation2 + $0x10] sm:$0xff]
        %v1596 = vld [vmem:[#allocation2 + $0x18] sm:$0xff]
        %v1597 = vld [vmem:[#allocation2 + $0x20] sm:$0xff]
        %v1598 = vld [vmem:[#allocation2 + $0x28] sm:$0xff]
        %v1599 = vld [vmem:[#allocation2 + $0x48] sm:$0xff]
        %v1600 = vld [vmem:[#allocation2 + $0x50] sm:$0xff]
        %v1601 = vld [vmem:[#allocation2 + $0x58] sm:$0xff]
        %v1602 = vld [vmem:[#allocation2 + $0x60] sm:$0xff]
        %1611 = vrot.lane.b32.xlu0 %v1595, 125
        %v1612 = vpop.permute.xlu0 %1611
        %1613 = vrot.lane.b32.xlu0 %v1596, 125
        %v1614 = vpop.permute.xlu0 %1613
        %1615 = vrot.lane.b32.xlu0 %v1597, 125
        %v1616 = vpop.permute.xlu0 %1615
        %1617 = vrot.lane.b32.xlu0 %v1598, 125
        %v1618 = vpop.permute.xlu0 %1617
        %1619 = vrot.lane.b32.xlu0 %v1599, 125
        %v1620 = vpop.permute.xlu0 %1619
        %1621 = vrot.lane.b32.xlu0 %v1600, 125
        %v1622 = vpop.permute.xlu0 %1621
        %1623 = vrot.lane.b32.xlu0 %v1601, 125
        %v1624 = vpop.permute.xlu0 %1623
        %1625 = vrot.lane.b32.xlu0 %v1602, 125
        %v1626 = vpop.permute.xlu0 %1625
        %vm1627 = vcmask 1022976
        %v1628 = vsel %vm1627, %v1612, %v1614
        %v1629 = vsel %vm1627, %v1614, %v1616
        %v1630 = vsel %vm1627, %v1616, %v1618
        %v1631 = vsel %vm1627, %v1620, %v1622
        %v1632 = vsel %vm1627, %v1622, %v1624
        %v1633 = vsel %vm1627, %v1624, %v1626
        %1640 = vst [vmem:[#allocation3 + $0x510] sm:$0xff] %v1628
        %1641 = vst [vmem:[#allocation3 + $0x518] sm:$0xff] %v1629
        %1642 = vst [vmem:[#allocation3 + $0x520] sm:$0xff] %v1630
        %1643 = vst [vmem:[#allocation3 + $0x528] sm:$0xff] %v1631
        %1644 = vst [vmem:[#allocation3 + $0x530] sm:$0xff] %v1632
        %1645 = vst [vmem:[#allocation3 + $0x538] sm:$0xff] %v1633
        %v1646 = vld [vmem:[#allocation2 + $0x10] sm:$0xff]
        %v1647 = vld [vmem:[#allocation2 + $0x18] sm:$0xff]
        %v1648 = vld [vmem:[#allocation2 + $0x20] sm:$0xff]
        %v1649 = vld [vmem:[#allocation2 + $0x28] sm:$0xff]
        %v1650 = vld [vmem:[#allocation2 + $0x48] sm:$0xff]
        %v1651 = vld [vmem:[#allocation2 + $0x50] sm:$0xff]
        %v1652 = vld [vmem:[#allocation2 + $0x58] sm:$0xff]
        %v1653 = vld [vmem:[#allocation2 + $0x60] sm:$0xff]
        %1662 = vrot.lane.b32.xlu0 %v1646, 124
        %v1663 = vpop.permute.xlu0 %1662
        %1664 = vrot.lane.b32.xlu0 %v1647, 124
        %v1665 = vpop.permute.xlu0 %1664
        %1666 = vrot.lane.b32.xlu0 %v1648, 124
        %v1667 = vpop.permute.xlu0 %1666
        %1668 = vrot.lane.b32.xlu0 %v1649, 124
        %v1669 = vpop.permute.xlu0 %1668
        %1670 = vrot.lane.b32.xlu0 %v1650, 124
        %v1671 = vpop.permute.xlu0 %1670
        %1672 = vrot.lane.b32.xlu0 %v1651, 124
        %v1673 = vpop.permute.xlu0 %1672
        %1674 = vrot.lane.b32.xlu0 %v1652, 124
        %v1675 = vpop.permute.xlu0 %1674
        %1676 = vrot.lane.b32.xlu0 %v1653, 124
        %v1677 = vpop.permute.xlu0 %1676
        %vm1678 = vcmask 1014784
        %v1679 = vsel %vm1678, %v1663, %v1665
        %v1680 = vsel %vm1678, %v1665, %v1667
        %v1681 = vsel %vm1678, %v1667, %v1669
        %v1682 = vsel %vm1678, %v1671, %v1673
        %v1683 = vsel %vm1678, %v1673, %v1675
        %v1684 = vsel %vm1678, %v1675, %v1677
        %1691 = vst [vmem:[#allocation3 + $0x540] sm:$0xff] %v1679
        %1692 = vst [vmem:[#allocation3 + $0x548] sm:$0xff] %v1680
        %1693 = vst [vmem:[#allocation3 + $0x550] sm:$0xff] %v1681
        %1694 = vst [vmem:[#allocation3 + $0x558] sm:$0xff] %v1682
        %1695 = vst [vmem:[#allocation3 + $0x560] sm:$0xff] %v1683
        %1696 = vst [vmem:[#allocation3 + $0x568] sm:$0xff] %v1684
        %v1697 = vld [vmem:[#allocation2 + $0x10] sm:$0xff]
        %v1698 = vld [vmem:[#allocation2 + $0x18] sm:$0xff]
        %v1699 = vld [vmem:[#allocation2 + $0x20] sm:$0xff]
        %v1700 = vld [vmem:[#allocation2 + $0x28] sm:$0xff]
        %v1701 = vld [vmem:[#allocation2 + $0x48] sm:$0xff]
        %v1702 = vld [vmem:[#allocation2 + $0x50] sm:$0xff]
        %v1703 = vld [vmem:[#allocation2 + $0x58] sm:$0xff]
        %v1704 = vld [vmem:[#allocation2 + $0x60] sm:$0xff]
        %1713 = vrot.lane.b32.xlu0 %v1697, 123
        %v1714 = vpop.permute.xlu0 %1713
        %1715 = vrot.lane.b32.xlu0 %v1698, 123
        %v1716 = vpop.permute.xlu0 %1715
        %1717 = vrot.lane.b32.xlu0 %v1699, 123
        %v1718 = vpop.permute.xlu0 %1717
        %1719 = vrot.lane.b32.xlu0 %v1700, 123
        %v1720 = vpop.permute.xlu0 %1719
        %1721 = vrot.lane.b32.xlu0 %v1701, 123
        %v1722 = vpop.permute.xlu0 %1721
        %1723 = vrot.lane.b32.xlu0 %v1702, 123
        %v1724 = vpop.permute.xlu0 %1723
        %1725 = vrot.lane.b32.xlu0 %v1703, 123
        %v1726 = vpop.permute.xlu0 %1725
        %1727 = vrot.lane.b32.xlu0 %v1704, 123
        %v1728 = vpop.permute.xlu0 %1727
        %vm1729 = vcmask 1006592
        %v1730 = vsel %vm1729, %v1714, %v1716
        %v1731 = vsel %vm1729, %v1716, %v1718
        %v1732 = vsel %vm1729, %v1718, %v1720
        %v1733 = vsel %vm1729, %v1722, %v1724
        %v1734 = vsel %vm1729, %v1724, %v1726
        %v1735 = vsel %vm1729, %v1726, %v1728
        %1742 = vst [vmem:[#allocation3 + $0x570] sm:$0xff] %v1730
        %1743 = vst [vmem:[#allocation3 + $0x578] sm:$0xff] %v1731
        %1744 = vst [vmem:[#allocation3 + $0x580] sm:$0xff] %v1732
        %1745 = vst [vmem:[#allocation3 + $0x588] sm:$0xff] %v1733
        %1746 = vst [vmem:[#allocation3 + $0x590] sm:$0xff] %v1734
        %1747 = vst [vmem:[#allocation3 + $0x598] sm:$0xff] %v1735
        %v1748 = vld [vmem:[#allocation2 + $0x10] sm:$0xff]
        %v1749 = vld [vmem:[#allocation2 + $0x18] sm:$0xff]
        %v1750 = vld [vmem:[#allocation2 + $0x20] sm:$0xff]
        %v1751 = vld [vmem:[#allocation2 + $0x28] sm:$0xff]
        %v1752 = vld [vmem:[#allocation2 + $0x48] sm:$0xff]
        %v1753 = vld [vmem:[#allocation2 + $0x50] sm:$0xff]
        %v1754 = vld [vmem:[#allocation2 + $0x58] sm:$0xff]
        %v1755 = vld [vmem:[#allocation2 + $0x60] sm:$0xff]
        %1764 = vrot.lane.b32.xlu0 %v1748, 122
        %v1765 = vpop.permute.xlu0 %1764
        %1766 = vrot.lane.b32.xlu0 %v1749, 122
        %v1767 = vpop.permute.xlu0 %1766
        %1768 = vrot.lane.b32.xlu0 %v1750, 122
        %v1769 = vpop.permute.xlu0 %1768
        %1770 = vrot.lane.b32.xlu0 %v1751, 122
        %v1771 = vpop.permute.xlu0 %1770
        %1772 = vrot.lane.b32.xlu0 %v1752, 122
        %v1773 = vpop.permute.xlu0 %1772
        %1774 = vrot.lane.b32.xlu0 %v1753, 122
        %v1775 = vpop.permute.xlu0 %1774
        %1776 = vrot.lane.b32.xlu0 %v1754, 122
        %v1777 = vpop.permute.xlu0 %1776
        %1778 = vrot.lane.b32.xlu0 %v1755, 122
        %v1779 = vpop.permute.xlu0 %1778
        %vm1780 = vcmask 998400
        %v1781 = vsel %vm1780, %v1765, %v1767
        %v1782 = vsel %vm1780, %v1767, %v1769
        %v1783 = vsel %vm1780, %v1769, %v1771
        %v1784 = vsel %vm1780, %v1773, %v1775
        %v1785 = vsel %vm1780, %v1775, %v1777
        %v1786 = vsel %vm1780, %v1777, %v1779
        %1793 = vst [vmem:[#allocation3 + $0x5a0] sm:$0xff] %v1781
        %1794 = vst [vmem:[#allocation3 + $0x5a8] sm:$0xff] %v1782
        %1795 = vst [vmem:[#allocation3 + $0x5b0] sm:$0xff] %v1783
        %1796 = vst [vmem:[#allocation3 + $0x5b8] sm:$0xff] %v1784
        %1797 = vst [vmem:[#allocation3 + $0x5c0] sm:$0xff] %v1785
        %1798 = vst [vmem:[#allocation3 + $0x5c8] sm:$0xff] %v1786
        %v1799 = vld [vmem:[#allocation2 + $0x10] sm:$0xff]
        %v1800 = vld [vmem:[#allocation2 + $0x18] sm:$0xff]
        %v1801 = vld [vmem:[#allocation2 + $0x20] sm:$0xff]
        %v1802 = vld [vmem:[#allocation2 + $0x28] sm:$0xff]
        %v1803 = vld [vmem:[#allocation2 + $0x48] sm:$0xff]
        %v1804 = vld [vmem:[#allocation2 + $0x50] sm:$0xff]
        %v1805 = vld [vmem:[#allocation2 + $0x58] sm:$0xff]
        %v1806 = vld [vmem:[#allocation2 + $0x60] sm:$0xff]
        %1815 = vrot.lane.b32.xlu0 %v1799, 121
        %v1816 = vpop.permute.xlu0 %1815
        %1817 = vrot.lane.b32.xlu0 %v1800, 121
        %v1818 = vpop.permute.xlu0 %1817
        %1819 = vrot.lane.b32.xlu0 %v1801, 121
        %v1820 = vpop.permute.xlu0 %1819
        %1821 = vrot.lane.b32.xlu0 %v1802, 121
        %v1822 = vpop.permute.xlu0 %1821
        %1823 = vrot.lane.b32.xlu0 %v1803, 121
        %v1824 = vpop.permute.xlu0 %1823
        %1825 = vrot.lane.b32.xlu0 %v1804, 121
        %v1826 = vpop.permute.xlu0 %1825
        %1827 = vrot.lane.b32.xlu0 %v1805, 121
        %v1828 = vpop.permute.xlu0 %1827
        %1829 = vrot.lane.b32.xlu0 %v1806, 121
        %v1830 = vpop.permute.xlu0 %1829
        %vm1831 = vcmask 990208
        %v1832 = vsel %vm1831, %v1816, %v1818
        %v1833 = vsel %vm1831, %v1818, %v1820
        %v1834 = vsel %vm1831, %v1820, %v1822
        %v1835 = vsel %vm1831, %v1824, %v1826
        %v1836 = vsel %vm1831, %v1826, %v1828
        %v1837 = vsel %vm1831, %v1828, %v1830
        %1844 = vst [vmem:[#allocation3 + $0x5d0] sm:$0xff] %v1832
        %1845 = vst [vmem:[#allocation3 + $0x5d8] sm:$0xff] %v1833
        %1846 = vst [vmem:[#allocation3 + $0x5e0] sm:$0xff] %v1834
        %1847 = vst [vmem:[#allocation3 + $0x5e8] sm:$0xff] %v1835
        %1848 = vst [vmem:[#allocation3 + $0x5f0] sm:$0xff] %v1836
        %1849 = vst [vmem:[#allocation3 + $0x5f8] sm:$0xff] %v1837
        %v1850 = vld [vmem:[#allocation2 + $0x10] sm:$0xff]
        %v1851 = vld [vmem:[#allocation2 + $0x18] sm:$0xff]
        %v1852 = vld [vmem:[#allocation2 + $0x20] sm:$0xff]
        %v1853 = vld [vmem:[#allocation2 + $0x28] sm:$0xff]
        %v1854 = vld [vmem:[#allocation2 + $0x48] sm:$0xff]
        %v1855 = vld [vmem:[#allocation2 + $0x50] sm:$0xff]
        %v1856 = vld [vmem:[#allocation2 + $0x58] sm:$0xff]
        %v1857 = vld [vmem:[#allocation2 + $0x60] sm:$0xff]
        %1866 = vrot.lane.b32.xlu0 %v1850, 120
        %v1867 = vpop.permute.xlu0 %1866
        %1868 = vrot.lane.b32.xlu0 %v1851, 120
        %v1869 = vpop.permute.xlu0 %1868
        %1870 = vrot.lane.b32.xlu0 %v1852, 120
        %v1871 = vpop.permute.xlu0 %1870
        %1872 = vrot.lane.b32.xlu0 %v1853, 120
        %v1873 = vpop.permute.xlu0 %1872
        %1874 = vrot.lane.b32.xlu0 %v1854, 120
        %v1875 = vpop.permute.xlu0 %1874
        %1876 = vrot.lane.b32.xlu0 %v1855, 120
        %v1877 = vpop.permute.xlu0 %1876
        %1878 = vrot.lane.b32.xlu0 %v1856, 120
        %v1879 = vpop.permute.xlu0 %1878
        %1880 = vrot.lane.b32.xlu0 %v1857, 120
        %v1881 = vpop.permute.xlu0 %1880
        %vm1882 = vcmask 982016
        %v1883 = vsel %vm1882, %v1867, %v1869
        %v1884 = vsel %vm1882, %v1869, %v1871
        %v1885 = vsel %vm1882, %v1871, %v1873
        %v1886 = vsel %vm1882, %v1875, %v1877
        %v1887 = vsel %vm1882, %v1877, %v1879
        %v1888 = vsel %vm1882, %v1879, %v1881
        %1895 = vst [vmem:[#allocation3 + $0x600] sm:$0xff] %v1883
        %1896 = vst [vmem:[#allocation3 + $0x608] sm:$0xff] %v1884
        %1897 = vst [vmem:[#allocation3 + $0x610] sm:$0xff] %v1885
        %1898 = vst [vmem:[#allocation3 + $0x618] sm:$0xff] %v1886
        %1899 = vst [vmem:[#allocation3 + $0x620] sm:$0xff] %v1887
        %1900 = vst [vmem:[#allocation3 + $0x628] sm:$0xff] %v1888
        %v1901 = vld [vmem:[#allocation2 + $0x10] sm:$0xff]
        %v1902 = vld [vmem:[#allocation2 + $0x18] sm:$0xff]
        %v1903 = vld [vmem:[#allocation2 + $0x20] sm:$0xff]
        %v1904 = vld [vmem:[#allocation2 + $0x28] sm:$0xff]
        %v1905 = vld [vmem:[#allocation2 + $0x48] sm:$0xff]
        %v1906 = vld [vmem:[#allocation2 + $0x50] sm:$0xff]
        %v1907 = vld [vmem:[#allocation2 + $0x58] sm:$0xff]
        %v1908 = vld [vmem:[#allocation2 + $0x60] sm:$0xff]
        %1917 = vrot.lane.b32.xlu0 %v1901, 119
        %v1918 = vpop.permute.xlu0 %1917
        %1919 = vrot.lane.b32.xlu0 %v1902, 119
        %v1920 = vpop.permute.xlu0 %1919
        %1921 = vrot.lane.b32.xlu0 %v1903, 119
        %v1922 = vpop.permute.xlu0 %1921
        %1923 = vrot.lane.b32.xlu0 %v1904, 119
        %v1924 = vpop.permute.xlu0 %1923
        %1925 = vrot.lane.b32.xlu0 %v1905, 119
        %v1926 = vpop.permute.xlu0 %1925
        %1927 = vrot.lane.b32.xlu0 %v1906, 119
        %v1928 = vpop.permute.xlu0 %1927
        %1929 = vrot.lane.b32.xlu0 %v1907, 119
        %v1930 = vpop.permute.xlu0 %1929
        %1931 = vrot.lane.b32.xlu0 %v1908, 119
        %v1932 = vpop.permute.xlu0 %1931
        %vm1933 = vcmask 973824
        %v1934 = vsel %vm1933, %v1918, %v1920
        %v1935 = vsel %vm1933, %v1920, %v1922
        %v1936 = vsel %vm1933, %v1922, %v1924
        %v1937 = vsel %vm1933, %v1926, %v1928
        %v1938 = vsel %vm1933, %v1928, %v1930
        %v1939 = vsel %vm1933, %v1930, %v1932
        %1946 = vst [vmem:[#allocation3 + $0x630] sm:$0xff] %v1934
        %1947 = vst [vmem:[#allocation3 + $0x638] sm:$0xff] %v1935
        %1948 = vst [vmem:[#allocation3 + $0x640] sm:$0xff] %v1936
        %1949 = vst [vmem:[#allocation3 + $0x648] sm:$0xff] %v1937
        %1950 = vst [vmem:[#allocation3 + $0x650] sm:$0xff] %v1938
        %1951 = vst [vmem:[#allocation3 + $0x658] sm:$0xff] %v1939
        %v1952 = vld [vmem:[#allocation2 + $0x10] sm:$0xff]
        %v1953 = vld [vmem:[#allocation2 + $0x18] sm:$0xff]
        %v1954 = vld [vmem:[#allocation2 + $0x20] sm:$0xff]
        %v1955 = vld [vmem:[#allocation2 + $0x28] sm:$0xff]
        %v1956 = vld [vmem:[#allocation2 + $0x48] sm:$0xff]
        %v1957 = vld [vmem:[#allocation2 + $0x50] sm:$0xff]
        %v1958 = vld [vmem:[#allocation2 + $0x58] sm:$0xff]
        %v1959 = vld [vmem:[#allocation2 + $0x60] sm:$0xff]
        %1968 = vrot.lane.b32.xlu0 %v1952, 118
        %v1969 = vpop.permute.xlu0 %1968
        %1970 = vrot.lane.b32.xlu0 %v1953, 118
        %v1971 = vpop.permute.xlu0 %1970
        %1972 = vrot.lane.b32.xlu0 %v1954, 118
        %v1973 = vpop.permute.xlu0 %1972
        %1974 = vrot.lane.b32.xlu0 %v1955, 118
        %v1975 = vpop.permute.xlu0 %1974
        %1976 = vrot.lane.b32.xlu0 %v1956, 118
        %v1977 = vpop.permute.xlu0 %1976
        %1978 = vrot.lane.b32.xlu0 %v1957, 118
        %v1979 = vpop.permute.xlu0 %1978
        %1980 = vrot.lane.b32.xlu0 %v1958, 118
        %v1981 = vpop.permute.xlu0 %1980
        %1982 = vrot.lane.b32.xlu0 %v1959, 118
        %v1983 = vpop.permute.xlu0 %1982
        %vm1984 = vcmask 965632
        %v1985 = vsel %vm1984, %v1969, %v1971
        %v1986 = vsel %vm1984, %v1971, %v1973
        %v1987 = vsel %vm1984, %v1973, %v1975
        %v1988 = vsel %vm1984, %v1977, %v1979
        %v1989 = vsel %vm1984, %v1979, %v1981
        %v1990 = vsel %vm1984, %v1981, %v1983
        %1997 = vst [vmem:[#allocation3 + $0x660] sm:$0xff] %v1985
        %1998 = vst [vmem:[#allocation3 + $0x668] sm:$0xff] %v1986
        %1999 = vst [vmem:[#allocation3 + $0x670] sm:$0xff] %v1987
        %2000 = vst [vmem:[#allocation3 + $0x678] sm:$0xff] %v1988
        %2001 = vst [vmem:[#allocation3 + $0x680] sm:$0xff] %v1989
        %2002 = vst [vmem:[#allocation3 + $0x688] sm:$0xff] %v1990
        %v2003 = vld [vmem:[#allocation2 + $0x10] sm:$0xff]
        %v2004 = vld [vmem:[#allocation2 + $0x18] sm:$0xff]
        %v2005 = vld [vmem:[#allocation2 + $0x20] sm:$0xff]
        %v2006 = vld [vmem:[#allocation2 + $0x28] sm:$0xff]
        %v2007 = vld [vmem:[#allocation2 + $0x48] sm:$0xff]
        %v2008 = vld [vmem:[#allocation2 + $0x50] sm:$0xff]
        %v2009 = vld [vmem:[#allocation2 + $0x58] sm:$0xff]
        %v2010 = vld [vmem:[#allocation2 + $0x60] sm:$0xff]
        %2019 = vrot.lane.b32.xlu0 %v2003, 117
        %v2020 = vpop.permute.xlu0 %2019
        %2021 = vrot.lane.b32.xlu0 %v2004, 117
        %v2022 = vpop.permute.xlu0 %2021
        %2023 = vrot.lane.b32.xlu0 %v2005, 117
        %v2024 = vpop.permute.xlu0 %2023
        %2025 = vrot.lane.b32.xlu0 %v2006, 117
        %v2026 = vpop.permute.xlu0 %2025
        %2027 = vrot.lane.b32.xlu0 %v2007, 117
        %v2028 = vpop.permute.xlu0 %2027
        %2029 = vrot.lane.b32.xlu0 %v2008, 117
        %v2030 = vpop.permute.xlu0 %2029
        %2031 = vrot.lane.b32.xlu0 %v2009, 117
        %v2032 = vpop.permute.xlu0 %2031
        %2033 = vrot.lane.b32.xlu0 %v2010, 117
        %v2034 = vpop.permute.xlu0 %2033
        %vm2035 = vcmask 957440
        %v2036 = vsel %vm2035, %v2020, %v2022
        %v2037 = vsel %vm2035, %v2022, %v2024
        %v2038 = vsel %vm2035, %v2024, %v2026
        %v2039 = vsel %vm2035, %v2028, %v2030
        %v2040 = vsel %vm2035, %v2030, %v2032
        %v2041 = vsel %vm2035, %v2032, %v2034
        %2048 = vst [vmem:[#allocation3 + $0x690] sm:$0xff] %v2036
        %2049 = vst [vmem:[#allocation3 + $0x698] sm:$0xff] %v2037
        %2050 = vst [vmem:[#allocation3 + $0x6a0] sm:$0xff] %v2038
        %2051 = vst [vmem:[#allocation3 + $0x6a8] sm:$0xff] %v2039
        %2052 = vst [vmem:[#allocation3 + $0x6b0] sm:$0xff] %v2040
        %2053 = vst [vmem:[#allocation3 + $0x6b8] sm:$0xff] %v2041
        %v2054 = vld [vmem:[#allocation2 + $0x10] sm:$0xff]
        %v2055 = vld [vmem:[#allocation2 + $0x18] sm:$0xff]
        %v2056 = vld [vmem:[#allocation2 + $0x20] sm:$0xff]
        %v2057 = vld [vmem:[#allocation2 + $0x28] sm:$0xff]
        %v2058 = vld [vmem:[#allocation2 + $0x48] sm:$0xff]
        %v2059 = vld [vmem:[#allocation2 + $0x50] sm:$0xff]
        %v2060 = vld [vmem:[#allocation2 + $0x58] sm:$0xff]
        %v2061 = vld [vmem:[#allocation2 + $0x60] sm:$0xff]
        %2070 = vrot.lane.b32.xlu0 %v2054, 116
        %v2071 = vpop.permute.xlu0 %2070
        %2072 = vrot.lane.b32.xlu0 %v2055, 116
        %v2073 = vpop.permute.xlu0 %2072
        %2074 = vrot.lane.b32.xlu0 %v2056, 116
        %v2075 = vpop.permute.xlu0 %2074
        %2076 = vrot.lane.b32.xlu0 %v2057, 116
        %v2077 = vpop.permute.xlu0 %2076
        %2078 = vrot.lane.b32.xlu0 %v2058, 116
        %v2079 = vpop.permute.xlu0 %2078
        %2080 = vrot.lane.b32.xlu0 %v2059, 116
        %v2081 = vpop.permute.xlu0 %2080
        %2082 = vrot.lane.b32.xlu0 %v2060, 116
        %v2083 = vpop.permute.xlu0 %2082
        %2084 = vrot.lane.b32.xlu0 %v2061, 116
        %v2085 = vpop.permute.xlu0 %2084
        %vm2086 = vcmask 949248
        %v2087 = vsel %vm2086, %v2071, %v2073
        %v2088 = vsel %vm2086, %v2073, %v2075
        %v2089 = vsel %vm2086, %v2075, %v2077
        %v2090 = vsel %vm2086, %v2079, %v2081
        %v2091 = vsel %vm2086, %v2081, %v2083
        %v2092 = vsel %vm2086, %v2083, %v2085
        %2099 = vst [vmem:[#allocation3 + $0x6c0] sm:$0xff] %v2087
        %2100 = vst [vmem:[#allocation3 + $0x6c8] sm:$0xff] %v2088
        %2101 = vst [vmem:[#allocation3 + $0x6d0] sm:$0xff] %v2089
        %2102 = vst [vmem:[#allocation3 + $0x6d8] sm:$0xff] %v2090
        %2103 = vst [vmem:[#allocation3 + $0x6e0] sm:$0xff] %v2091
        %2104 = vst [vmem:[#allocation3 + $0x6e8] sm:$0xff] %v2092
        %v2105 = vld [vmem:[#allocation2 + $0x10] sm:$0xff]
        %v2106 = vld [vmem:[#allocation2 + $0x18] sm:$0xff]
        %v2107 = vld [vmem:[#allocation2 + $0x20] sm:$0xff]
        %v2108 = vld [vmem:[#allocation2 + $0x28] sm:$0xff]
        %v2109 = vld [vmem:[#allocation2 + $0x48] sm:$0xff]
        %v2110 = vld [vmem:[#allocation2 + $0x50] sm:$0xff]
        %v2111 = vld [vmem:[#allocation2 + $0x58] sm:$0xff]
        %v2112 = vld [vmem:[#allocation2 + $0x60] sm:$0xff]
        %2121 = vrot.lane.b32.xlu0 %v2105, 115
        %v2122 = vpop.permute.xlu0 %2121
        %2123 = vrot.lane.b32.xlu0 %v2106, 115
        %v2124 = vpop.permute.xlu0 %2123
        %2125 = vrot.lane.b32.xlu0 %v2107, 115
        %v2126 = vpop.permute.xlu0 %2125
        %2127 = vrot.lane.b32.xlu0 %v2108, 115
        %v2128 = vpop.permute.xlu0 %2127
        %2129 = vrot.lane.b32.xlu0 %v2109, 115
        %v2130 = vpop.permute.xlu0 %2129
        %2131 = vrot.lane.b32.xlu0 %v2110, 115
        %v2132 = vpop.permute.xlu0 %2131
        %2133 = vrot.lane.b32.xlu0 %v2111, 115
        %v2134 = vpop.permute.xlu0 %2133
        %2135 = vrot.lane.b32.xlu0 %v2112, 115
        %v2136 = vpop.permute.xlu0 %2135
        %vm2137 = vcmask 941056
        %v2138 = vsel %vm2137, %v2122, %v2124
        %v2139 = vsel %vm2137, %v2124, %v2126
        %v2140 = vsel %vm2137, %v2126, %v2128
        %v2141 = vsel %vm2137, %v2130, %v2132
        %v2142 = vsel %vm2137, %v2132, %v2134
        %v2143 = vsel %vm2137, %v2134, %v2136
        %2150 = vst [vmem:[#allocation3 + $0x6f0] sm:$0xff] %v2138
        %2151 = vst [vmem:[#allocation3 + $0x6f8] sm:$0xff] %v2139
        %2152 = vst [vmem:[#allocation3 + $0x700] sm:$0xff] %v2140
        %2153 = vst [vmem:[#allocation3 + $0x708] sm:$0xff] %v2141
        %2154 = vst [vmem:[#allocation3 + $0x710] sm:$0xff] %v2142
        %2155 = vst [vmem:[#allocation3 + $0x718] sm:$0xff] %v2143
        %v2156 = vld [vmem:[#allocation2 + $0x10] sm:$0xff]
        %v2157 = vld [vmem:[#allocation2 + $0x18] sm:$0xff]
        %v2158 = vld [vmem:[#allocation2 + $0x20] sm:$0xff]
        %v2159 = vld [vmem:[#allocation2 + $0x28] sm:$0xff]
        %v2160 = vld [vmem:[#allocation2 + $0x48] sm:$0xff]
        %v2161 = vld [vmem:[#allocation2 + $0x50] sm:$0xff]
        %v2162 = vld [vmem:[#allocation2 + $0x58] sm:$0xff]
        %v2163 = vld [vmem:[#allocation2 + $0x60] sm:$0xff]
        %2172 = vrot.lane.b32.xlu0 %v2156, 114
        %v2173 = vpop.permute.xlu0 %2172
        %2174 = vrot.lane.b32.xlu0 %v2157, 114
        %v2175 = vpop.permute.xlu0 %2174
        %2176 = vrot.lane.b32.xlu0 %v2158, 114
        %v2177 = vpop.permute.xlu0 %2176
        %2178 = vrot.lane.b32.xlu0 %v2159, 114
        %v2179 = vpop.permute.xlu0 %2178
        %2180 = vrot.lane.b32.xlu0 %v2160, 114
        %v2181 = vpop.permute.xlu0 %2180
        %2182 = vrot.lane.b32.xlu0 %v2161, 114
        %v2183 = vpop.permute.xlu0 %2182
        %2184 = vrot.lane.b32.xlu0 %v2162, 114
        %v2185 = vpop.permute.xlu0 %2184
        %2186 = vrot.lane.b32.xlu0 %v2163, 114
        %v2187 = vpop.permute.xlu0 %2186
        %vm2188 = vcmask 932864
        %v2189 = vsel %vm2188, %v2173, %v2175
        %v2190 = vsel %vm2188, %v2175, %v2177
        %v2191 = vsel %vm2188, %v2177, %v2179
        %v2192 = vsel %vm2188, %v2181, %v2183
        %v2193 = vsel %vm2188, %v2183, %v2185
        %v2194 = vsel %vm2188, %v2185, %v2187
        %2201 = vst [vmem:[#allocation3 + $0x720] sm:$0xff] %v2189
        %2202 = vst [vmem:[#allocation3 + $0x728] sm:$0xff] %v2190
        %2203 = vst [vmem:[#allocation3 + $0x730] sm:$0xff] %v2191
        %2204 = vst [vmem:[#allocation3 + $0x738] sm:$0xff] %v2192
        %2205 = vst [vmem:[#allocation3 + $0x740] sm:$0xff] %v2193
        %2206 = vst [vmem:[#allocation3 + $0x748] sm:$0xff] %v2194
        %v2207 = vld [vmem:[#allocation2 + $0x10] sm:$0xff]
        %v2208 = vld [vmem:[#allocation2 + $0x18] sm:$0xff]
        %v2209 = vld [vmem:[#allocation2 + $0x20] sm:$0xff]
        %v2210 = vld [vmem:[#allocation2 + $0x28] sm:$0xff]
        %v2211 = vld [vmem:[#allocation2 + $0x48] sm:$0xff]
        %v2212 = vld [vmem:[#allocation2 + $0x50] sm:$0xff]
        %v2213 = vld [vmem:[#allocation2 + $0x58] sm:$0xff]
        %v2214 = vld [vmem:[#allocation2 + $0x60] sm:$0xff]
        %2223 = vrot.lane.b32.xlu0 %v2207, 113
        %v2224 = vpop.permute.xlu0 %2223
        %2225 = vrot.lane.b32.xlu0 %v2208, 113
        %v2226 = vpop.permute.xlu0 %2225
        %2227 = vrot.lane.b32.xlu0 %v2209, 113
        %v2228 = vpop.permute.xlu0 %2227
        %2229 = vrot.lane.b32.xlu0 %v2210, 113
        %v2230 = vpop.permute.xlu0 %2229
        %2231 = vrot.lane.b32.xlu0 %v2211, 113
        %v2232 = vpop.permute.xlu0 %2231
        %2233 = vrot.lane.b32.xlu0 %v2212, 113
        %v2234 = vpop.permute.xlu0 %2233
        %2235 = vrot.lane.b32.xlu0 %v2213, 113
        %v2236 = vpop.permute.xlu0 %2235
        %2237 = vrot.lane.b32.xlu0 %v2214, 113
        %v2238 = vpop.permute.xlu0 %2237
        %vm2239 = vcmask 924672
        %v2240 = vsel %vm2239, %v2224, %v2226
        %v2241 = vsel %vm2239, %v2226, %v2228
        %v2242 = vsel %vm2239, %v2228, %v2230
        %v2243 = vsel %vm2239, %v2232, %v2234
        %v2244 = vsel %vm2239, %v2234, %v2236
        %v2245 = vsel %vm2239, %v2236, %v2238
        %2252 = vst [vmem:[#allocation3 + $0x750] sm:$0xff] %v2240
        %2253 = vst [vmem:[#allocation3 + $0x758] sm:$0xff] %v2241
        %2254 = vst [vmem:[#allocation3 + $0x760] sm:$0xff] %v2242
        %2255 = vst [vmem:[#allocation3 + $0x768] sm:$0xff] %v2243
        %2256 = vst [vmem:[#allocation3 + $0x770] sm:$0xff] %v2244
        %2257 = vst [vmem:[#allocation3 + $0x778] sm:$0xff] %v2245
        %v2258 = vld [vmem:[#allocation2 + $0x10] sm:$0xff]
        %v2259 = vld [vmem:[#allocation2 + $0x18] sm:$0xff]
        %v2260 = vld [vmem:[#allocation2 + $0x20] sm:$0xff]
        %v2261 = vld [vmem:[#allocation2 + $0x28] sm:$0xff]
        %v2262 = vld [vmem:[#allocation2 + $0x48] sm:$0xff]
        %v2263 = vld [vmem:[#allocation2 + $0x50] sm:$0xff]
        %v2264 = vld [vmem:[#allocation2 + $0x58] sm:$0xff]
        %v2265 = vld [vmem:[#allocation2 + $0x60] sm:$0xff]
        %2274 = vrot.lane.b32.xlu0 %v2258, 112
        %v2275 = vpop.permute.xlu0 %2274
        %2276 = vrot.lane.b32.xlu0 %v2259, 112
        %v2277 = vpop.permute.xlu0 %2276
        %2278 = vrot.lane.b32.xlu0 %v2260, 112
        %v2279 = vpop.permute.xlu0 %2278
        %2280 = vrot.lane.b32.xlu0 %v2261, 112
        %v2281 = vpop.permute.xlu0 %2280
        %2282 = vrot.lane.b32.xlu0 %v2262, 112
        %v2283 = vpop.permute.xlu0 %2282
        %2284 = vrot.lane.b32.xlu0 %v2263, 112
        %v2285 = vpop.permute.xlu0 %2284
        %2286 = vrot.lane.b32.xlu0 %v2264, 112
        %v2287 = vpop.permute.xlu0 %2286
        %2288 = vrot.lane.b32.xlu0 %v2265, 112
        %v2289 = vpop.permute.xlu0 %2288
        %vm2290 = vcmask 916480
        %v2291 = vsel %vm2290, %v2275, %v2277
        %v2292 = vsel %vm2290, %v2277, %v2279
        %v2293 = vsel %vm2290, %v2279, %v2281
        %v2294 = vsel %vm2290, %v2283, %v2285
        %v2295 = vsel %vm2290, %v2285, %v2287
        %v2296 = vsel %vm2290, %v2287, %v2289
        %2303 = vst [vmem:[#allocation3 + $0x780] sm:$0xff] %v2291
        %2304 = vst [vmem:[#allocation3 + $0x788] sm:$0xff] %v2292
        %2305 = vst [vmem:[#allocation3 + $0x790] sm:$0xff] %v2293
        %2306 = vst [vmem:[#allocation3 + $0x798] sm:$0xff] %v2294
        %2307 = vst [vmem:[#allocation3 + $0x7a0] sm:$0xff] %v2295
        %2308 = vst [vmem:[#allocation3 + $0x7a8] sm:$0xff] %v2296
        %v2309 = vld [vmem:[#allocation2 + $0x10] sm:$0xff]
        %v2310 = vld [vmem:[#allocation2 + $0x18] sm:$0xff]
        %v2311 = vld [vmem:[#allocation2 + $0x20] sm:$0xff]
        %v2312 = vld [vmem:[#allocation2 + $0x28] sm:$0xff]
        %v2313 = vld [vmem:[#allocation2 + $0x48] sm:$0xff]
        %v2314 = vld [vmem:[#allocation2 + $0x50] sm:$0xff]
        %v2315 = vld [vmem:[#allocation2 + $0x58] sm:$0xff]
        %v2316 = vld [vmem:[#allocation2 + $0x60] sm:$0xff]
        %2325 = vrot.lane.b32.xlu0 %v2309, 111
        %v2326 = vpop.permute.xlu0 %2325
        %2327 = vrot.lane.b32.xlu0 %v2310, 111
        %v2328 = vpop.permute.xlu0 %2327
        %2329 = vrot.lane.b32.xlu0 %v2311, 111
        %v2330 = vpop.permute.xlu0 %2329
        %2331 = vrot.lane.b32.xlu0 %v2312, 111
        %v2332 = vpop.permute.xlu0 %2331
        %2333 = vrot.lane.b32.xlu0 %v2313, 111
        %v2334 = vpop.permute.xlu0 %2333
        %2335 = vrot.lane.b32.xlu0 %v2314, 111
        %v2336 = vpop.permute.xlu0 %2335
        %2337 = vrot.lane.b32.xlu0 %v2315, 111
        %v2338 = vpop.permute.xlu0 %2337
        %2339 = vrot.lane.b32.xlu0 %v2316, 111
        %v2340 = vpop.permute.xlu0 %2339
        %vm2341 = vcmask 908288
        %v2342 = vsel %vm2341, %v2326, %v2328
        %v2343 = vsel %vm2341, %v2328, %v2330
        %v2344 = vsel %vm2341, %v2330, %v2332
        %v2345 = vsel %vm2341, %v2334, %v2336
        %v2346 = vsel %vm2341, %v2336, %v2338
        %v2347 = vsel %vm2341, %v2338, %v2340
        %2354 = vst [vmem:[#allocation3 + $0x7b0] sm:$0xff] %v2342
        %2355 = vst [vmem:[#allocation3 + $0x7b8] sm:$0xff] %v2343
        %2356 = vst [vmem:[#allocation3 + $0x7c0] sm:$0xff] %v2344
        %2357 = vst [vmem:[#allocation3 + $0x7c8] sm:$0xff] %v2345
        %2358 = vst [vmem:[#allocation3 + $0x7d0] sm:$0xff] %v2346
        %2359 = vst [vmem:[#allocation3 + $0x7d8] sm:$0xff] %v2347
        %v2360 = vld [vmem:[#allocation2 + $0x10] sm:$0xff]
        %v2361 = vld [vmem:[#allocation2 + $0x18] sm:$0xff]
        %v2362 = vld [vmem:[#allocation2 + $0x20] sm:$0xff]
        %v2363 = vld [vmem:[#allocation2 + $0x28] sm:$0xff]
        %v2364 = vld [vmem:[#allocation2 + $0x48] sm:$0xff]
        %v2365 = vld [vmem:[#allocation2 + $0x50] sm:$0xff]
        %v2366 = vld [vmem:[#allocation2 + $0x58] sm:$0xff]
        %v2367 = vld [vmem:[#allocation2 + $0x60] sm:$0xff]
        %2376 = vrot.lane.b32.xlu0 %v2360, 110
        %v2377 = vpop.permute.xlu0 %2376
        %2378 = vrot.lane.b32.xlu0 %v2361, 110
        %v2379 = vpop.permute.xlu0 %2378
        %2380 = vrot.lane.b32.xlu0 %v2362, 110
        %v2381 = vpop.permute.xlu0 %2380
        %2382 = vrot.lane.b32.xlu0 %v2363, 110
        %v2383 = vpop.permute.xlu0 %2382
        %2384 = vrot.lane.b32.xlu0 %v2364, 110
        %v2385 = vpop.permute.xlu0 %2384
        %2386 = vrot.lane.b32.xlu0 %v2365, 110
        %v2387 = vpop.permute.xlu0 %2386
        %2388 = vrot.lane.b32.xlu0 %v2366, 110
        %v2389 = vpop.permute.xlu0 %2388
        %2390 = vrot.lane.b32.xlu0 %v2367, 110
        %v2391 = vpop.permute.xlu0 %2390
        %vm2392 = vcmask 900096
        %v2393 = vsel %vm2392, %v2377, %v2379
        %v2394 = vsel %vm2392, %v2379, %v2381
        %v2395 = vsel %vm2392, %v2381, %v2383
        %v2396 = vsel %vm2392, %v2385, %v2387
        %v2397 = vsel %vm2392, %v2387, %v2389
        %v2398 = vsel %vm2392, %v2389, %v2391
        %2405 = vst [vmem:[#allocation3 + $0x7e0] sm:$0xff] %v2393
        %2406 = vst [vmem:[#allocation3 + $0x7e8] sm:$0xff] %v2394
        %2407 = vst [vmem:[#allocation3 + $0x7f0] sm:$0xff] %v2395
        %2408 = vst [vmem:[#allocation3 + $0x7f8] sm:$0xff] %v2396
        %2409 = vst [vmem:[#allocation3 + $0x800] sm:$0xff] %v2397
        %2410 = vst [vmem:[#allocation3 + $0x808] sm:$0xff] %v2398
        %v2411 = vld [vmem:[#allocation2 + $0x10] sm:$0xff]
        %v2412 = vld [vmem:[#allocation2 + $0x18] sm:$0xff]
        %v2413 = vld [vmem:[#allocation2 + $0x20] sm:$0xff]
        %v2414 = vld [vmem:[#allocation2 + $0x28] sm:$0xff]
        %v2415 = vld [vmem:[#allocation2 + $0x48] sm:$0xff]
        %v2416 = vld [vmem:[#allocation2 + $0x50] sm:$0xff]
        %v2417 = vld [vmem:[#allocation2 + $0x58] sm:$0xff]
        %v2418 = vld [vmem:[#allocation2 + $0x60] sm:$0xff]
        %2427 = vrot.lane.b32.xlu0 %v2411, 109
        %v2428 = vpop.permute.xlu0 %2427
        %2429 = vrot.lane.b32.xlu0 %v2412, 109
        %v2430 = vpop.permute.xlu0 %2429
        %2431 = vrot.lane.b32.xlu0 %v2413, 109
        %v2432 = vpop.permute.xlu0 %2431
        %2433 = vrot.lane.b32.xlu0 %v2414, 109
        %v2434 = vpop.permute.xlu0 %2433
        %2435 = vrot.lane.b32.xlu0 %v2415, 109
        %v2436 = vpop.permute.xlu0 %2435
        %2437 = vrot.lane.b32.xlu0 %v2416, 109
        %v2438 = vpop.permute.xlu0 %2437
        %2439 = vrot.lane.b32.xlu0 %v2417, 109
        %v2440 = vpop.permute.xlu0 %2439
        %2441 = vrot.lane.b32.xlu0 %v2418, 109
        %v2442 = vpop.permute.xlu0 %2441
        %vm2443 = vcmask 891904
        %v2444 = vsel %vm2443, %v2428, %v2430
        %v2445 = vsel %vm2443, %v2430, %v2432
        %v2446 = vsel %vm2443, %v2432, %v2434
        %v2447 = vsel %vm2443, %v2436, %v2438
        %v2448 = vsel %vm2443, %v2438, %v2440
        %v2449 = vsel %vm2443, %v2440, %v2442
        %2456 = vst [vmem:[#allocation3 + $0x810] sm:$0xff] %v2444
        %2457 = vst [vmem:[#allocation3 + $0x818] sm:$0xff] %v2445
        %2458 = vst [vmem:[#allocation3 + $0x820] sm:$0xff] %v2446
        %2459 = vst [vmem:[#allocation3 + $0x828] sm:$0xff] %v2447
        %2460 = vst [vmem:[#allocation3 + $0x830] sm:$0xff] %v2448
        %2461 = vst [vmem:[#allocation3 + $0x838] sm:$0xff] %v2449
        %v2462 = vld [vmem:[#allocation2 + $0x10] sm:$0xff]
        %v2463 = vld [vmem:[#allocation2 + $0x18] sm:$0xff]
        %v2464 = vld [vmem:[#allocation2 + $0x20] sm:$0xff]
        %v2465 = vld [vmem:[#allocation2 + $0x28] sm:$0xff]
        %v2466 = vld [vmem:[#allocation2 + $0x48] sm:$0xff]
        %v2467 = vld [vmem:[#allocation2 + $0x50] sm:$0xff]
        %v2468 = vld [vmem:[#allocation2 + $0x58] sm:$0xff]
        %v2469 = vld [vmem:[#allocation2 + $0x60] sm:$0xff]
        %2478 = vrot.lane.b32.xlu0 %v2462, 108
        %v2479 = vpop.permute.xlu0 %2478
        %2480 = vrot.lane.b32.xlu0 %v2463, 108
        %v2481 = vpop.permute.xlu0 %2480
        %2482 = vrot.lane.b32.xlu0 %v2464, 108
        %v2483 = vpop.permute.xlu0 %2482
        %2484 = vrot.lane.b32.xlu0 %v2465, 108
        %v2485 = vpop.permute.xlu0 %2484
        %2486 = vrot.lane.b32.xlu0 %v2466, 108
        %v2487 = vpop.permute.xlu0 %2486
        %2488 = vrot.lane.b32.xlu0 %v2467, 108
        %v2489 = vpop.permute.xlu0 %2488
        %2490 = vrot.lane.b32.xlu0 %v2468, 108
        %v2491 = vpop.permute.xlu0 %2490
        %2492 = vrot.lane.b32.xlu0 %v2469, 108
        %v2493 = vpop.permute.xlu0 %2492
        %vm2494 = vcmask 883712
        %v2495 = vsel %vm2494, %v2479, %v2481
        %v2496 = vsel %vm2494, %v2481, %v2483
        %v2497 = vsel %vm2494, %v2483, %v2485
        %v2498 = vsel %vm2494, %v2487, %v2489
        %v2499 = vsel %vm2494, %v2489, %v2491
        %v2500 = vsel %vm2494, %v2491, %v2493
        %2507 = vst [vmem:[#allocation3 + $0x840] sm:$0xff] %v2495
        %2508 = vst [vmem:[#allocation3 + $0x848] sm:$0xff] %v2496
        %2509 = vst [vmem:[#allocation3 + $0x850] sm:$0xff] %v2497
        %2510 = vst [vmem:[#allocation3 + $0x858] sm:$0xff] %v2498
        %2511 = vst [vmem:[#allocation3 + $0x860] sm:$0xff] %v2499
        %2512 = vst [vmem:[#allocation3 + $0x868] sm:$0xff] %v2500
        %v2513 = vld [vmem:[#allocation2 + $0x10] sm:$0xff]
        %v2514 = vld [vmem:[#allocation2 + $0x18] sm:$0xff]
        %v2515 = vld [vmem:[#allocation2 + $0x20] sm:$0xff]
        %v2516 = vld [vmem:[#allocation2 + $0x28] sm:$0xff]
        %v2517 = vld [vmem:[#allocation2 + $0x48] sm:$0xff]
        %v2518 = vld [vmem:[#allocation2 + $0x50] sm:$0xff]
        %v2519 = vld [vmem:[#allocation2 + $0x58] sm:$0xff]
        %v2520 = vld [vmem:[#allocation2 + $0x60] sm:$0xff]
        %2529 = vrot.lane.b32.xlu0 %v2513, 107
        %v2530 = vpop.permute.xlu0 %2529
        %2531 = vrot.lane.b32.xlu0 %v2514, 107
        %v2532 = vpop.permute.xlu0 %2531
        %2533 = vrot.lane.b32.xlu0 %v2515, 107
        %v2534 = vpop.permute.xlu0 %2533
        %2535 = vrot.lane.b32.xlu0 %v2516, 107
        %v2536 = vpop.permute.xlu0 %2535
        %2537 = vrot.lane.b32.xlu0 %v2517, 107
        %v2538 = vpop.permute.xlu0 %2537
        %2539 = vrot.lane.b32.xlu0 %v2518, 107
        %v2540 = vpop.permute.xlu0 %2539
        %2541 = vrot.lane.b32.xlu0 %v2519, 107
        %v2542 = vpop.permute.xlu0 %2541
        %2543 = vrot.lane.b32.xlu0 %v2520, 107
        %v2544 = vpop.permute.xlu0 %2543
        %vm2545 = vcmask 875520
        %v2546 = vsel %vm2545, %v2530, %v2532
        %v2547 = vsel %vm2545, %v2532, %v2534
        %v2548 = vsel %vm2545, %v2534, %v2536
        %v2549 = vsel %vm2545, %v2538, %v2540
        %v2550 = vsel %vm2545, %v2540, %v2542
        %v2551 = vsel %vm2545, %v2542, %v2544
        %2558 = vst [vmem:[#allocation3 + $0x870] sm:$0xff] %v2546
        %2559 = vst [vmem:[#allocation3 + $0x878] sm:$0xff] %v2547
        %2560 = vst [vmem:[#allocation3 + $0x880] sm:$0xff] %v2548
        %2561 = vst [vmem:[#allocation3 + $0x888] sm:$0xff] %v2549
        %2562 = vst [vmem:[#allocation3 + $0x890] sm:$0xff] %v2550
        %2563 = vst [vmem:[#allocation3 + $0x898] sm:$0xff] %v2551
        %v2564 = vld [vmem:[#allocation2 + $0x10] sm:$0xff]
        %v2565 = vld [vmem:[#allocation2 + $0x18] sm:$0xff]
        %v2566 = vld [vmem:[#allocation2 + $0x20] sm:$0xff]
        %v2567 = vld [vmem:[#allocation2 + $0x28] sm:$0xff]
        %v2568 = vld [vmem:[#allocation2 + $0x48] sm:$0xff]
        %v2569 = vld [vmem:[#allocation2 + $0x50] sm:$0xff]
        %v2570 = vld [vmem:[#allocation2 + $0x58] sm:$0xff]
        %v2571 = vld [vmem:[#allocation2 + $0x60] sm:$0xff]
        %2580 = vrot.lane.b32.xlu0 %v2564, 106
        %v2581 = vpop.permute.xlu0 %2580
        %2582 = vrot.lane.b32.xlu0 %v2565, 106
        %v2583 = vpop.permute.xlu0 %2582
        %2584 = vrot.lane.b32.xlu0 %v2566, 106
        %v2585 = vpop.permute.xlu0 %2584
        %2586 = vrot.lane.b32.xlu0 %v2567, 106
        %v2587 = vpop.permute.xlu0 %2586
        %2588 = vrot.lane.b32.xlu0 %v2568, 106
        %v2589 = vpop.permute.xlu0 %2588
        %2590 = vrot.lane.b32.xlu0 %v2569, 106
        %v2591 = vpop.permute.xlu0 %2590
        %2592 = vrot.lane.b32.xlu0 %v2570, 106
        %v2593 = vpop.permute.xlu0 %2592
        %2594 = vrot.lane.b32.xlu0 %v2571, 106
        %v2595 = vpop.permute.xlu0 %2594
        %vm2596 = vcmask 867328
        %v2597 = vsel %vm2596, %v2581, %v2583
        %v2598 = vsel %vm2596, %v2583, %v2585
        %v2599 = vsel %vm2596, %v2585, %v2587
        %v2600 = vsel %vm2596, %v2589, %v2591
        %v2601 = vsel %vm2596, %v2591, %v2593
        %v2602 = vsel %vm2596, %v2593, %v2595
        %2609 = vst [vmem:[#allocation3 + $0x8a0] sm:$0xff] %v2597
        %2610 = vst [vmem:[#allocation3 + $0x8a8] sm:$0xff] %v2598
        %2611 = vst [vmem:[#allocation3 + $0x8b0] sm:$0xff] %v2599
        %2612 = vst [vmem:[#allocation3 + $0x8b8] sm:$0xff] %v2600
        %2613 = vst [vmem:[#allocation3 + $0x8c0] sm:$0xff] %v2601
        %2614 = vst [vmem:[#allocation3 + $0x8c8] sm:$0xff] %v2602
        %v2615 = vld [vmem:[#allocation2 + $0x10] sm:$0xff]
        %v2616 = vld [vmem:[#allocation2 + $0x18] sm:$0xff]
        %v2617 = vld [vmem:[#allocation2 + $0x20] sm:$0xff]
        %v2618 = vld [vmem:[#allocation2 + $0x28] sm:$0xff]
        %v2619 = vld [vmem:[#allocation2 + $0x48] sm:$0xff]
        %v2620 = vld [vmem:[#allocation2 + $0x50] sm:$0xff]
        %v2621 = vld [vmem:[#allocation2 + $0x58] sm:$0xff]
        %v2622 = vld [vmem:[#allocation2 + $0x60] sm:$0xff]
        %2631 = vrot.lane.b32.xlu0 %v2615, 105
        %v2632 = vpop.permute.xlu0 %2631
        %2633 = vrot.lane.b32.xlu0 %v2616, 105
        %v2634 = vpop.permute.xlu0 %2633
        %2635 = vrot.lane.b32.xlu0 %v2617, 105
        %v2636 = vpop.permute.xlu0 %2635
        %2637 = vrot.lane.b32.xlu0 %v2618, 105
        %v2638 = vpop.permute.xlu0 %2637
        %2639 = vrot.lane.b32.xlu0 %v2619, 105
        %v2640 = vpop.permute.xlu0 %2639
        %2641 = vrot.lane.b32.xlu0 %v2620, 105
        %v2642 = vpop.permute.xlu0 %2641
        %2643 = vrot.lane.b32.xlu0 %v2621, 105
        %v2644 = vpop.permute.xlu0 %2643
        %2645 = vrot.lane.b32.xlu0 %v2622, 105
        %v2646 = vpop.permute.xlu0 %2645
        %vm2647 = vcmask 859136
        %v2648 = vsel %vm2647, %v2632, %v2634
        %v2649 = vsel %vm2647, %v2634, %v2636
        %v2650 = vsel %vm2647, %v2636, %v2638
        %v2651 = vsel %vm2647, %v2640, %v2642
        %v2652 = vsel %vm2647, %v2642, %v2644
        %v2653 = vsel %vm2647, %v2644, %v2646
        %2660 = vst [vmem:[#allocation3 + $0x8d0] sm:$0xff] %v2648
        %2661 = vst [vmem:[#allocation3 + $0x8d8] sm:$0xff] %v2649
        %2662 = vst [vmem:[#allocation3 + $0x8e0] sm:$0xff] %v2650
        %2663 = vst [vmem:[#allocation3 + $0x8e8] sm:$0xff] %v2651
        %2664 = vst [vmem:[#allocation3 + $0x8f0] sm:$0xff] %v2652
        %2665 = vst [vmem:[#allocation3 + $0x8f8] sm:$0xff] %v2653
        %v2666 = vld [vmem:[#allocation2 + $0x10] sm:$0xff]
        %v2667 = vld [vmem:[#allocation2 + $0x18] sm:$0xff]
        %v2668 = vld [vmem:[#allocation2 + $0x20] sm:$0xff]
        %v2669 = vld [vmem:[#allocation2 + $0x28] sm:$0xff]
        %v2670 = vld [vmem:[#allocation2 + $0x48] sm:$0xff]
        %v2671 = vld [vmem:[#allocation2 + $0x50] sm:$0xff]
        %v2672 = vld [vmem:[#allocation2 + $0x58] sm:$0xff]
        %v2673 = vld [vmem:[#allocation2 + $0x60] sm:$0xff]
        %2682 = vrot.lane.b32.xlu0 %v2666, 104
        %v2683 = vpop.permute.xlu0 %2682
        %2684 = vrot.lane.b32.xlu0 %v2667, 104
        %v2685 = vpop.permute.xlu0 %2684
        %2686 = vrot.lane.b32.xlu0 %v2668, 104
        %v2687 = vpop.permute.xlu0 %2686
        %2688 = vrot.lane.b32.xlu0 %v2669, 104
        %v2689 = vpop.permute.xlu0 %2688
        %2690 = vrot.lane.b32.xlu0 %v2670, 104
        %v2691 = vpop.permute.xlu0 %2690
        %2692 = vrot.lane.b32.xlu0 %v2671, 104
        %v2693 = vpop.permute.xlu0 %2692
        %2694 = vrot.lane.b32.xlu0 %v2672, 104
        %v2695 = vpop.permute.xlu0 %2694
        %2696 = vrot.lane.b32.xlu0 %v2673, 104
        %v2697 = vpop.permute.xlu0 %2696
        %vm2698 = vcmask 850944
        %v2699 = vsel %vm2698, %v2683, %v2685
        %v2700 = vsel %vm2698, %v2685, %v2687
        %v2701 = vsel %vm2698, %v2687, %v2689
        %v2702 = vsel %vm2698, %v2691, %v2693
        %v2703 = vsel %vm2698, %v2693, %v2695
        %v2704 = vsel %vm2698, %v2695, %v2697
        %2711 = vst [vmem:[#allocation3 + $0x900] sm:$0xff] %v2699
        %2712 = vst [vmem:[#allocation3 + $0x908] sm:$0xff] %v2700
        %2713 = vst [vmem:[#allocation3 + $0x910] sm:$0xff] %v2701
        %2714 = vst [vmem:[#allocation3 + $0x918] sm:$0xff] %v2702
        %2715 = vst [vmem:[#allocation3 + $0x920] sm:$0xff] %v2703
        %2716 = vst [vmem:[#allocation3 + $0x928] sm:$0xff] %v2704
        %v2717 = vld [vmem:[#allocation2] sm:$0xff]
        %v2718 = vld [vmem:[#allocation2 + $0x8] sm:$0xff]
        %v2719 = vld [vmem:[#allocation2 + $0x10] sm:$0xff]
        %v2720 = vld [vmem:[#allocation2 + $0x18] sm:$0xff]
        %v2721 = vld [vmem:[#allocation2 + $0x38] sm:$0xff]
        %v2722 = vld [vmem:[#allocation2 + $0x40] sm:$0xff]
        %v2723 = vld [vmem:[#allocation2 + $0x48] sm:$0xff]
        %v2724 = vld [vmem:[#allocation2 + $0x50] sm:$0xff]
        %2733 = vrot.lane.b32.xlu0 %v2717, 16
        %v2734 = vpop.permute.xlu0 %2733
        %2735 = vrot.lane.b32.xlu0 %v2718, 16
        %v2736 = vpop.permute.xlu0 %2735
        %2737 = vrot.lane.b32.xlu0 %v2719, 16
        %v2738 = vpop.permute.xlu0 %2737
        %2739 = vrot.lane.b32.xlu0 %v2720, 16
        %v2740 = vpop.permute.xlu0 %2739
        %2741 = vrot.lane.b32.xlu0 %v2721, 16
        %v2742 = vpop.permute.xlu0 %2741
        %2743 = vrot.lane.b32.xlu0 %v2722, 16
        %v2744 = vpop.permute.xlu0 %2743
        %2745 = vrot.lane.b32.xlu0 %v2723, 16
        %v2746 = vpop.permute.xlu0 %2745
        %2747 = vrot.lane.b32.xlu0 %v2724, 16
        %v2748 = vpop.permute.xlu0 %2747
        %v2749 = vsel %vm237, %v2734, %v2736
        %v2750 = vsel %vm237, %v2736, %v2738
        %v2751 = vsel %vm237, %v2738, %v2740
        %v2752 = vsel %vm237, %v2742, %v2744
        %v2753 = vsel %vm237, %v2744, %v2746
        %v2754 = vsel %vm237, %v2746, %v2748
        %2761 = vst [vmem:[#allocation3 + $0x930] sm:$0xff] %v2749
        %2762 = vst [vmem:[#allocation3 + $0x938] sm:$0xff] %v2750
        %2763 = vst [vmem:[#allocation3 + $0x940] sm:$0xff] %v2751
        %2764 = vst [vmem:[#allocation3 + $0x948] sm:$0xff] %v2752
        %2765 = vst [vmem:[#allocation3 + $0x950] sm:$0xff] %v2753
        %2766 = vst [vmem:[#allocation3 + $0x958] sm:$0xff] %v2754
        %v2767 = vld [vmem:[#allocation2 + $0x8] sm:$0xff]
        %v2768 = vld [vmem:[#allocation2 + $0x10] sm:$0xff]
        %v2769 = vld [vmem:[#allocation2 + $0x18] sm:$0xff]
        %v2770 = vld [vmem:[#allocation2 + $0x20] sm:$0xff]
        %v2771 = vld [vmem:[#allocation2 + $0x40] sm:$0xff]
        %v2772 = vld [vmem:[#allocation2 + $0x48] sm:$0xff]
        %v2773 = vld [vmem:[#allocation2 + $0x50] sm:$0xff]
        %v2774 = vld [vmem:[#allocation2 + $0x58] sm:$0xff]
        %2783 = vrot.lane.b32.xlu0 %v2767, 96
        %v2784 = vpop.permute.xlu0 %2783
        %2785 = vrot.lane.b32.xlu0 %v2768, 96
        %v2786 = vpop.permute.xlu0 %2785
        %2787 = vrot.lane.b32.xlu0 %v2769, 96
        %v2788 = vpop.permute.xlu0 %2787
        %2789 = vrot.lane.b32.xlu0 %v2770, 96
        %v2790 = vpop.permute.xlu0 %2789
        %2791 = vrot.lane.b32.xlu0 %v2771, 96
        %v2792 = vpop.permute.xlu0 %2791
        %2793 = vrot.lane.b32.xlu0 %v2772, 96
        %v2794 = vpop.permute.xlu0 %2793
        %2795 = vrot.lane.b32.xlu0 %v2773, 96
        %v2796 = vpop.permute.xlu0 %2795
        %2797 = vrot.lane.b32.xlu0 %v2774, 96
        %v2798 = vpop.permute.xlu0 %2797
        %vm2799 = vcmask 785408
        %v2800 = vsel %vm2799, %v2784, %v2786
        %v2801 = vsel %vm2799, %v2786, %v2788
        %v2802 = vsel %vm2799, %v2788, %v2790
        %v2803 = vsel %vm2799, %v2792, %v2794
        %v2804 = vsel %vm2799, %v2794, %v2796
        %v2805 = vsel %vm2799, %v2796, %v2798
        %2812 = vst [vmem:[#allocation3 + $0x960] sm:$0xff] %v2800
        %2813 = vst [vmem:[#allocation3 + $0x968] sm:$0xff] %v2801
        %2814 = vst [vmem:[#allocation3 + $0x970] sm:$0xff] %v2802
        %2815 = vst [vmem:[#allocation3 + $0x978] sm:$0xff] %v2803
        %2816 = vst [vmem:[#allocation3 + $0x980] sm:$0xff] %v2804
        %2817 = vst [vmem:[#allocation3 + $0x988] sm:$0xff] %v2805
        %v2818 = vld [vmem:[#allocation2 + $0x8] sm:$0xff]
        %v2819 = vld [vmem:[#allocation2 + $0x10] sm:$0xff]
        %v2820 = vld [vmem:[#allocation2 + $0x18] sm:$0xff]
        %v2821 = vld [vmem:[#allocation2 + $0x20] sm:$0xff]
        %v2822 = vld [vmem:[#allocation2 + $0x40] sm:$0xff]
        %v2823 = vld [vmem:[#allocation2 + $0x48] sm:$0xff]
        %v2824 = vld [vmem:[#allocation2 + $0x50] sm:$0xff]
        %v2825 = vld [vmem:[#allocation2 + $0x58] sm:$0xff]
        %2834 = vrot.lane.b32.xlu0 %v2818, 48
        %v2835 = vpop.permute.xlu0 %2834
        %2836 = vrot.lane.b32.xlu0 %v2819, 48
        %v2837 = vpop.permute.xlu0 %2836
        %2838 = vrot.lane.b32.xlu0 %v2820, 48
        %v2839 = vpop.permute.xlu0 %2838
        %2840 = vrot.lane.b32.xlu0 %v2821, 48
        %v2841 = vpop.permute.xlu0 %2840
        %2842 = vrot.lane.b32.xlu0 %v2822, 48
        %v2843 = vpop.permute.xlu0 %2842
        %2844 = vrot.lane.b32.xlu0 %v2823, 48
        %v2845 = vpop.permute.xlu0 %2844
        %2846 = vrot.lane.b32.xlu0 %v2824, 48
        %v2847 = vpop.permute.xlu0 %2846
        %2848 = vrot.lane.b32.xlu0 %v2825, 48
        %v2849 = vpop.permute.xlu0 %2848
        %vm2850 = vcmask 392192
        %v2851 = vsel %vm2850, %v2835, %v2837
        %v2852 = vsel %vm2850, %v2837, %v2839
        %v2853 = vsel %vm2850, %v2839, %v2841
        %v2854 = vsel %vm2850, %v2843, %v2845
        %v2855 = vsel %vm2850, %v2845, %v2847
        %v2856 = vsel %vm2850, %v2847, %v2849
        %2863 = vst [vmem:[#allocation3 + $0x990] sm:$0xff] %v2851
        %2864 = vst [vmem:[#allocation3 + $0x998] sm:$0xff] %v2852
        %2865 = vst [vmem:[#allocation3 + $0x9a0] sm:$0xff] %v2853
        %2866 = vst [vmem:[#allocation3 + $0x9a8] sm:$0xff] %v2854
        %2867 = vst [vmem:[#allocation3 + $0x9b0] sm:$0xff] %v2855
        %2868 = vst [vmem:[#allocation3 + $0x9b8] sm:$0xff] %v2856
        %v2869 = vld [vmem:[#allocation2 + $0x10] sm:$0xff]
        %v2870 = vld [vmem:[#allocation2 + $0x18] sm:$0xff]
        %v2871 = vld [vmem:[#allocation2 + $0x20] sm:$0xff]
        %v2872 = vld [vmem:[#allocation2 + $0x48] sm:$0xff]
        %v2873 = vld [vmem:[#allocation2 + $0x50] sm:$0xff]
        %v2874 = vld [vmem:[#allocation2 + $0x58] sm:$0xff]
        %2875 = vst [vmem:[#allocation3 + $0x9c0] sm:$0xff] %v2869
        %2876 = vst [vmem:[#allocation3 + $0x9c8] sm:$0xff] %v2870
        %2877 = vst [vmem:[#allocation3 + $0x9d0] sm:$0xff] %v2871
        %2878 = vst [vmem:[#allocation3 + $0x9d8] sm:$0xff] %v2872
        %2879 = vst [vmem:[#allocation3 + $0x9e0] sm:$0xff] %v2873
        %2880 = vst [vmem:[#allocation3 + $0x9e8] sm:$0xff] %v2874
        %v2881 = vld [vmem:[#allocation2 + $0x10] sm:$0xff]
        %v2882 = vld [vmem:[#allocation2 + $0x18] sm:$0xff]
        %v2883 = vld [vmem:[#allocation2 + $0x20] sm:$0xff]
        %v2884 = vld [vmem:[#allocation2 + $0x28] sm:$0xff]
        %v2885 = vld [vmem:[#allocation2 + $0x48] sm:$0xff]
        %v2886 = vld [vmem:[#allocation2 + $0x50] sm:$0xff]
        %v2887 = vld [vmem:[#allocation2 + $0x58] sm:$0xff]
        %v2888 = vld [vmem:[#allocation2 + $0x60] sm:$0xff]
        %2897 = vrot.lane.b32.xlu0 %v2881, 80
        %v2898 = vpop.permute.xlu0 %2897
        %2899 = vrot.lane.b32.xlu0 %v2882, 80
        %v2900 = vpop.permute.xlu0 %2899
        %2901 = vrot.lane.b32.xlu0 %v2883, 80
        %v2902 = vpop.permute.xlu0 %2901
        %2903 = vrot.lane.b32.xlu0 %v2884, 80
        %v2904 = vpop.permute.xlu0 %2903
        %2905 = vrot.lane.b32.xlu0 %v2885, 80
        %v2906 = vpop.permute.xlu0 %2905
        %2907 = vrot.lane.b32.xlu0 %v2886, 80
        %v2908 = vpop.permute.xlu0 %2907
        %2909 = vrot.lane.b32.xlu0 %v2887, 80
        %v2910 = vpop.permute.xlu0 %2909
        %2911 = vrot.lane.b32.xlu0 %v2888, 80
        %v2912 = vpop.permute.xlu0 %2911
        %vm2913 = vcmask 654336
        %v2914 = vsel %vm2913, %v2898, %v2900
        %v2915 = vsel %vm2913, %v2900, %v2902
        %v2916 = vsel %vm2913, %v2902, %v2904
        %v2917 = vsel %vm2913, %v2906, %v2908
        %v2918 = vsel %vm2913, %v2908, %v2910
        %v2919 = vsel %vm2913, %v2910, %v2912
        %2926 = vst [vmem:[#allocation3 + $0x9f0] sm:$0xff] %v2914
        %2927 = vst [vmem:[#allocation3 + $0x9f8] sm:$0xff] %v2915
        %2928 = vst [vmem:[#allocation3 + $0xa00] sm:$0xff] %v2916
        %2929 = vst [vmem:[#allocation3 + $0xa08] sm:$0xff] %v2917
        %2930 = vst [vmem:[#allocation3 + $0xa10] sm:$0xff] %v2918
        %2931 = vst [vmem:[#allocation3 + $0xa18] sm:$0xff] %v2919
        %v2932 = vld [vmem:[#allocation2 + $0x10] sm:$0xff]
        %v2933 = vld [vmem:[#allocation2 + $0x18] sm:$0xff]
        %v2934 = vld [vmem:[#allocation2 + $0x20] sm:$0xff]
        %v2935 = vld [vmem:[#allocation2 + $0x28] sm:$0xff]
        %v2936 = vld [vmem:[#allocation2 + $0x48] sm:$0xff]
        %v2937 = vld [vmem:[#allocation2 + $0x50] sm:$0xff]
        %v2938 = vld [vmem:[#allocation2 + $0x58] sm:$0xff]
        %v2939 = vld [vmem:[#allocation2 + $0x60] sm:$0xff]
        %2948 = vrot.lane.b32.xlu0 %v2932, 32
        %v2949 = vpop.permute.xlu0 %2948
        %2950 = vrot.lane.b32.xlu0 %v2933, 32
        %v2951 = vpop.permute.xlu0 %2950
        %2952 = vrot.lane.b32.xlu0 %v2934, 32
        %v2953 = vpop.permute.xlu0 %2952
        %2954 = vrot.lane.b32.xlu0 %v2935, 32
        %v2955 = vpop.permute.xlu0 %2954
        %2956 = vrot.lane.b32.xlu0 %v2936, 32
        %v2957 = vpop.permute.xlu0 %2956
        %2958 = vrot.lane.b32.xlu0 %v2937, 32
        %v2959 = vpop.permute.xlu0 %2958
        %2960 = vrot.lane.b32.xlu0 %v2938, 32
        %v2961 = vpop.permute.xlu0 %2960
        %2962 = vrot.lane.b32.xlu0 %v2939, 32
        %v2963 = vpop.permute.xlu0 %2962
        %vm2964 = vcmask 261120
        %v2965 = vsel %vm2964, %v2949, %v2951
        %v2966 = vsel %vm2964, %v2951, %v2953
        %v2967 = vsel %vm2964, %v2953, %v2955
        %v2968 = vsel %vm2964, %v2957, %v2959
        %v2969 = vsel %vm2964, %v2959, %v2961
        %v2970 = vsel %vm2964, %v2961, %v2963
        %2977 = vst [vmem:[#allocation3 + $0xa20] sm:$0xff] %v2965
        %2978 = vst [vmem:[#allocation3 + $0xa28] sm:$0xff] %v2966
        %2979 = vst [vmem:[#allocation3 + $0xa30] sm:$0xff] %v2967
        %2980 = vst [vmem:[#allocation3 + $0xa38] sm:$0xff] %v2968
        %2981 = vst [vmem:[#allocation3 + $0xa40] sm:$0xff] %v2969
        %2982 = vst [vmem:[#allocation3 + $0xa48] sm:$0xff] %v2970
        %v2983 = vld [vmem:[#allocation2 + $0x18] sm:$0xff]
        %v2984 = vld [vmem:[#allocation2 + $0x20] sm:$0xff]
        %v2985 = vld [vmem:[#allocation2 + $0x28] sm:$0xff]
        %v2986 = vld [vmem:[#allocation2 + $0x30] sm:$0xff]
        %v2987 = vld [vmem:[#allocation2 + $0x50] sm:$0xff]
        %v2988 = vld [vmem:[#allocation2 + $0x58] sm:$0xff]
        %v2989 = vld [vmem:[#allocation2 + $0x60] sm:$0xff]
        %v2990 = vld [vmem:[#allocation2 + $0x68] sm:$0xff]
        %2999 = vrot.lane.b32.xlu0 %v2983, 112
        %v3000 = vpop.permute.xlu0 %2999
        %3001 = vrot.lane.b32.xlu0 %v2984, 112
        %v3002 = vpop.permute.xlu0 %3001
        %3003 = vrot.lane.b32.xlu0 %v2985, 112
        %v3004 = vpop.permute.xlu0 %3003
        %3005 = vrot.lane.b32.xlu0 %v2986, 112
        %v3006 = vpop.permute.xlu0 %3005
        %3007 = vrot.lane.b32.xlu0 %v2987, 112
        %v3008 = vpop.permute.xlu0 %3007
        %3009 = vrot.lane.b32.xlu0 %v2988, 112
        %v3010 = vpop.permute.xlu0 %3009
        %3011 = vrot.lane.b32.xlu0 %v2989, 112
        %v3012 = vpop.permute.xlu0 %3011
        %3013 = vrot.lane.b32.xlu0 %v2990, 112
        %v3014 = vpop.permute.xlu0 %3013
        %v3015 = vsel %vm2290, %v3000, %v3002
        %v3016 = vsel %vm2290, %v3002, %v3004
        %v3017 = vsel %vm2290, %v3004, %v3006
        %v3018 = vsel %vm2290, %v3008, %v3010
        %v3019 = vsel %vm2290, %v3010, %v3012
        %v3020 = vsel %vm2290, %v3012, %v3014
        %3027 = vst [vmem:[#allocation3 + $0xa50] sm:$0xff] %v3015
        %3028 = vst [vmem:[#allocation3 + $0xa58] sm:$0xff] %v3016
        %3029 = vst [vmem:[#allocation3 + $0xa60] sm:$0xff] %v3017
        %3030 = vst [vmem:[#allocation3 + $0xa68] sm:$0xff] %v3018
        %3031 = vst [vmem:[#allocation3 + $0xa70] sm:$0xff] %v3019
        %3032 = vst [vmem:[#allocation3 + $0xa78] sm:$0xff] %v3020
        %v3033 = vld [vmem:[#allocation2 + $0x8] sm:$0xff]
        %v3034 = vld [vmem:[#allocation2 + $0x10] sm:$0xff]
        %v3035 = vld [vmem:[#allocation2 + $0x18] sm:$0xff]
        %v3036 = vld [vmem:[#allocation2 + $0x20] sm:$0xff]
        %v3037 = vld [vmem:[#allocation2 + $0x40] sm:$0xff]
        %v3038 = vld [vmem:[#allocation2 + $0x48] sm:$0xff]
        %v3039 = vld [vmem:[#allocation2 + $0x50] sm:$0xff]
        %v3040 = vld [vmem:[#allocation2 + $0x58] sm:$0xff]
        %3049 = vrot.lane.b32.xlu0 %v3033, 40
        %v3050 = vpop.permute.xlu0 %3049
        %3051 = vrot.lane.b32.xlu0 %v3034, 40
        %v3052 = vpop.permute.xlu0 %3051
        %3053 = vrot.lane.b32.xlu0 %v3035, 40
        %v3054 = vpop.permute.xlu0 %3053
        %3055 = vrot.lane.b32.xlu0 %v3036, 40
        %v3056 = vpop.permute.xlu0 %3055
        %3057 = vrot.lane.b32.xlu0 %v3037, 40
        %v3058 = vpop.permute.xlu0 %3057
        %3059 = vrot.lane.b32.xlu0 %v3038, 40
        %v3060 = vpop.permute.xlu0 %3059
        %3061 = vrot.lane.b32.xlu0 %v3039, 40
        %v3062 = vpop.permute.xlu0 %3061
        %3063 = vrot.lane.b32.xlu0 %v3040, 40
        %v3064 = vpop.permute.xlu0 %3063
        %vm3065 = vcmask 326656
        %v3066 = vsel %vm3065, %v3050, %v3052
        %v3067 = vsel %vm3065, %v3052, %v3054
        %v3068 = vsel %vm3065, %v3054, %v3056
        %v3069 = vsel %vm3065, %v3058, %v3060
        %v3070 = vsel %vm3065, %v3060, %v3062
        %v3071 = vsel %vm3065, %v3062, %v3064
        %3078 = vst [vmem:[#allocation3 + $0xa80] sm:$0xff] %v3066
        %3079 = vst [vmem:[#allocation3 + $0xa88] sm:$0xff] %v3067
        %3080 = vst [vmem:[#allocation3 + $0xa90] sm:$0xff] %v3068
        %3081 = vst [vmem:[#allocation3 + $0xa98] sm:$0xff] %v3069
        %3082 = vst [vmem:[#allocation3 + $0xaa0] sm:$0xff] %v3070
        %3083 = vst [vmem:[#allocation3 + $0xaa8] sm:$0xff] %v3071
        %v3084 = vld [vmem:[#allocation2 + $0x8] sm:$0xff]
        %v3085 = vld [vmem:[#allocation2 + $0x10] sm:$0xff]
        %v3086 = vld [vmem:[#allocation2 + $0x18] sm:$0xff]
        %v3087 = vld [vmem:[#allocation2 + $0x20] sm:$0xff]
        %v3088 = vld [vmem:[#allocation2 + $0x40] sm:$0xff]
        %v3089 = vld [vmem:[#allocation2 + $0x48] sm:$0xff]
        %v3090 = vld [vmem:[#allocation2 + $0x50] sm:$0xff]
        %v3091 = vld [vmem:[#allocation2 + $0x58] sm:$0xff]
        %3100 = vrot.lane.b32.xlu0 %v3084, 24
        %v3101 = vpop.permute.xlu0 %3100
        %3102 = vrot.lane.b32.xlu0 %v3085, 24
        %v3103 = vpop.permute.xlu0 %3102
        %3104 = vrot.lane.b32.xlu0 %v3086, 24
        %v3105 = vpop.permute.xlu0 %3104
        %3106 = vrot.lane.b32.xlu0 %v3087, 24
        %v3107 = vpop.permute.xlu0 %3106
        %3108 = vrot.lane.b32.xlu0 %v3088, 24
        %v3109 = vpop.permute.xlu0 %3108
        %3110 = vrot.lane.b32.xlu0 %v3089, 24
        %v3111 = vpop.permute.xlu0 %3110
        %3112 = vrot.lane.b32.xlu0 %v3090, 24
        %v3113 = vpop.permute.xlu0 %3112
        %3114 = vrot.lane.b32.xlu0 %v3091, 24
        %v3115 = vpop.permute.xlu0 %3114
        %v3116 = vsel %vm290, %v3101, %v3103
        %v3117 = vsel %vm290, %v3103, %v3105
        %v3118 = vsel %vm290, %v3105, %v3107
        %v3119 = vsel %vm290, %v3109, %v3111
        %v3120 = vsel %vm290, %v3111, %v3113
        %v3121 = vsel %vm290, %v3113, %v3115
        %3128 = vst [vmem:[#allocation3 + $0xab0] sm:$0xff] %v3116
        %3129 = vst [vmem:[#allocation3 + $0xab8] sm:$0xff] %v3117
        %3130 = vst [vmem:[#allocation3 + $0xac0] sm:$0xff] %v3118
        %3131 = vst [vmem:[#allocation3 + $0xac8] sm:$0xff] %v3119
        %3132 = vst [vmem:[#allocation3 + $0xad0] sm:$0xff] %v3120
        %3133 = vst [vmem:[#allocation3 + $0xad8] sm:$0xff] %v3121
        %v3134 = vld [vmem:[#allocation2 + $0x8] sm:$0xff]
        %v3135 = vld [vmem:[#allocation2 + $0x10] sm:$0xff]
        %v3136 = vld [vmem:[#allocation2 + $0x18] sm:$0xff]
        %v3137 = vld [vmem:[#allocation2 + $0x20] sm:$0xff]
        %v3138 = vld [vmem:[#allocation2 + $0x40] sm:$0xff]
        %v3139 = vld [vmem:[#allocation2 + $0x48] sm:$0xff]
        %v3140 = vld [vmem:[#allocation2 + $0x50] sm:$0xff]
        %v3141 = vld [vmem:[#allocation2 + $0x58] sm:$0xff]
        %3150 = vrot.lane.b32.xlu0 %v3134, 8
        %v3151 = vpop.permute.xlu0 %3150
        %3152 = vrot.lane.b32.xlu0 %v3135, 8
        %v3153 = vpop.permute.xlu0 %3152
        %3154 = vrot.lane.b32.xlu0 %v3136, 8
        %v3155 = vpop.permute.xlu0 %3154
        %3156 = vrot.lane.b32.xlu0 %v3137, 8
        %v3157 = vpop.permute.xlu0 %3156
        %3158 = vrot.lane.b32.xlu0 %v3138, 8
        %v3159 = vpop.permute.xlu0 %3158
        %3160 = vrot.lane.b32.xlu0 %v3139, 8
        %v3161 = vpop.permute.xlu0 %3160
        %3162 = vrot.lane.b32.xlu0 %v3140, 8
        %v3163 = vpop.permute.xlu0 %3162
        %3164 = vrot.lane.b32.xlu0 %v3141, 8
        %v3165 = vpop.permute.xlu0 %3164
        %v3166 = vsel %vm1105, %v3151, %v3153
        %v3167 = vsel %vm1105, %v3153, %v3155
        %v3168 = vsel %vm1105, %v3155, %v3157
        %v3169 = vsel %vm1105, %v3159, %v3161
        %v3170 = vsel %vm1105, %v3161, %v3163
        %v3171 = vsel %vm1105, %v3163, %v3165
        %3178 = vst [vmem:[#allocation3 + $0xae0] sm:$0xff] %v3166
        %3179 = vst [vmem:[#allocation3 + $0xae8] sm:$0xff] %v3167
        %3180 = vst [vmem:[#allocation3 + $0xaf0] sm:$0xff] %v3168
        %3181 = vst [vmem:[#allocation3 + $0xaf8] sm:$0xff] %v3169
        %3182 = vst [vmem:[#allocation3 + $0xb00] sm:$0xff] %v3170
        %3183 = vst [vmem:[#allocation3 + $0xb08] sm:$0xff] %v3171
        %v3184 = vld [vmem:[#allocation2 + $0x10] sm:$0xff]
        %v3185 = vld [vmem:[#allocation2 + $0x18] sm:$0xff]
        %v3186 = vld [vmem:[#allocation2 + $0x20] sm:$0xff]
        %v3187 = vld [vmem:[#allocation2 + $0x28] sm:$0xff]
        %v3188 = vld [vmem:[#allocation2 + $0x48] sm:$0xff]
        %v3189 = vld [vmem:[#allocation2 + $0x50] sm:$0xff]
        %v3190 = vld [vmem:[#allocation2 + $0x58] sm:$0xff]
        %v3191 = vld [vmem:[#allocation2 + $0x60] sm:$0xff]
        %3200 = vrot.lane.b32.xlu0 %v3184, 120
        %v3201 = vpop.permute.xlu0 %3200
        %3202 = vrot.lane.b32.xlu0 %v3185, 120
        %v3203 = vpop.permute.xlu0 %3202
        %3204 = vrot.lane.b32.xlu0 %v3186, 120
        %v3205 = vpop.permute.xlu0 %3204
        %3206 = vrot.lane.b32.xlu0 %v3187, 120
        %v3207 = vpop.permute.xlu0 %3206
        %3208 = vrot.lane.b32.xlu0 %v3188, 120
        %v3209 = vpop.permute.xlu0 %3208
        %3210 = vrot.lane.b32.xlu0 %v3189, 120
        %v3211 = vpop.permute.xlu0 %3210
        %3212 = vrot.lane.b32.xlu0 %v3190, 120
        %v3213 = vpop.permute.xlu0 %3212
        %3214 = vrot.lane.b32.xlu0 %v3191, 120
        %v3215 = vpop.permute.xlu0 %3214
        %v3216 = vsel %vm1882, %v3201, %v3203
        %v3217 = vsel %vm1882, %v3203, %v3205
        %v3218 = vsel %vm1882, %v3205, %v3207
        %v3219 = vsel %vm1882, %v3209, %v3211
        %v3220 = vsel %vm1882, %v3211, %v3213
        %v3221 = vsel %vm1882, %v3213, %v3215
        %3228 = vst [vmem:[#allocation3 + $0xb10] sm:$0xff] %v3216
        %3229 = vst [vmem:[#allocation3 + $0xb18] sm:$0xff] %v3217
        %3230 = vst [vmem:[#allocation3 + $0xb20] sm:$0xff] %v3218
        %3231 = vst [vmem:[#allocation3 + $0xb28] sm:$0xff] %v3219
        %3232 = vst [vmem:[#allocation3 + $0xb30] sm:$0xff] %v3220
        %3233 = vst [vmem:[#allocation3 + $0xb38] sm:$0xff] %v3221
        %v3234 = vld [vmem:[#allocation2 + $0x10] sm:$0xff]
        %v3235 = vld [vmem:[#allocation2 + $0x18] sm:$0xff]
        %v3236 = vld [vmem:[#allocation2 + $0x20] sm:$0xff]
        %v3237 = vld [vmem:[#allocation2 + $0x28] sm:$0xff]
        %v3238 = vld [vmem:[#allocation2 + $0x48] sm:$0xff]
        %v3239 = vld [vmem:[#allocation2 + $0x50] sm:$0xff]
        %v3240 = vld [vmem:[#allocation2 + $0x58] sm:$0xff]
        %v3241 = vld [vmem:[#allocation2 + $0x60] sm:$0xff]
        %3250 = vrot.lane.b32.xlu0 %v3234, 104
        %v3251 = vpop.permute.xlu0 %3250
        %3252 = vrot.lane.b32.xlu0 %v3235, 104
        %v3253 = vpop.permute.xlu0 %3252
        %3254 = vrot.lane.b32.xlu0 %v3236, 104
        %v3255 = vpop.permute.xlu0 %3254
        %3256 = vrot.lane.b32.xlu0 %v3237, 104
        %v3257 = vpop.permute.xlu0 %3256
        %3258 = vrot.lane.b32.xlu0 %v3238, 104
        %v3259 = vpop.permute.xlu0 %3258
        %3260 = vrot.lane.b32.xlu0 %v3239, 104
        %v3261 = vpop.permute.xlu0 %3260
        %3262 = vrot.lane.b32.xlu0 %v3240, 104
        %v3263 = vpop.permute.xlu0 %3262
        %3264 = vrot.lane.b32.xlu0 %v3241, 104
        %v3265 = vpop.permute.xlu0 %3264
        %v3266 = vsel %vm2698, %v3251, %v3253
        %v3267 = vsel %vm2698, %v3253, %v3255
        %v3268 = vsel %vm2698, %v3255, %v3257
        %v3269 = vsel %vm2698, %v3259, %v3261
        %v3270 = vsel %vm2698, %v3261, %v3263
        %v3271 = vsel %vm2698, %v3263, %v3265
        %3278 = vst [vmem:[#allocation3 + $0xb40] sm:$0xff] %v3266
        %3279 = vst [vmem:[#allocation3 + $0xb48] sm:$0xff] %v3267
        %3280 = vst [vmem:[#allocation3 + $0xb50] sm:$0xff] %v3268
        %3281 = vst [vmem:[#allocation3 + $0xb58] sm:$0xff] %v3269
        %3282 = vst [vmem:[#allocation3 + $0xb60] sm:$0xff] %v3270
        %3283 = vst [vmem:[#allocation3 + $0xb68] sm:$0xff] %v3271
        %v3284 = vld [vmem:[#allocation2 + $0x10] sm:$0xff]
        %v3285 = vld [vmem:[#allocation2 + $0x18] sm:$0xff]
        %v3286 = vld [vmem:[#allocation2 + $0x20] sm:$0xff]
        %v3287 = vld [vmem:[#allocation2 + $0x28] sm:$0xff]
        %v3288 = vld [vmem:[#allocation2 + $0x48] sm:$0xff]
        %v3289 = vld [vmem:[#allocation2 + $0x50] sm:$0xff]
        %v3290 = vld [vmem:[#allocation2 + $0x58] sm:$0xff]
        %v3291 = vld [vmem:[#allocation2 + $0x60] sm:$0xff]
        %3300 = vrot.lane.b32.xlu0 %v3284, 88
        %v3301 = vpop.permute.xlu0 %3300
        %3302 = vrot.lane.b32.xlu0 %v3285, 88
        %v3303 = vpop.permute.xlu0 %3302
        %3304 = vrot.lane.b32.xlu0 %v3286, 88
        %v3305 = vpop.permute.xlu0 %3304
        %3306 = vrot.lane.b32.xlu0 %v3287, 88
        %v3307 = vpop.permute.xlu0 %3306
        %3308 = vrot.lane.b32.xlu0 %v3288, 88
        %v3309 = vpop.permute.xlu0 %3308
        %3310 = vrot.lane.b32.xlu0 %v3289, 88
        %v3311 = vpop.permute.xlu0 %3310
        %3312 = vrot.lane.b32.xlu0 %v3290, 88
        %v3313 = vpop.permute.xlu0 %3312
        %3314 = vrot.lane.b32.xlu0 %v3291, 88
        %v3315 = vpop.permute.xlu0 %3314
        %vm3316 = vcmask 719872
        %v3317 = vsel %vm3316, %v3301, %v3303
        %v3318 = vsel %vm3316, %v3303, %v3305
        %v3319 = vsel %vm3316, %v3305, %v3307
        %v3320 = vsel %vm3316, %v3309, %v3311
        %v3321 = vsel %vm3316, %v3311, %v3313
        %v3322 = vsel %vm3316, %v3313, %v3315
        %3329 = vst [vmem:[#allocation3 + $0xb70] sm:$0xff] %v3317
        %3330 = vst [vmem:[#allocation3 + $0xb78] sm:$0xff] %v3318
        %3331 = vst [vmem:[#allocation3 + $0xb80] sm:$0xff] %v3319
        %3332 = vst [vmem:[#allocation3 + $0xb88] sm:$0xff] %v3320
        %3333 = vst [vmem:[#allocation3 + $0xb90] sm:$0xff] %v3321
        %3334 = vst [vmem:[#allocation3 + $0xb98] sm:$0xff] %v3322
        %v3335 = vld [vmem:[#allocation2 + $0x8] sm:$0xff]
        %v3336 = vld [vmem:[#allocation2 + $0x10] sm:$0xff]
        %v3337 = vld [vmem:[#allocation2 + $0x18] sm:$0xff]
        %v3338 = vld [vmem:[#allocation2 + $0x20] sm:$0xff]
        %v3339 = vld [vmem:[#allocation2 + $0x40] sm:$0xff]
        %v3340 = vld [vmem:[#allocation2 + $0x48] sm:$0xff]
        %v3341 = vld [vmem:[#allocation2 + $0x50] sm:$0xff]
        %v3342 = vld [vmem:[#allocation2 + $0x58] sm:$0xff]
        %3351 = vrot.lane.b32.xlu0 %v3335, 20
        %v3352 = vpop.permute.xlu0 %3351
        %3353 = vrot.lane.b32.xlu0 %v3336, 20
        %v3354 = vpop.permute.xlu0 %3353
        %3355 = vrot.lane.b32.xlu0 %v3337, 20
        %v3356 = vpop.permute.xlu0 %3355
        %3357 = vrot.lane.b32.xlu0 %v3338, 20
        %v3358 = vpop.permute.xlu0 %3357
        %3359 = vrot.lane.b32.xlu0 %v3339, 20
        %v3360 = vpop.permute.xlu0 %3359
        %3361 = vrot.lane.b32.xlu0 %v3340, 20
        %v3362 = vpop.permute.xlu0 %3361
        %3363 = vrot.lane.b32.xlu0 %v3341, 20
        %v3364 = vpop.permute.xlu0 %3363
        %3365 = vrot.lane.b32.xlu0 %v3342, 20
        %v3366 = vpop.permute.xlu0 %3365
        %v3367 = vsel %vm494, %v3352, %v3354
        %v3368 = vsel %vm494, %v3354, %v3356
        %v3369 = vsel %vm494, %v3356, %v3358
        %v3370 = vsel %vm494, %v3360, %v3362
        %v3371 = vsel %vm494, %v3362, %v3364
        %v3372 = vsel %vm494, %v3364, %v3366
        %3379 = vst [vmem:[#allocation3 + $0xba0] sm:$0xff] %v3367
        %3380 = vst [vmem:[#allocation3 + $0xba8] sm:$0xff] %v3368
        %3381 = vst [vmem:[#allocation3 + $0xbb0] sm:$0xff] %v3369
        %3382 = vst [vmem:[#allocation3 + $0xbb8] sm:$0xff] %v3370
        %3383 = vst [vmem:[#allocation3 + $0xbc0] sm:$0xff] %v3371
        %3384 = vst [vmem:[#allocation3 + $0xbc8] sm:$0xff] %v3372
        %v3385 = vld [vmem:[#allocation2 + $0x8] sm:$0xff]
        %v3386 = vld [vmem:[#allocation2 + $0x10] sm:$0xff]
        %v3387 = vld [vmem:[#allocation2 + $0x18] sm:$0xff]
        %v3388 = vld [vmem:[#allocation2 + $0x20] sm:$0xff]
        %v3389 = vld [vmem:[#allocation2 + $0x40] sm:$0xff]
        %v3390 = vld [vmem:[#allocation2 + $0x48] sm:$0xff]
        %v3391 = vld [vmem:[#allocation2 + $0x50] sm:$0xff]
        %v3392 = vld [vmem:[#allocation2 + $0x58] sm:$0xff]
        %3401 = vrot.lane.b32.xlu0 %v3385, 12
        %v3402 = vpop.permute.xlu0 %3401
        %3403 = vrot.lane.b32.xlu0 %v3386, 12
        %v3404 = vpop.permute.xlu0 %3403
        %3405 = vrot.lane.b32.xlu0 %v3387, 12
        %v3406 = vpop.permute.xlu0 %3405
        %3407 = vrot.lane.b32.xlu0 %v3388, 12
        %v3408 = vpop.permute.xlu0 %3407
        %3409 = vrot.lane.b32.xlu0 %v3389, 12
        %v3410 = vpop.permute.xlu0 %3409
        %3411 = vrot.lane.b32.xlu0 %v3390, 12
        %v3412 = vpop.permute.xlu0 %3411
        %3413 = vrot.lane.b32.xlu0 %v3391, 12
        %v3414 = vpop.permute.xlu0 %3413
        %3415 = vrot.lane.b32.xlu0 %v3392, 12
        %v3416 = vpop.permute.xlu0 %3415
        %v3417 = vsel %vm901, %v3402, %v3404
        %v3418 = vsel %vm901, %v3404, %v3406
        %v3419 = vsel %vm901, %v3406, %v3408
        %v3420 = vsel %vm901, %v3410, %v3412
        %v3421 = vsel %vm901, %v3412, %v3414
        %v3422 = vsel %vm901, %v3414, %v3416
        %3429 = vst [vmem:[#allocation3 + $0xbd0] sm:$0xff] %v3417
        %3430 = vst [vmem:[#allocation3 + $0xbd8] sm:$0xff] %v3418
        %3431 = vst [vmem:[#allocation3 + $0xbe0] sm:$0xff] %v3419
        %3432 = vst [vmem:[#allocation3 + $0xbe8] sm:$0xff] %v3420
        %3433 = vst [vmem:[#allocation3 + $0xbf0] sm:$0xff] %v3421
        %3434 = vst [vmem:[#allocation3 + $0xbf8] sm:$0xff] %v3422
        %v3435 = vld [vmem:[#allocation2 + $0x8] sm:$0xff]
        %v3436 = vld [vmem:[#allocation2 + $0x10] sm:$0xff]
        %v3437 = vld [vmem:[#allocation2 + $0x18] sm:$0xff]
        %v3438 = vld [vmem:[#allocation2 + $0x20] sm:$0xff]
        %v3439 = vld [vmem:[#allocation2 + $0x40] sm:$0xff]
        %v3440 = vld [vmem:[#allocation2 + $0x48] sm:$0xff]
        %v3441 = vld [vmem:[#allocation2 + $0x50] sm:$0xff]
        %v3442 = vld [vmem:[#allocation2 + $0x58] sm:$0xff]
        %3451 = vrot.lane.b32.xlu0 %v3435, 4
        %v3452 = vpop.permute.xlu0 %3451
        %3453 = vrot.lane.b32.xlu0 %v3436, 4
        %v3454 = vpop.permute.xlu0 %3453
        %3455 = vrot.lane.b32.xlu0 %v3437, 4
        %v3456 = vpop.permute.xlu0 %3455
        %3457 = vrot.lane.b32.xlu0 %v3438, 4
        %v3458 = vpop.permute.xlu0 %3457
        %3459 = vrot.lane.b32.xlu0 %v3439, 4
        %v3460 = vpop.permute.xlu0 %3459
        %3461 = vrot.lane.b32.xlu0 %v3440, 4
        %v3462 = vpop.permute.xlu0 %3461
        %3463 = vrot.lane.b32.xlu0 %v3441, 4
        %v3464 = vpop.permute.xlu0 %3463
        %3465 = vrot.lane.b32.xlu0 %v3442, 4
        %v3466 = vpop.permute.xlu0 %3465
        %v3467 = vsel %vm1309, %v3452, %v3454
        %v3468 = vsel %vm1309, %v3454, %v3456
        %v3469 = vsel %vm1309, %v3456, %v3458
        %v3470 = vsel %vm1309, %v3460, %v3462
        %v3471 = vsel %vm1309, %v3462, %v3464
        %v3472 = vsel %vm1309, %v3464, %v3466
        %3479 = vst [vmem:[#allocation3 + $0xc00] sm:$0xff] %v3467
        %3480 = vst [vmem:[#allocation3 + $0xc08] sm:$0xff] %v3468
        %3481 = vst [vmem:[#allocation3 + $0xc10] sm:$0xff] %v3469
        %3482 = vst [vmem:[#allocation3 + $0xc18] sm:$0xff] %v3470
        %3483 = vst [vmem:[#allocation3 + $0xc20] sm:$0xff] %v3471
        %3484 = vst [vmem:[#allocation3 + $0xc28] sm:$0xff] %v3472
        %v3485 = vld [vmem:[#allocation2 + $0x10] sm:$0xff]
        %v3486 = vld [vmem:[#allocation2 + $0x18] sm:$0xff]
        %v3487 = vld [vmem:[#allocation2 + $0x20] sm:$0xff]
        %v3488 = vld [vmem:[#allocation2 + $0x28] sm:$0xff]
        %v3489 = vld [vmem:[#allocation2 + $0x48] sm:$0xff]
        %v3490 = vld [vmem:[#allocation2 + $0x50] sm:$0xff]
        %v3491 = vld [vmem:[#allocation2 + $0x58] sm:$0xff]
        %v3492 = vld [vmem:[#allocation2 + $0x60] sm:$0xff]
        %3501 = vrot.lane.b32.xlu0 %v3485, 124
        %v3502 = vpop.permute.xlu0 %3501
        %3503 = vrot.lane.b32.xlu0 %v3486, 124
        %v3504 = vpop.permute.xlu0 %3503
        %3505 = vrot.lane.b32.xlu0 %v3487, 124
        %v3506 = vpop.permute.xlu0 %3505
        %3507 = vrot.lane.b32.xlu0 %v3488, 124
        %v3508 = vpop.permute.xlu0 %3507
        %3509 = vrot.lane.b32.xlu0 %v3489, 124
        %v3510 = vpop.permute.xlu0 %3509
        %3511 = vrot.lane.b32.xlu0 %v3490, 124
        %v3512 = vpop.permute.xlu0 %3511
        %3513 = vrot.lane.b32.xlu0 %v3491, 124
        %v3514 = vpop.permute.xlu0 %3513
        %3515 = vrot.lane.b32.xlu0 %v3492, 124
        %v3516 = vpop.permute.xlu0 %3515
        %v3517 = vsel %vm1678, %v3502, %v3504
        %v3518 = vsel %vm1678, %v3504, %v3506
        %v3519 = vsel %vm1678, %v3506, %v3508
        %v3520 = vsel %vm1678, %v3510, %v3512
        %v3521 = vsel %vm1678, %v3512, %v3514
        %v3522 = vsel %vm1678, %v3514, %v3516
        %3529 = vst [vmem:[#allocation3 + $0xc30] sm:$0xff] %v3517
        %3530 = vst [vmem:[#allocation3 + $0xc38] sm:$0xff] %v3518
        %3531 = vst [vmem:[#allocation3 + $0xc40] sm:$0xff] %v3519
        %3532 = vst [vmem:[#allocation3 + $0xc48] sm:$0xff] %v3520
        %3533 = vst [vmem:[#allocation3 + $0xc50] sm:$0xff] %v3521
        %3534 = vst [vmem:[#allocation3 + $0xc58] sm:$0xff] %v3522
        %v3535 = vld [vmem:[#allocation2 + $0x10] sm:$0xff]
        %v3536 = vld [vmem:[#allocation2 + $0x18] sm:$0xff]
        %v3537 = vld [vmem:[#allocation2 + $0x20] sm:$0xff]
        %v3538 = vld [vmem:[#allocation2 + $0x28] sm:$0xff]
        %v3539 = vld [vmem:[#allocation2 + $0x48] sm:$0xff]
        %v3540 = vld [vmem:[#allocation2 + $0x50] sm:$0xff]
        %v3541 = vld [vmem:[#allocation2 + $0x58] sm:$0xff]
        %v3542 = vld [vmem:[#allocation2 + $0x60] sm:$0xff]
        %3551 = vrot.lane.b32.xlu0 %v3535, 116
        %v3552 = vpop.permute.xlu0 %3551
        %3553 = vrot.lane.b32.xlu0 %v3536, 116
        %v3554 = vpop.permute.xlu0 %3553
        %3555 = vrot.lane.b32.xlu0 %v3537, 116
        %v3556 = vpop.permute.xlu0 %3555
        %3557 = vrot.lane.b32.xlu0 %v3538, 116
        %v3558 = vpop.permute.xlu0 %3557
        %3559 = vrot.lane.b32.xlu0 %v3539, 116
        %v3560 = vpop.permute.xlu0 %3559
        %3561 = vrot.lane.b32.xlu0 %v3540, 116
        %v3562 = vpop.permute.xlu0 %3561
        %3563 = vrot.lane.b32.xlu0 %v3541, 116
        %v3564 = vpop.permute.xlu0 %3563
        %3565 = vrot.lane.b32.xlu0 %v3542, 116
        %v3566 = vpop.permute.xlu0 %3565
        %v3567 = vsel %vm2086, %v3552, %v3554
        %v3568 = vsel %vm2086, %v3554, %v3556
        %v3569 = vsel %vm2086, %v3556, %v3558
        %v3570 = vsel %vm2086, %v3560, %v3562
        %v3571 = vsel %vm2086, %v3562, %v3564
        %v3572 = vsel %vm2086, %v3564, %v3566
        %3579 = vst [vmem:[#allocation3 + $0xc60] sm:$0xff] %v3567
        %3580 = vst [vmem:[#allocation3 + $0xc68] sm:$0xff] %v3568
        %3581 = vst [vmem:[#allocation3 + $0xc70] sm:$0xff] %v3569
        %3582 = vst [vmem:[#allocation3 + $0xc78] sm:$0xff] %v3570
        %3583 = vst [vmem:[#allocation3 + $0xc80] sm:$0xff] %v3571
        %3584 = vst [vmem:[#allocation3 + $0xc88] sm:$0xff] %v3572
        %v3585 = vld [vmem:[#allocation2 + $0x10] sm:$0xff]
        %v3586 = vld [vmem:[#allocation2 + $0x18] sm:$0xff]
        %v3587 = vld [vmem:[#allocation2 + $0x20] sm:$0xff]
        %v3588 = vld [vmem:[#allocation2 + $0x28] sm:$0xff]
        %v3589 = vld [vmem:[#allocation2 + $0x48] sm:$0xff]
        %v3590 = vld [vmem:[#allocation2 + $0x50] sm:$0xff]
        %v3591 = vld [vmem:[#allocation2 + $0x58] sm:$0xff]
        %v3592 = vld [vmem:[#allocation2 + $0x60] sm:$0xff]
        %3601 = vrot.lane.b32.xlu0 %v3585, 108
        %v3602 = vpop.permute.xlu0 %3601
        %3603 = vrot.lane.b32.xlu0 %v3586, 108
        %v3604 = vpop.permute.xlu0 %3603
        %3605 = vrot.lane.b32.xlu0 %v3587, 108
        %v3606 = vpop.permute.xlu0 %3605
        %3607 = vrot.lane.b32.xlu0 %v3588, 108
        %v3608 = vpop.permute.xlu0 %3607
        %3609 = vrot.lane.b32.xlu0 %v3589, 108
        %v3610 = vpop.permute.xlu0 %3609
        %3611 = vrot.lane.b32.xlu0 %v3590, 108
        %v3612 = vpop.permute.xlu0 %3611
        %3613 = vrot.lane.b32.xlu0 %v3591, 108
        %v3614 = vpop.permute.xlu0 %3613
        %3615 = vrot.lane.b32.xlu0 %v3592, 108
        %v3616 = vpop.permute.xlu0 %3615
        %v3617 = vsel %vm2494, %v3602, %v3604
        %v3618 = vsel %vm2494, %v3604, %v3606
        %v3619 = vsel %vm2494, %v3606, %v3608
        %v3620 = vsel %vm2494, %v3610, %v3612
        %v3621 = vsel %vm2494, %v3612, %v3614
        %v3622 = vsel %vm2494, %v3614, %v3616
        %3629 = vst [vmem:[#allocation3 + $0xc90] sm:$0xff] %v3617
        %3630 = vst [vmem:[#allocation3 + $0xc98] sm:$0xff] %v3618
        %3631 = vst [vmem:[#allocation3 + $0xca0] sm:$0xff] %v3619
        %3632 = vst [vmem:[#allocation3 + $0xca8] sm:$0xff] %v3620
        %3633 = vst [vmem:[#allocation3 + $0xcb0] sm:$0xff] %v3621
        %3634 = vst [vmem:[#allocation3 + $0xcb8] sm:$0xff] %v3622
        %v3635 = vld [vmem:[#allocation7] sm:$0xff]
        %v3636 = vld [vmem:[#allocation7 + $0x8] sm:$0xff]
        %v3637 = vld [vmem:[#allocation7 + $0x10] sm:$0xff]
        %v3638 = vld [vmem:[#allocation7 + $0x18] sm:$0xff]
        %v3639 = vld [vmem:[#allocation7 + $0x20] sm:$0xff]
        %v3640 = vld [vmem:[#allocation7 + $0x28] sm:$0xff]
        %v3641 = vld [vmem:[#allocation7 + $0x30] sm:$0xff]
        %v3642 = vld [vmem:[#allocation7 + $0x38] sm:$0xff]
        %v3643 = vld [vmem:[#allocation7 + $0x40] sm:$0xff]
        %v3644 = vld [vmem:[#allocation7 + $0x48] sm:$0xff]
        %v3645 = vld [vmem:[#allocation7 + $0x50] sm:$0xff]
        %v3646 = vld [vmem:[#allocation7 + $0x58] sm:$0xff]
        %v3647 = vld [vmem:[#allocation7 + $0x60] sm:$0xff]
        %v3648 = vld [vmem:[#allocation7 + $0x68] sm:$0xff]
        %v3649 = vld [vmem:[#allocation7 + $0x70] sm:$0xff]
        %v3650 = vld [vmem:[#allocation7 + $0x78] sm:$0xff]
        %v3651 = vld [vmem:[#allocation7 + $0x80] sm:$0xff]
        %v3652 = vld [vmem:[#allocation7 + $0x88] sm:$0xff]
        %v3653 = vld [vmem:[#allocation7 + $0x90] sm:$0xff]
        %v3654 = vld [vmem:[#allocation7 + $0x98] sm:$0xff]
        %v3655 = vld [vmem:[#allocation7 + $0xa0] sm:$0xff]
        %v3656 = vld [vmem:[#allocation7 + $0xa8] sm:$0xff]
        %v3657 = vld [vmem:[#allocation7 + $0xb0] sm:$0xff]
        %v3658 = vld [vmem:[#allocation7 + $0xb8] sm:$0xff]
        %v3659 = vld [vmem:[#allocation7 + $0xc0] sm:$0xff]
        %v3660 = vld [vmem:[#allocation7 + $0xc8] sm:$0xff]
        %v3661 = vld [vmem:[#allocation7 + $0xd0] sm:$0xff]
        %v3662 = vld [vmem:[#allocation7 + $0xd8] sm:$0xff]
        %v3663 = vld [vmem:[#allocation7 + $0xe0] sm:$0xff]
        %v3664 = vld [vmem:[#allocation7 + $0xe8] sm:$0xff]
        %v3665 = vld [vmem:[#allocation7 + $0xf0] sm:$0xff]
        %v3666 = vld [vmem:[#allocation7 + $0xf8] sm:$0xff]
        %v3667 = vld [vmem:[#allocation7 + $0x100] sm:$0xff]
        %v3668 = vld [vmem:[#allocation7 + $0x108] sm:$0xff]
        %v3669 = vld [vmem:[#allocation7 + $0x110] sm:$0xff]
        %v3670 = vld [vmem:[#allocation7 + $0x118] sm:$0xff]
        %v3671 = vld [vmem:[#allocation3] sm:$0xff]
        %v3672 = vld [vmem:[#allocation3 + $0x8] sm:$0xff]
        %v3673 = vld [vmem:[#allocation3 + $0x10] sm:$0xff]
        %v3674 = vld [vmem:[#allocation3 + $0x18] sm:$0xff]
        %v3675 = vld [vmem:[#allocation3 + $0x20] sm:$0xff]
        %v3676 = vld [vmem:[#allocation3 + $0x28] sm:$0xff]
        %v3677 = vld [vmem:[#allocation3 + $0x30] sm:$0xff]
        %v3678 = vld [vmem:[#allocation3 + $0x38] sm:$0xff]
        %v3679 = vld [vmem:[#allocation3 + $0x40] sm:$0xff]
        %v3680 = vld [vmem:[#allocation3 + $0x48] sm:$0xff]
        %v3681 = vld [vmem:[#allocation3 + $0x50] sm:$0xff]
        %v3682 = vld [vmem:[#allocation3 + $0x58] sm:$0xff]
        %v3683 = vld [vmem:[#allocation3 + $0x60] sm:$0xff]
        %v3684 = vld [vmem:[#allocation3 + $0x68] sm:$0xff]
        %v3685 = vld [vmem:[#allocation3 + $0x70] sm:$0xff]
        %v3686 = vld [vmem:[#allocation3 + $0x78] sm:$0xff]
        %v3687 = vld [vmem:[#allocation3 + $0x80] sm:$0xff]
        %v3688 = vld [vmem:[#allocation3 + $0x88] sm:$0xff]
        %v3689 = vld [vmem:[#allocation3 + $0x90] sm:$0xff]
        %v3690 = vld [vmem:[#allocation3 + $0x98] sm:$0xff]
        %v3691 = vld [vmem:[#allocation3 + $0xa0] sm:$0xff]
        %v3692 = vld [vmem:[#allocation3 + $0xa8] sm:$0xff]
        %v3693 = vld [vmem:[#allocation3 + $0xb0] sm:$0xff]
        %v3694 = vld [vmem:[#allocation3 + $0xb8] sm:$0xff]
        %v3695 = vld [vmem:[#allocation3 + $0xc0] sm:$0xff]
        %v3696 = vld [vmem:[#allocation3 + $0xc8] sm:$0xff]
        %v3697 = vld [vmem:[#allocation3 + $0xd0] sm:$0xff]
        %v3698 = vld [vmem:[#allocation3 + $0xd8] sm:$0xff]
        %v3699 = vld [vmem:[#allocation3 + $0xe0] sm:$0xff]
        %v3700 = vld [vmem:[#allocation3 + $0xe8] sm:$0xff]
        %v3701 = vld [vmem:[#allocation3 + $0xf0] sm:$0xff]
        %v3702 = vld [vmem:[#allocation3 + $0xf8] sm:$0xff]
        %v3703 = vld [vmem:[#allocation3 + $0x100] sm:$0xff]
        %v3704 = vld [vmem:[#allocation3 + $0x108] sm:$0xff]
        %v3705 = vld [vmem:[#allocation3 + $0x110] sm:$0xff]
        %v3706 = vld [vmem:[#allocation3 + $0x118] sm:$0xff]
        %v3707 = vld [vmem:[#allocation3 + $0x120] sm:$0xff]
        %v3708 = vld [vmem:[#allocation3 + $0x128] sm:$0xff]
        %v3709 = vld [vmem:[#allocation3 + $0x130] sm:$0xff]
        %v3710 = vld [vmem:[#allocation3 + $0x138] sm:$0xff]
        %v3711 = vld [vmem:[#allocation3 + $0x140] sm:$0xff]
        %v3712 = vld [vmem:[#allocation3 + $0x148] sm:$0xff]
        %v3713 = vld [vmem:[#allocation3 + $0x150] sm:$0xff]
        %v3714 = vld [vmem:[#allocation3 + $0x158] sm:$0xff]
        %v3715 = vld [vmem:[#allocation3 + $0x160] sm:$0xff]
        %v3716 = vld [vmem:[#allocation3 + $0x168] sm:$0xff]
        %v3717 = vld [vmem:[#allocation3 + $0x170] sm:$0xff]
        %v3718 = vld [vmem:[#allocation3 + $0x178] sm:$0xff]
        %v3719 = vld [vmem:[#allocation3 + $0x180] sm:$0xff]
        %v3720 = vld [vmem:[#allocation3 + $0x188] sm:$0xff]
        %v3721 = vld [vmem:[#allocation3 + $0x190] sm:$0xff]
        %v3722 = vld [vmem:[#allocation3 + $0x198] sm:$0xff]
        %v3723 = vld [vmem:[#allocation3 + $0x1a0] sm:$0xff]
        %v3724 = vld [vmem:[#allocation3 + $0x1a8] sm:$0xff]
        %v3725 = vld [vmem:[#allocation3 + $0x1b0] sm:$0xff]
        %v3726 = vld [vmem:[#allocation3 + $0x1b8] sm:$0xff]
        %v3727 = vld [vmem:[#allocation3 + $0x1c0] sm:$0xff]
        %v3728 = vld [vmem:[#allocation3 + $0x1c8] sm:$0xff]
        %v3729 = vld [vmem:[#allocation3 + $0x1d0] sm:$0xff]
        %v3730 = vld [vmem:[#allocation3 + $0x1d8] sm:$0xff]
        %v3731 = vld [vmem:[#allocation3 + $0x1e0] sm:$0xff]
        %v3732 = vld [vmem:[#allocation3 + $0x1e8] sm:$0xff]
        %v3733 = vld [vmem:[#allocation3 + $0x1f0] sm:$0xff]
        %v3734 = vld [vmem:[#allocation3 + $0x1f8] sm:$0xff]
        %v3735 = vld [vmem:[#allocation3 + $0x200] sm:$0xff]
        %v3736 = vld [vmem:[#allocation3 + $0x208] sm:$0xff]
        %v3737 = vld [vmem:[#allocation3 + $0x210] sm:$0xff]
        %v3738 = vld [vmem:[#allocation3 + $0x218] sm:$0xff]
        %v3739 = vld [vmem:[#allocation3 + $0x220] sm:$0xff]
        %v3740 = vld [vmem:[#allocation3 + $0x228] sm:$0xff]
        %v3741 = vld [vmem:[#allocation3 + $0x230] sm:$0xff]
        %v3742 = vld [vmem:[#allocation3 + $0x238] sm:$0xff]
        %v3743 = vld [vmem:[#allocation3 + $0x240] sm:$0xff]
        %v3744 = vld [vmem:[#allocation3 + $0x248] sm:$0xff]
        %v3745 = vld [vmem:[#allocation3 + $0x250] sm:$0xff]
        %v3746 = vld [vmem:[#allocation3 + $0x258] sm:$0xff]
        %v3747 = vld [vmem:[#allocation3 + $0x260] sm:$0xff]
        %v3748 = vld [vmem:[#allocation3 + $0x268] sm:$0xff]
        %v3749 = vld [vmem:[#allocation3 + $0x270] sm:$0xff]
        %v3750 = vld [vmem:[#allocation3 + $0x278] sm:$0xff]
        %v3751 = vld [vmem:[#allocation3 + $0x280] sm:$0xff]
        %v3752 = vld [vmem:[#allocation3 + $0x288] sm:$0xff]
        %v3753 = vld [vmem:[#allocation3 + $0x290] sm:$0xff]
        %v3754 = vld [vmem:[#allocation3 + $0x298] sm:$0xff]
        %v3755 = vld [vmem:[#allocation3 + $0x2a0] sm:$0xff]
        %v3756 = vld [vmem:[#allocation3 + $0x2a8] sm:$0xff]
        %v3757 = vld [vmem:[#allocation3 + $0x2b0] sm:$0xff]
        %v3758 = vld [vmem:[#allocation3 + $0x2b8] sm:$0xff]
        %v3759 = vld [vmem:[#allocation3 + $0x2c0] sm:$0xff]
        %v3760 = vld [vmem:[#allocation3 + $0x2c8] sm:$0xff]
        %v3761 = vld [vmem:[#allocation3 + $0x2d0] sm:$0xff]
        %v3762 = vld [vmem:[#allocation3 + $0x2d8] sm:$0xff]
        %v3763 = vld [vmem:[#allocation3 + $0x2e0] sm:$0xff]
        %v3764 = vld [vmem:[#allocation3 + $0x2e8] sm:$0xff]
        %v3765 = vld [vmem:[#allocation3 + $0x2f0] sm:$0xff]
        %v3766 = vld [vmem:[#allocation3 + $0x2f8] sm:$0xff]
        %v3767 = vld [vmem:[#allocation3 + $0x300] sm:$0xff]
        %v3768 = vld [vmem:[#allocation3 + $0x308] sm:$0xff]
        %v3769 = vld [vmem:[#allocation3 + $0x310] sm:$0xff]
        %v3770 = vld [vmem:[#allocation3 + $0x318] sm:$0xff]
        %v3771 = vld [vmem:[#allocation3 + $0x320] sm:$0xff]
        %v3772 = vld [vmem:[#allocation3 + $0x328] sm:$0xff]
        %v3773 = vld [vmem:[#allocation3 + $0x330] sm:$0xff]
        %v3774 = vld [vmem:[#allocation3 + $0x338] sm:$0xff]
        %v3775 = vld [vmem:[#allocation3 + $0x340] sm:$0xff]
        %v3776 = vld [vmem:[#allocation3 + $0x348] sm:$0xff]
        %v3777 = vld [vmem:[#allocation3 + $0x350] sm:$0xff]
        %v3778 = vld [vmem:[#allocation3 + $0x358] sm:$0xff]
        %v3779 = vld [vmem:[#allocation3 + $0x360] sm:$0xff]
        %v3780 = vld [vmem:[#allocation3 + $0x368] sm:$0xff]
        %v3781 = vld [vmem:[#allocation3 + $0x370] sm:$0xff]
        %v3782 = vld [vmem:[#allocation3 + $0x378] sm:$0xff]
        %v3783 = vld [vmem:[#allocation3 + $0x380] sm:$0xff]
        %v3784 = vld [vmem:[#allocation3 + $0x388] sm:$0xff]
        %v3785 = vld [vmem:[#allocation3 + $0x390] sm:$0xff]
        %v3786 = vld [vmem:[#allocation3 + $0x398] sm:$0xff]
        %v3787 = vld [vmem:[#allocation3 + $0x3a0] sm:$0xff]
        %v3788 = vld [vmem:[#allocation3 + $0x3a8] sm:$0xff]
        %v3789 = vld [vmem:[#allocation3 + $0x3b0] sm:$0xff]
        %v3790 = vld [vmem:[#allocation3 + $0x3b8] sm:$0xff]
        %v3791 = vld [vmem:[#allocation3 + $0x3c0] sm:$0xff]
        %v3792 = vld [vmem:[#allocation3 + $0x3c8] sm:$0xff]
        %v3793 = vld [vmem:[#allocation3 + $0x3d0] sm:$0xff]
        %v3794 = vld [vmem:[#allocation3 + $0x3d8] sm:$0xff]
        %v3795 = vld [vmem:[#allocation3 + $0x3e0] sm:$0xff]
        %v3796 = vld [vmem:[#allocation3 + $0x3e8] sm:$0xff]
        %v3797 = vld [vmem:[#allocation3 + $0x3f0] sm:$0xff]
        %v3798 = vld [vmem:[#allocation3 + $0x3f8] sm:$0xff]
        %v3799 = vld [vmem:[#allocation3 + $0x400] sm:$0xff]
        %v3800 = vld [vmem:[#allocation3 + $0x408] sm:$0xff]
        %v3801 = vld [vmem:[#allocation3 + $0x410] sm:$0xff]
        %v3802 = vld [vmem:[#allocation3 + $0x418] sm:$0xff]
        %v3803 = vld [vmem:[#allocation3 + $0x420] sm:$0xff]
        %v3804 = vld [vmem:[#allocation3 + $0x428] sm:$0xff]
        %v3805 = vld [vmem:[#allocation3 + $0x430] sm:$0xff]
        %v3806 = vld [vmem:[#allocation3 + $0x438] sm:$0xff]
        %v3807 = vld [vmem:[#allocation3 + $0x440] sm:$0xff]
        %v3808 = vld [vmem:[#allocation3 + $0x448] sm:$0xff]
        %v3809 = vld [vmem:[#allocation3 + $0x450] sm:$0xff]
        %v3810 = vld [vmem:[#allocation3 + $0x458] sm:$0xff]
        %v3811 = vld [vmem:[#allocation3 + $0x460] sm:$0xff]
        %v3812 = vld [vmem:[#allocation3 + $0x468] sm:$0xff]
        %v3813 = vld [vmem:[#allocation3 + $0x470] sm:$0xff]
        %v3814 = vld [vmem:[#allocation3 + $0x478] sm:$0xff]
        %v3815 = vld [vmem:[#allocation3 + $0x480] sm:$0xff]
        %v3816 = vld [vmem:[#allocation3 + $0x488] sm:$0xff]
        %v3817 = vld [vmem:[#allocation3 + $0x490] sm:$0xff]
        %v3818 = vld [vmem:[#allocation3 + $0x498] sm:$0xff]
        %v3819 = vld [vmem:[#allocation3 + $0x4a0] sm:$0xff]
        %v3820 = vld [vmem:[#allocation3 + $0x4a8] sm:$0xff]
        %v3821 = vld [vmem:[#allocation3 + $0x4b0] sm:$0xff]
        %v3822 = vld [vmem:[#allocation3 + $0x4b8] sm:$0xff]
        %v3823 = vld [vmem:[#allocation3 + $0x4c0] sm:$0xff]
        %v3824 = vld [vmem:[#allocation3 + $0x4c8] sm:$0xff]
        %v3825 = vld [vmem:[#allocation3 + $0x4d0] sm:$0xff]
        %v3826 = vld [vmem:[#allocation3 + $0x4d8] sm:$0xff]
        %v3827 = vld [vmem:[#allocation3 + $0x4e0] sm:$0xff]
        %v3828 = vld [vmem:[#allocation3 + $0x4e8] sm:$0xff]
        %v3829 = vld [vmem:[#allocation3 + $0x4f0] sm:$0xff]
        %v3830 = vld [vmem:[#allocation3 + $0x4f8] sm:$0xff]
        %v3831 = vld [vmem:[#allocation3 + $0x500] sm:$0xff]
        %v3832 = vld [vmem:[#allocation3 + $0x508] sm:$0xff]
        %v3833 = vld [vmem:[#allocation3 + $0x510] sm:$0xff]
        %v3834 = vld [vmem:[#allocation3 + $0x518] sm:$0xff]
        %v3835 = vld [vmem:[#allocation3 + $0x520] sm:$0xff]
        %v3836 = vld [vmem:[#allocation3 + $0x528] sm:$0xff]
        %v3837 = vld [vmem:[#allocation3 + $0x530] sm:$0xff]
        %v3838 = vld [vmem:[#allocation3 + $0x538] sm:$0xff]
        %v3839 = vld [vmem:[#allocation3 + $0x540] sm:$0xff]
        %v3840 = vld [vmem:[#allocation3 + $0x548] sm:$0xff]
        %v3841 = vld [vmem:[#allocation3 + $0x550] sm:$0xff]
        %v3842 = vld [vmem:[#allocation3 + $0x558] sm:$0xff]
        %v3843 = vld [vmem:[#allocation3 + $0x560] sm:$0xff]
        %v3844 = vld [vmem:[#allocation3 + $0x568] sm:$0xff]
        %v3845 = vld [vmem:[#allocation3 + $0x570] sm:$0xff]
        %v3846 = vld [vmem:[#allocation3 + $0x578] sm:$0xff]
        %v3847 = vld [vmem:[#allocation3 + $0x580] sm:$0xff]
        %v3848 = vld [vmem:[#allocation3 + $0x588] sm:$0xff]
        %v3849 = vld [vmem:[#allocation3 + $0x590] sm:$0xff]
        %v3850 = vld [vmem:[#allocation3 + $0x598] sm:$0xff]
        %v3851 = vld [vmem:[#allocation3 + $0x5a0] sm:$0xff]
        %v3852 = vld [vmem:[#allocation3 + $0x5a8] sm:$0xff]
        %v3853 = vld [vmem:[#allocation3 + $0x5b0] sm:$0xff]
        %v3854 = vld [vmem:[#allocation3 + $0x5b8] sm:$0xff]
        %v3855 = vld [vmem:[#allocation3 + $0x5c0] sm:$0xff]
        %v3856 = vld [vmem:[#allocation3 + $0x5c8] sm:$0xff]
        %v3857 = vld [vmem:[#allocation3 + $0x5d0] sm:$0xff]
        %v3858 = vld [vmem:[#allocation3 + $0x5d8] sm:$0xff]
        %v3859 = vld [vmem:[#allocation3 + $0x5e0] sm:$0xff]
        %v3860 = vld [vmem:[#allocation3 + $0x5e8] sm:$0xff]
        %v3861 = vld [vmem:[#allocation3 + $0x5f0] sm:$0xff]
        %v3862 = vld [vmem:[#allocation3 + $0x5f8] sm:$0xff]
        %v3863 = vld [vmem:[#allocation3 + $0x600] sm:$0xff]
        %v3864 = vld [vmem:[#allocation3 + $0x608] sm:$0xff]
        %v3865 = vld [vmem:[#allocation3 + $0x610] sm:$0xff]
        %v3866 = vld [vmem:[#allocation3 + $0x618] sm:$0xff]
        %v3867 = vld [vmem:[#allocation3 + $0x620] sm:$0xff]
        %v3868 = vld [vmem:[#allocation3 + $0x628] sm:$0xff]
        %v3869 = vld [vmem:[#allocation3 + $0x630] sm:$0xff]
        %v3870 = vld [vmem:[#allocation3 + $0x638] sm:$0xff]
        %v3871 = vld [vmem:[#allocation3 + $0x640] sm:$0xff]
        %v3872 = vld [vmem:[#allocation3 + $0x648] sm:$0xff]
        %v3873 = vld [vmem:[#allocation3 + $0x650] sm:$0xff]
        %v3874 = vld [vmem:[#allocation3 + $0x658] sm:$0xff]
        %v3875 = vld [vmem:[#allocation3 + $0x660] sm:$0xff]
        %v3876 = vld [vmem:[#allocation3 + $0x668] sm:$0xff]
        %v3877 = vld [vmem:[#allocation3 + $0x670] sm:$0xff]
        %v3878 = vld [vmem:[#allocation3 + $0x678] sm:$0xff]
        %v3879 = vld [vmem:[#allocation3 + $0x680] sm:$0xff]
        %v3880 = vld [vmem:[#allocation3 + $0x688] sm:$0xff]
        %v3881 = vld [vmem:[#allocation3 + $0x690] sm:$0xff]
        %v3882 = vld [vmem:[#allocation3 + $0x698] sm:$0xff]
        %v3883 = vld [vmem:[#allocation3 + $0x6a0] sm:$0xff]
        %v3884 = vld [vmem:[#allocation3 + $0x6a8] sm:$0xff]
        %v3885 = vld [vmem:[#allocation3 + $0x6b0] sm:$0xff]
        %v3886 = vld [vmem:[#allocation3 + $0x6b8] sm:$0xff]
        %v3887 = vld [vmem:[#allocation3 + $0x6c0] sm:$0xff]
        %v3888 = vld [vmem:[#allocation3 + $0x6c8] sm:$0xff]
        %v3889 = vld [vmem:[#allocation3 + $0x6d0] sm:$0xff]
        %v3890 = vld [vmem:[#allocation3 + $0x6d8] sm:$0xff]
        %v3891 = vld [vmem:[#allocation3 + $0x6e0] sm:$0xff]
        %v3892 = vld [vmem:[#allocation3 + $0x6e8] sm:$0xff]
        %v3893 = vld [vmem:[#allocation3 + $0x6f0] sm:$0xff]
        %v3894 = vld [vmem:[#allocation3 + $0x6f8] sm:$0xff]
        %v3895 = vld [vmem:[#allocation3 + $0x700] sm:$0xff]
        %v3896 = vld [vmem:[#allocation3 + $0x708] sm:$0xff]
        %v3897 = vld [vmem:[#allocation3 + $0x710] sm:$0xff]
        %v3898 = vld [vmem:[#allocation3 + $0x718] sm:$0xff]
        %v3899 = vld [vmem:[#allocation3 + $0x720] sm:$0xff]
        %v3900 = vld [vmem:[#allocation3 + $0x728] sm:$0xff]
        %v3901 = vld [vmem:[#allocation3 + $0x730] sm:$0xff]
        %v3902 = vld [vmem:[#allocation3 + $0x738] sm:$0xff]
        %v3903 = vld [vmem:[#allocation3 + $0x740] sm:$0xff]
        %v3904 = vld [vmem:[#allocation3 + $0x748] sm:$0xff]
        %v3905 = vld [vmem:[#allocation3 + $0x750] sm:$0xff]
        %v3906 = vld [vmem:[#allocation3 + $0x758] sm:$0xff]
        %v3907 = vld [vmem:[#allocation3 + $0x760] sm:$0xff]
        %v3908 = vld [vmem:[#allocation3 + $0x768] sm:$0xff]
        %v3909 = vld [vmem:[#allocation3 + $0x770] sm:$0xff]
        %v3910 = vld [vmem:[#allocation3 + $0x778] sm:$0xff]
        %v3911 = vld [vmem:[#allocation3 + $0x780] sm:$0xff]
        %v3912 = vld [vmem:[#allocation3 + $0x788] sm:$0xff]
        %v3913 = vld [vmem:[#allocation3 + $0x790] sm:$0xff]
        %v3914 = vld [vmem:[#allocation3 + $0x798] sm:$0xff]
        %v3915 = vld [vmem:[#allocation3 + $0x7a0] sm:$0xff]
        %v3916 = vld [vmem:[#allocation3 + $0x7a8] sm:$0xff]
        %v3917 = vld [vmem:[#allocation3 + $0x7b0] sm:$0xff]
        %v3918 = vld [vmem:[#allocation3 + $0x7b8] sm:$0xff]
        %v3919 = vld [vmem:[#allocation3 + $0x7c0] sm:$0xff]
        %v3920 = vld [vmem:[#allocation3 + $0x7c8] sm:$0xff]
        %v3921 = vld [vmem:[#allocation3 + $0x7d0] sm:$0xff]
        %v3922 = vld [vmem:[#allocation3 + $0x7d8] sm:$0xff]
        %v3923 = vld [vmem:[#allocation3 + $0x7e0] sm:$0xff]
        %v3924 = vld [vmem:[#allocation3 + $0x7e8] sm:$0xff]
        %v3925 = vld [vmem:[#allocation3 + $0x7f0] sm:$0xff]
        %v3926 = vld [vmem:[#allocation3 + $0x7f8] sm:$0xff]
        %v3927 = vld [vmem:[#allocation3 + $0x800] sm:$0xff]
        %v3928 = vld [vmem:[#allocation3 + $0x808] sm:$0xff]
        %v3929 = vld [vmem:[#allocation3 + $0x810] sm:$0xff]
        %v3930 = vld [vmem:[#allocation3 + $0x818] sm:$0xff]
        %v3931 = vld [vmem:[#allocation3 + $0x820] sm:$0xff]
        %v3932 = vld [vmem:[#allocation3 + $0x828] sm:$0xff]
        %v3933 = vld [vmem:[#allocation3 + $0x830] sm:$0xff]
        %v3934 = vld [vmem:[#allocation3 + $0x838] sm:$0xff]
        %v3935 = vld [vmem:[#allocation3 + $0x840] sm:$0xff]
        %v3936 = vld [vmem:[#allocation3 + $0x848] sm:$0xff]
        %v3937 = vld [vmem:[#allocation3 + $0x850] sm:$0xff]
        %v3938 = vld [vmem:[#allocation3 + $0x858] sm:$0xff]
        %v3939 = vld [vmem:[#allocation3 + $0x860] sm:$0xff]
        %v3940 = vld [vmem:[#allocation3 + $0x868] sm:$0xff]
        %v3941 = vld [vmem:[#allocation3 + $0x870] sm:$0xff]
        %v3942 = vld [vmem:[#allocation3 + $0x878] sm:$0xff]
        %v3943 = vld [vmem:[#allocation3 + $0x880] sm:$0xff]
        %v3944 = vld [vmem:[#allocation3 + $0x888] sm:$0xff]
        %v3945 = vld [vmem:[#allocation3 + $0x890] sm:$0xff]
        %v3946 = vld [vmem:[#allocation3 + $0x898] sm:$0xff]
        %v3947 = vld [vmem:[#allocation3 + $0x8a0] sm:$0xff]
        %v3948 = vld [vmem:[#allocation3 + $0x8a8] sm:$0xff]
        %v3949 = vld [vmem:[#allocation3 + $0x8b0] sm:$0xff]
        %v3950 = vld [vmem:[#allocation3 + $0x8b8] sm:$0xff]
        %v3951 = vld [vmem:[#allocation3 + $0x8c0] sm:$0xff]
        %v3952 = vld [vmem:[#allocation3 + $0x8c8] sm:$0xff]
        %v3953 = vld [vmem:[#allocation3 + $0x8d0] sm:$0xff]
        %v3954 = vld [vmem:[#allocation3 + $0x8d8] sm:$0xff]
        %v3955 = vld [vmem:[#allocation3 + $0x8e0] sm:$0xff]
        %v3956 = vld [vmem:[#allocation3 + $0x8e8] sm:$0xff]
        %v3957 = vld [vmem:[#allocation3 + $0x8f0] sm:$0xff]
        %v3958 = vld [vmem:[#allocation3 + $0x8f8] sm:$0xff]
        %v3959 = vld [vmem:[#allocation3 + $0x900] sm:$0xff]
        %v3960 = vld [vmem:[#allocation3 + $0x908] sm:$0xff]
        %v3961 = vld [vmem:[#allocation3 + $0x910] sm:$0xff]
        %v3962 = vld [vmem:[#allocation3 + $0x918] sm:$0xff]
        %v3963 = vld [vmem:[#allocation3 + $0x920] sm:$0xff]
        %v3964 = vld [vmem:[#allocation3 + $0x928] sm:$0xff]
        %v3965 = vld [vmem:[#allocation3 + $0x930] sm:$0xff]
        %v3966 = vld [vmem:[#allocation3 + $0x938] sm:$0xff]
        %v3967 = vld [vmem:[#allocation3 + $0x940] sm:$0xff]
        %v3968 = vld [vmem:[#allocation3 + $0x948] sm:$0xff]
        %v3969 = vld [vmem:[#allocation3 + $0x950] sm:$0xff]
        %v3970 = vld [vmem:[#allocation3 + $0x958] sm:$0xff]
        %v3971 = vld [vmem:[#allocation3 + $0x960] sm:$0xff]
        %v3972 = vld [vmem:[#allocation3 + $0x968] sm:$0xff]
        %v3973 = vld [vmem:[#allocation3 + $0x970] sm:$0xff]
        %v3974 = vld [vmem:[#allocation3 + $0x978] sm:$0xff]
        %v3975 = vld [vmem:[#allocation3 + $0x980] sm:$0xff]
        %v3976 = vld [vmem:[#allocation3 + $0x988] sm:$0xff]
        %v3977 = vld [vmem:[#allocation3 + $0x990] sm:$0xff]
        %v3978 = vld [vmem:[#allocation3 + $0x998] sm:$0xff]
        %v3979 = vld [vmem:[#allocation3 + $0x9a0] sm:$0xff]
        %v3980 = vld [vmem:[#allocation3 + $0x9a8] sm:$0xff]
        %v3981 = vld [vmem:[#allocation3 + $0x9b0] sm:$0xff]
        %v3982 = vld [vmem:[#allocation3 + $0x9b8] sm:$0xff]
        %v3983 = vld [vmem:[#allocation3 + $0x9c0] sm:$0xff]
        %v3984 = vld [vmem:[#allocation3 + $0x9c8] sm:$0xff]
        %v3985 = vld [vmem:[#allocation3 + $0x9d0] sm:$0xff]
        %v3986 = vld [vmem:[#allocation3 + $0x9d8] sm:$0xff]
        %v3987 = vld [vmem:[#allocation3 + $0x9e0] sm:$0xff]
        %v3988 = vld [vmem:[#allocation3 + $0x9e8] sm:$0xff]
        %v3989 = vld [vmem:[#allocation3 + $0x9f0] sm:$0xff]
        %v3990 = vld [vmem:[#allocation3 + $0x9f8] sm:$0xff]
        %v3991 = vld [vmem:[#allocation3 + $0xa00] sm:$0xff]
        %v3992 = vld [vmem:[#allocation3 + $0xa08] sm:$0xff]
        %v3993 = vld [vmem:[#allocation3 + $0xa10] sm:$0xff]
        %v3994 = vld [vmem:[#allocation3 + $0xa18] sm:$0xff]
        %v3995 = vld [vmem:[#allocation3 + $0xa20] sm:$0xff]
        %v3996 = vld [vmem:[#allocation3 + $0xa28] sm:$0xff]
        %v3997 = vld [vmem:[#allocation3 + $0xa30] sm:$0xff]
        %v3998 = vld [vmem:[#allocation3 + $0xa38] sm:$0xff]
        %v3999 = vld [vmem:[#allocation3 + $0xa40] sm:$0xff]
        %v4000 = vld [vmem:[#allocation3 + $0xa48] sm:$0xff]
        %v4001 = vld [vmem:[#allocation3 + $0xa50] sm:$0xff]
        %v4002 = vld [vmem:[#allocation3 + $0xa58] sm:$0xff]
        %v4003 = vld [vmem:[#allocation3 + $0xa60] sm:$0xff]
        %v4004 = vld [vmem:[#allocation3 + $0xa68] sm:$0xff]
        %v4005 = vld [vmem:[#allocation3 + $0xa70] sm:$0xff]
        %v4006 = vld [vmem:[#allocation3 + $0xa78] sm:$0xff]
        %v4007 = vld [vmem:[#allocation3 + $0xa80] sm:$0xff]
        %v4008 = vld [vmem:[#allocation3 + $0xa88] sm:$0xff]
        %v4009 = vld [vmem:[#allocation3 + $0xa90] sm:$0xff]
        %v4010 = vld [vmem:[#allocation3 + $0xa98] sm:$0xff]
        %v4011 = vld [vmem:[#allocation3 + $0xaa0] sm:$0xff]
        %v4012 = vld [vmem:[#allocation3 + $0xaa8] sm:$0xff]
        %v4013 = vld [vmem:[#allocation3 + $0xab0] sm:$0xff]
        %v4014 = vld [vmem:[#allocation3 + $0xab8] sm:$0xff]
        %v4015 = vld [vmem:[#allocation3 + $0xac0] sm:$0xff]
        %v4016 = vld [vmem:[#allocation3 + $0xac8] sm:$0xff]
        %v4017 = vld [vmem:[#allocation3 + $0xad0] sm:$0xff]
        %v4018 = vld [vmem:[#allocation3 + $0xad8] sm:$0xff]
        %v4019 = vld [vmem:[#allocation3 + $0xae0] sm:$0xff]
        %v4020 = vld [vmem:[#allocation3 + $0xae8] sm:$0xff]
        %v4021 = vld [vmem:[#allocation3 + $0xaf0] sm:$0xff]
        %v4022 = vld [vmem:[#allocation3 + $0xaf8] sm:$0xff]
        %v4023 = vld [vmem:[#allocation3 + $0xb00] sm:$0xff]
        %v4024 = vld [vmem:[#allocation3 + $0xb08] sm:$0xff]
        %v4025 = vld [vmem:[#allocation3 + $0xb10] sm:$0xff]
        %v4026 = vld [vmem:[#allocation3 + $0xb18] sm:$0xff]
        %v4027 = vld [vmem:[#allocation3 + $0xb20] sm:$0xff]
        %v4028 = vld [vmem:[#allocation3 + $0xb28] sm:$0xff]
        %v4029 = vld [vmem:[#allocation3 + $0xb30] sm:$0xff]
        %v4030 = vld [vmem:[#allocation3 + $0xb38] sm:$0xff]
        %v4031 = vld [vmem:[#allocation3 + $0xb40] sm:$0xff]
        %v4032 = vld [vmem:[#allocation3 + $0xb48] sm:$0xff]
        %v4033 = vld [vmem:[#allocation3 + $0xb50] sm:$0xff]
        %v4034 = vld [vmem:[#allocation3 + $0xb58] sm:$0xff]
        %v4035 = vld [vmem:[#allocation3 + $0xb60] sm:$0xff]
        %v4036 = vld [vmem:[#allocation3 + $0xb68] sm:$0xff]
        %v4037 = vld [vmem:[#allocation3 + $0xb70] sm:$0xff]
        %v4038 = vld [vmem:[#allocation3 + $0xb78] sm:$0xff]
        %v4039 = vld [vmem:[#allocation3 + $0xb80] sm:$0xff]
        %v4040 = vld [vmem:[#allocation3 + $0xb88] sm:$0xff]
        %v4041 = vld [vmem:[#allocation3 + $0xb90] sm:$0xff]
        %v4042 = vld [vmem:[#allocation3 + $0xb98] sm:$0xff]
        %v4043 = vld [vmem:[#allocation3 + $0xba0] sm:$0xff]
        %v4044 = vld [vmem:[#allocation3 + $0xba8] sm:$0xff]
        %v4045 = vld [vmem:[#allocation3 + $0xbb0] sm:$0xff]
        %v4046 = vld [vmem:[#allocation3 + $0xbb8] sm:$0xff]
        %v4047 = vld [vmem:[#allocation3 + $0xbc0] sm:$0xff]
        %v4048 = vld [vmem:[#allocation3 + $0xbc8] sm:$0xff]
        %v4049 = vld [vmem:[#allocation3 + $0xbd0] sm:$0xff]
        %v4050 = vld [vmem:[#allocation3 + $0xbd8] sm:$0xff]
        %v4051 = vld [vmem:[#allocation3 + $0xbe0] sm:$0xff]
        %v4052 = vld [vmem:[#allocation3 + $0xbe8] sm:$0xff]
        %v4053 = vld [vmem:[#allocation3 + $0xbf0] sm:$0xff]
        %v4054 = vld [vmem:[#allocation3 + $0xbf8] sm:$0xff]
        %v4055 = vld [vmem:[#allocation3 + $0xc00] sm:$0xff]
        %v4056 = vld [vmem:[#allocation3 + $0xc08] sm:$0xff]
        %v4057 = vld [vmem:[#allocation3 + $0xc10] sm:$0xff]
        %v4058 = vld [vmem:[#allocation3 + $0xc18] sm:$0xff]
        %v4059 = vld [vmem:[#allocation3 + $0xc20] sm:$0xff]
        %v4060 = vld [vmem:[#allocation3 + $0xc28] sm:$0xff]
        %v4061 = vld [vmem:[#allocation3 + $0xc30] sm:$0xff]
        %v4062 = vld [vmem:[#allocation3 + $0xc38] sm:$0xff]
        %v4063 = vld [vmem:[#allocation3 + $0xc40] sm:$0xff]
        %v4064 = vld [vmem:[#allocation3 + $0xc48] sm:$0xff]
        %v4065 = vld [vmem:[#allocation3 + $0xc50] sm:$0xff]
        %v4066 = vld [vmem:[#allocation3 + $0xc58] sm:$0xff]
        %v4067 = vld [vmem:[#allocation3 + $0xc60] sm:$0xff]
        %v4068 = vld [vmem:[#allocation3 + $0xc68] sm:$0xff]
        %v4069 = vld [vmem:[#allocation3 + $0xc70] sm:$0xff]
        %v4070 = vld [vmem:[#allocation3 + $0xc78] sm:$0xff]
        %v4071 = vld [vmem:[#allocation3 + $0xc80] sm:$0xff]
        %v4072 = vld [vmem:[#allocation3 + $0xc88] sm:$0xff]
        %v4073 = vld [vmem:[#allocation3 + $0xc90] sm:$0xff]
        %v4074 = vld [vmem:[#allocation3 + $0xc98] sm:$0xff]
        %v4075 = vld [vmem:[#allocation3 + $0xca0] sm:$0xff]
        %v4076 = vld [vmem:[#allocation3 + $0xca8] sm:$0xff]
        %v4077 = vld [vmem:[#allocation3 + $0xcb0] sm:$0xff]
        %v4078 = vld [vmem:[#allocation3 + $0xcb8] sm:$0xff]
        %vm4079 = vcmask 523264
        %v4081 = vsel %vm4079, %v3643, 0
        %v4084 = vsel %vm4079, %v3652, 0
        %v4087 = vsel %vm4079, %v3661, 0
        %v4090 = vsel %vm4079, %v3670, 0
        %4092 = vmatprep.subr.mxu0 %v3717
        %4093 = vmatpush1.msra.mxu0 %v3716
        %4094 = vmatprep.subr.mxu0 %v3714
        %4095 = vmatpush1.msra.mxu0 %v3713
        %4096 = vmatprep.subr.mxu0 %v3711
        %4097 = vmatpush1.msra.mxu0 %v3710
        %4098 = vmatprep.subr.mxu0 %v3708
        %4099 = vmatpush1.msra.mxu0 %v3707
        %4100 = vmatprep.subr.mxu0 %v3705
        %4101 = vmatpush1.msra.mxu0 %v3704
        %4102 = vmatprep.subr.mxu0 %v3702
        %4103 = vmatpush1.msra.mxu0 %v3701
        %4104 = vmatprep.subr.mxu0 %v3699
        %4105 = vmatpush1.msra.mxu0 %v3698
        %4106 = vmatprep.subr.mxu0 %v3696
        %4107 = vmatpush1.msra.mxu0 %v3695
        %4108 = vmatprep.subr.mxu0 %v3693
        %4109 = vmatpush1.msra.mxu0 %v3692
        %4110 = vmatprep.subr.mxu0 %v3690
        %4111 = vmatpush1.msra.mxu0 %v3689
        %4112 = vmatprep.subr.mxu0 %v3687
        %4113 = vmatpush1.msra.mxu0 %v3686
        %4114 = vmatprep.subr.mxu0 %v3684
        %4115 = vmatpush1.msra.mxu0 %v3683
        %4116 = vmatprep.subr.mxu0 %v3681
        %4117 = vmatpush1.msra.mxu0 %v3680
        %4118 = vmatprep.subr.mxu0 %v3678
        %4119 = vmatpush1.msra.mxu0 %v3677
        %4120 = vmatprep.subr.mxu0 %v3675
        %4121 = vmatpush1.msra.mxu0 %v3674
        %4122 = vmatprep.subr.mxu0 %v3672
        %4123 = vmatpush1.msra.mxu0 %v3671
        %4124 = vmatprep.subr.mxu0 %v3765
        %4125 = vmatpush2.msra.mxu0 %v3764
        %4126 = vmatprep.subr.mxu0 %v3762
        %4127 = vmatpush2.msra.mxu0 %v3761
        %4128 = vmatprep.subr.mxu0 %v3759
        %4129 = vmatpush2.msra.mxu0 %v3758
        %4130 = vmatprep.subr.mxu0 %v3756
        %4131 = vmatpush2.msra.mxu0 %v3755
        %4132 = vmatprep.subr.mxu0 %v3753
        %4133 = vmatpush2.msra.mxu0 %v3752
        %4134 = vmatprep.subr.mxu0 %v3750
        %4135 = vmatpush2.msra.mxu0 %v3749
        %4136 = vmatprep.subr.mxu0 %v3747
        %4137 = vmatpush2.msra.mxu0 %v3746
        %4138 = vmatprep.subr.mxu0 %v3744
        %4139 = vmatpush2.msra.mxu0 %v3743
        %4140 = vmatprep.subr.mxu0 %v3741
        %4141 = vmatpush2.msra.mxu0 %v3740
        %4142 = vmatprep.subr.mxu0 %v3738
        %4143 = vmatpush2.msra.mxu0 %v3737
        %4144 = vmatprep.subr.mxu0 %v3735
        %4145 = vmatpush2.msra.mxu0 %v3734
        %4146 = vmatprep.subr.mxu0 %v3732
        %4147 = vmatpush2.msra.mxu0 %v3731
        %4148 = vmatprep.subr.mxu0 %v3729
        %4149 = vmatpush2.msra.mxu0 %v3728
        %4150 = vmatprep.subr.mxu0 %v3726
        %4151 = vmatpush2.msra.mxu0 %v3725
        %4152 = vmatprep.subr.mxu0 %v3723
        %4153 = vmatpush2.msra.mxu0 %v3722
        %4154 = vmatprep.subr.mxu0 %v3720
        %4155 = vmatpush2.msra.mxu0 %v3719
        %4156 = vmatprep.mubr.f32.mxu0 %v3636
        %4157 = vmatmul.mubr.f32.gmra.mxu0 %v3635
        %v4158 = vpop.f32.mrf.mxu0
        %v4159 = vadd.f32 0.0, %v4158
        %v4160 = vpop.f32.mrf.mxu0
        %v4161 = vadd.f32 0.0, %v4160
        %4162 = vmatprep.mubr.f32.mxu0 %v3645
        %4163 = vmatmul.mubr.f32.gmra.mxu0 %v3644
        %v4164 = vpop.f32.mrf.mxu0
        %v4165 = vadd.f32 0.0, %v4164
        %v4166 = vpop.f32.mrf.mxu0
        %v4167 = vadd.f32 0.0, %v4166
        %4168 = vmatprep.mubr.f32.mxu0 %v3654
        %4169 = vmatmul.mubr.f32.gmra.mxu0 %v3653
        %v4170 = vpop.f32.mrf.mxu0
        %v4171 = vadd.f32 0.0, %v4170
        %v4172 = vpop.f32.mrf.mxu0
        %v4173 = vadd.f32 0.0, %v4172
        %4174 = vmatprep.mubr.f32.mxu0 %v3663
        %4175 = vmatmul.mubr.f32.gmra.mxu0 %v3662
        %v4176 = vpop.f32.mrf.mxu0
        %v4177 = vadd.f32 0.0, %v4176
        %v4178 = vpop.f32.mrf.mxu0
        %v4179 = vadd.f32 0.0, %v4178
        %4180 = vdwg.mxu0
        %4181 = vmatprep.subr.mxu0 %v3813
        %4182 = vmatpush1.msra.mxu0 %v3812
        %4183 = vmatprep.subr.mxu0 %v3810
        %4184 = vmatpush1.msra.mxu0 %v3809
        %4185 = vmatprep.subr.mxu0 %v3807
        %4186 = vmatpush1.msra.mxu0 %v3806
        %4187 = vmatprep.subr.mxu0 %v3804
        %4188 = vmatpush1.msra.mxu0 %v3803
        %4189 = vmatprep.subr.mxu0 %v3801
        %4190 = vmatpush1.msra.mxu0 %v3800
        %4191 = vmatprep.subr.mxu0 %v3798
        %4192 = vmatpush1.msra.mxu0 %v3797
        %4193 = vmatprep.subr.mxu0 %v3795
        %4194 = vmatpush1.msra.mxu0 %v3794
        %4195 = vmatprep.subr.mxu0 %v3792
        %4196 = vmatpush1.msra.mxu0 %v3791
        %4197 = vmatprep.subr.mxu0 %v3789
        %4198 = vmatpush1.msra.mxu0 %v3788
        %4199 = vmatprep.subr.mxu0 %v3786
        %4200 = vmatpush1.msra.mxu0 %v3785
        %4201 = vmatprep.subr.mxu0 %v3783
        %4202 = vmatpush1.msra.mxu0 %v3782
        %4203 = vmatprep.subr.mxu0 %v3780
        %4204 = vmatpush1.msra.mxu0 %v3779
        %4205 = vmatprep.subr.mxu0 %v3777
        %4206 = vmatpush1.msra.mxu0 %v3776
        %4207 = vmatprep.subr.mxu0 %v3774
        %4208 = vmatpush1.msra.mxu0 %v3773
        %4209 = vmatprep.subr.mxu0 %v3771
        %4210 = vmatpush1.msra.mxu0 %v3770
        %4211 = vmatprep.subr.mxu0 %v3768
        %4212 = vmatpush1.msra.mxu0 %v3767
        %4213 = vmatprep.subr.mxu0 %v3861
        %4214 = vmatpush2.msra.mxu0 %v3860
        %4215 = vmatprep.subr.mxu0 %v3858
        %4216 = vmatpush2.msra.mxu0 %v3857
        %4217 = vmatprep.subr.mxu0 %v3855
        %4218 = vmatpush2.msra.mxu0 %v3854
        %4219 = vmatprep.subr.mxu0 %v3852
        %4220 = vmatpush2.msra.mxu0 %v3851
        %4221 = vmatprep.subr.mxu0 %v3849
        %4222 = vmatpush2.msra.mxu0 %v3848
        %4223 = vmatprep.subr.mxu0 %v3846
        %4224 = vmatpush2.msra.mxu0 %v3845
        %4225 = vmatprep.subr.mxu0 %v3843
        %4226 = vmatpush2.msra.mxu0 %v3842
        %4227 = vmatprep.subr.mxu0 %v3840
        %4228 = vmatpush2.msra.mxu0 %v3839
        %4229 = vmatprep.subr.mxu0 %v3837
        %4230 = vmatpush2.msra.mxu0 %v3836
        %4231 = vmatprep.subr.mxu0 %v3834
        %4232 = vmatpush2.msra.mxu0 %v3833
        %4233 = vmatprep.subr.mxu0 %v3831
        %4234 = vmatpush2.msra.mxu0 %v3830
        %4235 = vmatprep.subr.mxu0 %v3828
        %4236 = vmatpush2.msra.mxu0 %v3827
        %4237 = vmatprep.subr.mxu0 %v3825
        %4238 = vmatpush2.msra.mxu0 %v3824
        %4239 = vmatprep.subr.mxu0 %v3822
        %4240 = vmatpush2.msra.mxu0 %v3821
        %4241 = vmatprep.subr.mxu0 %v3819
        %4242 = vmatpush2.msra.mxu0 %v3818
        %4243 = vmatprep.subr.mxu0 %v3816
        %4244 = vmatpush2.msra.mxu0 %v3815
        %4245 = vmatprep.mubr.f32.mxu0 %v3638
        %4246 = vmatmul.mubr.f32.gmra.mxu0 %v3637
        %v4247 = vpop.f32.mrf.mxu0
        %v4248 = vadd.f32 %v4159, %v4247
        %v4249 = vpop.f32.mrf.mxu0
        %v4250 = vadd.f32 %v4161, %v4249
        %4251 = vmatprep.mubr.f32.mxu0 %v3647
        %4252 = vmatmul.mubr.f32.gmra.mxu0 %v3646
        %v4253 = vpop.f32.mrf.mxu0
        %v4254 = vadd.f32 %v4165, %v4253
        %v4255 = vpop.f32.mrf.mxu0
        %v4256 = vadd.f32 %v4167, %v4255
        %4257 = vmatprep.mubr.f32.mxu0 %v3656
        %4258 = vmatmul.mubr.f32.gmra.mxu0 %v3655
        %v4259 = vpop.f32.mrf.mxu0
        %v4260 = vadd.f32 %v4171, %v4259
        %v4261 = vpop.f32.mrf.mxu0
        %v4262 = vadd.f32 %v4173, %v4261
        %4263 = vmatprep.mubr.f32.mxu0 %v3665
        %4264 = vmatmul.mubr.f32.gmra.mxu0 %v3664
        %v4265 = vpop.f32.mrf.mxu0
        %v4266 = vadd.f32 %v4177, %v4265
        %v4267 = vpop.f32.mrf.mxu0
        %v4268 = vadd.f32 %v4179, %v4267
        %4269 = vdwg.mxu0
        %4270 = vmatprep.subr.mxu0 %v3909
        %4271 = vmatpush1.msra.mxu0 %v3908
        %4272 = vmatprep.subr.mxu0 %v3906
        %4273 = vmatpush1.msra.mxu0 %v3905
        %4274 = vmatprep.subr.mxu0 %v3903
        %4275 = vmatpush1.msra.mxu0 %v3902
        %4276 = vmatprep.subr.mxu0 %v3900
        %4277 = vmatpush1.msra.mxu0 %v3899
        %4278 = vmatprep.subr.mxu0 %v3897
        %4279 = vmatpush1.msra.mxu0 %v3896
        %4280 = vmatprep.subr.mxu0 %v3894
        %4281 = vmatpush1.msra.mxu0 %v3893
        %4282 = vmatprep.subr.mxu0 %v3891
        %4283 = vmatpush1.msra.mxu0 %v3890
        %4284 = vmatprep.subr.mxu0 %v3888
        %4285 = vmatpush1.msra.mxu0 %v3887
        %4286 = vmatprep.subr.mxu0 %v3885
        %4287 = vmatpush1.msra.mxu0 %v3884
        %4288 = vmatprep.subr.mxu0 %v3882
        %4289 = vmatpush1.msra.mxu0 %v3881
        %4290 = vmatprep.subr.mxu0 %v3879
        %4291 = vmatpush1.msra.mxu0 %v3878
        %4292 = vmatprep.subr.mxu0 %v3876
        %4293 = vmatpush1.msra.mxu0 %v3875
        %4294 = vmatprep.subr.mxu0 %v3873
        %4295 = vmatpush1.msra.mxu0 %v3872
        %4296 = vmatprep.subr.mxu0 %v3870
        %4297 = vmatpush1.msra.mxu0 %v3869
        %4298 = vmatprep.subr.mxu0 %v3867
        %4299 = vmatpush1.msra.mxu0 %v3866
        %4300 = vmatprep.subr.mxu0 %v3864
        %4301 = vmatpush1.msra.mxu0 %v3863
        %4302 = vmatprep.subr.mxu0 %v3957
        %4303 = vmatpush2.msra.mxu0 %v3956
        %4304 = vmatprep.subr.mxu0 %v3954
        %4305 = vmatpush2.msra.mxu0 %v3953
        %4306 = vmatprep.subr.mxu0 %v3951
        %4307 = vmatpush2.msra.mxu0 %v3950
        %4308 = vmatprep.subr.mxu0 %v3948
        %4309 = vmatpush2.msra.mxu0 %v3947
        %4310 = vmatprep.subr.mxu0 %v3945
        %4311 = vmatpush2.msra.mxu0 %v3944
        %4312 = vmatprep.subr.mxu0 %v3942
        %4313 = vmatpush2.msra.mxu0 %v3941
        %4314 = vmatprep.subr.mxu0 %v3939
        %4315 = vmatpush2.msra.mxu0 %v3938
        %4316 = vmatprep.subr.mxu0 %v3936
        %4317 = vmatpush2.msra.mxu0 %v3935
        %4318 = vmatprep.subr.mxu0 %v3933
        %4319 = vmatpush2.msra.mxu0 %v3932
        %4320 = vmatprep.subr.mxu0 %v3930
        %4321 = vmatpush2.msra.mxu0 %v3929
        %4322 = vmatprep.subr.mxu0 %v3927
        %4323 = vmatpush2.msra.mxu0 %v3926
        %4324 = vmatprep.subr.mxu0 %v3924
        %4325 = vmatpush2.msra.mxu0 %v3923
        %4326 = vmatprep.subr.mxu0 %v3921
        %4327 = vmatpush2.msra.mxu0 %v3920
        %4328 = vmatprep.subr.mxu0 %v3918
        %4329 = vmatpush2.msra.mxu0 %v3917
        %4330 = vmatprep.subr.mxu0 %v3915
        %4331 = vmatpush2.msra.mxu0 %v3914
        %4332 = vmatprep.subr.mxu0 %v3912
        %4333 = vmatpush2.msra.mxu0 %v3911
        %4334 = vmatprep.mubr.f32.mxu0 %v3640
        %4335 = vmatmul.mubr.f32.gmra.mxu0 %v3639
        %v4336 = vpop.f32.mrf.mxu0
        %v4337 = vadd.f32 %v4248, %v4336
        %v4338 = vpop.f32.mrf.mxu0
        %v4339 = vadd.f32 %v4250, %v4338
        %4340 = vmatprep.mubr.f32.mxu0 %v3649
        %4341 = vmatmul.mubr.f32.gmra.mxu0 %v3648
        %v4342 = vpop.f32.mrf.mxu0
        %v4343 = vadd.f32 %v4254, %v4342
        %v4344 = vpop.f32.mrf.mxu0
        %v4345 = vadd.f32 %v4256, %v4344
        %4346 = vmatprep.mubr.f32.mxu0 %v3658
        %4347 = vmatmul.mubr.f32.gmra.mxu0 %v3657
        %v4348 = vpop.f32.mrf.mxu0
        %v4349 = vadd.f32 %v4260, %v4348
        %v4350 = vpop.f32.mrf.mxu0
        %v4351 = vadd.f32 %v4262, %v4350
        %4352 = vmatprep.mubr.f32.mxu0 %v3667
        %4353 = vmatmul.mubr.f32.gmra.mxu0 %v3666
        %v4354 = vpop.f32.mrf.mxu0
        %v4355 = vadd.f32 %v4266, %v4354
        %v4356 = vpop.f32.mrf.mxu0
        %v4357 = vadd.f32 %v4268, %v4356
        %4358 = vdwg.mxu0
        %4359 = vmatprep.subr.mxu0 %v4005
        %4360 = vmatpush1.msra.mxu0 %v4004
        %4361 = vmatprep.subr.mxu0 %v4002
        %4362 = vmatpush1.msra.mxu0 %v4001
        %4363 = vmatprep.subr.mxu0 %v3999
        %4364 = vmatpush1.msra.mxu0 %v3998
        %4365 = vmatprep.subr.mxu0 %v3996
        %4366 = vmatpush1.msra.mxu0 %v3995
        %4367 = vmatprep.subr.mxu0 %v3993
        %4368 = vmatpush1.msra.mxu0 %v3992
        %4369 = vmatprep.subr.mxu0 %v3990
        %4370 = vmatpush1.msra.mxu0 %v3989
        %4371 = vmatprep.subr.mxu0 %v3987
        %4372 = vmatpush1.msra.mxu0 %v3986
        %4373 = vmatprep.subr.mxu0 %v3984
        %4374 = vmatpush1.msra.mxu0 %v3983
        %4375 = vmatprep.subr.mxu0 %v3981
        %4376 = vmatpush1.msra.mxu0 %v3980
        %4377 = vmatprep.subr.mxu0 %v3978
        %4378 = vmatpush1.msra.mxu0 %v3977
        %4379 = vmatprep.subr.mxu0 %v3975
        %4380 = vmatpush1.msra.mxu0 %v3974
        %4381 = vmatprep.subr.mxu0 %v3972
        %4382 = vmatpush1.msra.mxu0 %v3971
        %4383 = vmatprep.subr.mxu0 %v3969
        %4384 = vmatpush1.msra.mxu0 %v3968
        %4385 = vmatprep.subr.mxu0 %v3966
        %4386 = vmatpush1.msra.mxu0 %v3965
        %4387 = vmatprep.subr.mxu0 %v3963
        %4388 = vmatpush1.msra.mxu0 %v3962
        %4389 = vmatprep.subr.mxu0 %v3960
        %4390 = vmatpush1.msra.mxu0 %v3959
        %4391 = vmatprep.subr.mxu0 %v4053
        %4392 = vmatpush2.msra.mxu0 %v4052
        %4393 = vmatprep.subr.mxu0 %v4050
        %4394 = vmatpush2.msra.mxu0 %v4049
        %4395 = vmatprep.subr.mxu0 %v4047
        %4396 = vmatpush2.msra.mxu0 %v4046
        %4397 = vmatprep.subr.mxu0 %v4044
        %4398 = vmatpush2.msra.mxu0 %v4043
        %4399 = vmatprep.subr.mxu0 %v4041
        %4400 = vmatpush2.msra.mxu0 %v4040
        %4401 = vmatprep.subr.mxu0 %v4038
        %4402 = vmatpush2.msra.mxu0 %v4037
        %4403 = vmatprep.subr.mxu0 %v4035
        %4404 = vmatpush2.msra.mxu0 %v4034
        %4405 = vmatprep.subr.mxu0 %v4032
        %4406 = vmatpush2.msra.mxu0 %v4031
        %4407 = vmatprep.subr.mxu0 %v4029
        %4408 = vmatpush2.msra.mxu0 %v4028
        %4409 = vmatprep.subr.mxu0 %v4026
        %4410 = vmatpush2.msra.mxu0 %v4025
        %4411 = vmatprep.subr.mxu0 %v4023
        %4412 = vmatpush2.msra.mxu0 %v4022
        %4413 = vmatprep.subr.mxu0 %v4020
        %4414 = vmatpush2.msra.mxu0 %v4019
        %4415 = vmatprep.subr.mxu0 %v4017
        %4416 = vmatpush2.msra.mxu0 %v4016
        %4417 = vmatprep.subr.mxu0 %v4014
        %4418 = vmatpush2.msra.mxu0 %v4013
        %4419 = vmatprep.subr.mxu0 %v4011
        %4420 = vmatpush2.msra.mxu0 %v4010
        %4421 = vmatprep.subr.mxu0 %v4008
        %4422 = vmatpush2.msra.mxu0 %v4007
        %4423 = vmatprep.mubr.f32.mxu0 %v3642
        %4424 = vmatmul.mubr.f32.gmra.mxu0 %v3641
        %v4425 = vpop.f32.mrf.mxu0
        %v4426 = vadd.f32 %v4337, %v4425
        %v4427 = vpop.f32.mrf.mxu0
        %v4428 = vadd.f32 %v4339, %v4427
        %4429 = vmatprep.mubr.f32.mxu0 %v3651
        %4430 = vmatmul.mubr.f32.gmra.mxu0 %v3650
        %v4431 = vpop.f32.mrf.mxu0
        %v4432 = vadd.f32 %v4343, %v4431
        %v4433 = vpop.f32.mrf.mxu0
        %v4434 = vadd.f32 %v4345, %v4433
        %4435 = vmatprep.mubr.f32.mxu0 %v3660
        %4436 = vmatmul.mubr.f32.gmra.mxu0 %v3659
        %v4437 = vpop.f32.mrf.mxu0
        %v4438 = vadd.f32 %v4349, %v4437
        %v4439 = vpop.f32.mrf.mxu0
        %v4440 = vadd.f32 %v4351, %v4439
        %4441 = vmatprep.mubr.f32.mxu0 %v3669
        %4442 = vmatmul.mubr.f32.gmra.mxu0 %v3668
        %v4443 = vpop.f32.mrf.mxu0
        %v4444 = vadd.f32 %v4355, %v4443
        %v4445 = vpop.f32.mrf.mxu0
        %v4446 = vadd.f32 %v4357, %v4445
        %4447 = vdwg.mxu0
        %4448 = vmatprep.subr.mxu0 0.0
        %4449 = vmatpush1.msra.mxu0 0.0
        %4450 = vmatprep.subr.mxu0 0.0
        %4451 = vmatpush1.msra.mxu0 0.0
        %4452 = vmatprep.subr.mxu0 0.0
        %4453 = vmatpush1.msra.mxu0 0.0
        %4454 = vmatprep.subr.mxu0 0.0
        %4455 = vmatpush1.msra.mxu0 0.0
        %4456 = vmatprep.subr.mxu0 0.0
        %4457 = vmatpush1.msra.mxu0 0.0
        %4458 = vmatprep.subr.mxu0 0.0
        %4459 = vmatpush1.msra.mxu0 0.0
        %4460 = vmatprep.subr.mxu0 0.0
        %4461 = vmatpush1.msra.mxu0 0.0
        %4462 = vmatprep.subr.mxu0 0.0
        %4463 = vmatpush1.msra.mxu0 0.0
        %4464 = vmatprep.subr.mxu0 %v4077
        %4465 = vmatpush1.msra.mxu0 %v4076
        %4466 = vmatprep.subr.mxu0 %v4074
        %4467 = vmatpush1.msra.mxu0 %v4073
        %4468 = vmatprep.subr.mxu0 %v4071
        %4469 = vmatpush1.msra.mxu0 %v4070
        %4470 = vmatprep.subr.mxu0 %v4068
        %4471 = vmatpush1.msra.mxu0 %v4067
        %4472 = vmatprep.subr.mxu0 %v4065
        %4473 = vmatpush1.msra.mxu0 %v4064
        %4474 = vmatprep.subr.mxu0 %v4062
        %4475 = vmatpush1.msra.mxu0 %v4061
        %4476 = vmatprep.subr.mxu0 %v4059
        %4477 = vmatpush1.msra.mxu0 %v4058
        %4478 = vmatprep.subr.mxu0 %v4056
        %4479 = vmatpush1.msra.mxu0 %v4055
        %4480 = vmatprep.subr.mxu0 0.0
        %4481 = vmatpush2.msra.mxu0 0.0
        %4482 = vmatprep.subr.mxu0 0.0
        %4483 = vmatpush2.msra.mxu0 0.0
        %4484 = vmatprep.subr.mxu0 0.0
        %4485 = vmatpush2.msra.mxu0 0.0
        %4486 = vmatprep.subr.mxu0 0.0
        %4487 = vmatpush2.msra.mxu0 0.0
        %4488 = vmatprep.subr.mxu0 0.0
        %4489 = vmatpush2.msra.mxu0 0.0
        %4490 = vmatprep.subr.mxu0 0.0
        %4491 = vmatpush2.msra.mxu0 0.0
        %4492 = vmatprep.subr.mxu0 0.0
        %4493 = vmatpush2.msra.mxu0 0.0
        %4494 = vmatprep.subr.mxu0 0.0
        %4495 = vmatpush2.msra.mxu0 0.0
        %4496 = vmatprep.subr.mxu0 0.0
        %4497 = vmatpush2.msra.mxu0 0.0
        %4498 = vmatprep.subr.mxu0 0.0
        %4499 = vmatpush2.msra.mxu0 0.0
        %4500 = vmatprep.subr.mxu0 0.0
        %4501 = vmatpush2.msra.mxu0 0.0
        %4502 = vmatprep.subr.mxu0 0.0
        %4503 = vmatpush2.msra.mxu0 0.0
        %4504 = vmatprep.subr.mxu0 0.0
        %4505 = vmatpush2.msra.mxu0 0.0
        %4506 = vmatprep.subr.mxu0 0.0
        %4507 = vmatpush2.msra.mxu0 0.0
        %4508 = vmatprep.subr.mxu0 0.0
        %4509 = vmatpush2.msra.mxu0 0.0
        %4510 = vmatprep.subr.mxu0 0.0
        %4511 = vmatpush2.msra.mxu0 0.0
        %4512 = vmatprep.mubr.f32.mxu0 0.0
        %4513 = vmatmul.mubr.f32.gmra.mxu0 %v4081
        %v4514 = vpop.f32.mrf.mxu0
        %v4515 = vadd.f32 %v4426, %v4514
        %v4516 = vpop.f32.mrf.mxu0
        %v4517 = vadd.f32 %v4428, %v4516
        %4518 = vmatprep.mubr.f32.mxu0 0.0
        %4519 = vmatmul.mubr.f32.gmra.mxu0 %v4084
        %v4520 = vpop.f32.mrf.mxu0
        %v4521 = vadd.f32 %v4432, %v4520
        %v4522 = vpop.f32.mrf.mxu0
        %v4523 = vadd.f32 %v4434, %v4522
        %4524 = vmatprep.mubr.f32.mxu0 0.0
        %4525 = vmatmul.mubr.f32.gmra.mxu0 %v4087
        %v4526 = vpop.f32.mrf.mxu0
        %v4527 = vadd.f32 %v4438, %v4526
        %v4528 = vpop.f32.mrf.mxu0
        %v4529 = vadd.f32 %v4440, %v4528
        %4530 = vmatprep.mubr.f32.mxu0 0.0
        %4531 = vmatmul.mubr.f32.gmra.mxu0 %v4090
        %v4532 = vpop.f32.mrf.mxu0
        %v4533 = vadd.f32 %v4444, %v4532
        %v4534 = vpop.f32.mrf.mxu0
        %v4535 = vadd.f32 %v4446, %v4534
        %4536 = vdwg.mxu0
        %4537 = vmatprep.subr.mxu0 0.0
        %4538 = vmatpush1.msra.mxu0 %v3718
        %4539 = vmatprep.subr.mxu0 0.0
        %4540 = vmatpush1.msra.mxu0 %v3715
        %4541 = vmatprep.subr.mxu0 0.0
        %4542 = vmatpush1.msra.mxu0 %v3712
        %4543 = vmatprep.subr.mxu0 0.0
        %4544 = vmatpush1.msra.mxu0 %v3709
        %4545 = vmatprep.subr.mxu0 0.0
        %4546 = vmatpush1.msra.mxu0 %v3706
        %4547 = vmatprep.subr.mxu0 0.0
        %4548 = vmatpush1.msra.mxu0 %v3703
        %4549 = vmatprep.subr.mxu0 0.0
        %4550 = vmatpush1.msra.mxu0 %v3700
        %4551 = vmatprep.subr.mxu0 0.0
        %4552 = vmatpush1.msra.mxu0 %v3697
        %4553 = vmatprep.subr.mxu0 0.0
        %4554 = vmatpush1.msra.mxu0 %v3694
        %4555 = vmatprep.subr.mxu0 0.0
        %4556 = vmatpush1.msra.mxu0 %v3691
        %4557 = vmatprep.subr.mxu0 0.0
        %4558 = vmatpush1.msra.mxu0 %v3688
        %4559 = vmatprep.subr.mxu0 0.0
        %4560 = vmatpush1.msra.mxu0 %v3685
        %4561 = vmatprep.subr.mxu0 0.0
        %4562 = vmatpush1.msra.mxu0 %v3682
        %4563 = vmatprep.subr.mxu0 0.0
        %4564 = vmatpush1.msra.mxu0 %v3679
        %4565 = vmatprep.subr.mxu0 0.0
        %4566 = vmatpush1.msra.mxu0 %v3676
        %4567 = vmatprep.subr.mxu0 0.0
        %4568 = vmatpush1.msra.mxu0 %v3673
        %4569 = vmatprep.subr.mxu0 0.0
        %4570 = vmatpush2.msra.mxu0 %v3766
        %4571 = vmatprep.subr.mxu0 0.0
        %4572 = vmatpush2.msra.mxu0 %v3763
        %4573 = vmatprep.subr.mxu0 0.0
        %4574 = vmatpush2.msra.mxu0 %v3760
        %4575 = vmatprep.subr.mxu0 0.0
        %4576 = vmatpush2.msra.mxu0 %v3757
        %4577 = vmatprep.subr.mxu0 0.0
        %4578 = vmatpush2.msra.mxu0 %v3754
        %4579 = vmatprep.subr.mxu0 0.0
        %4580 = vmatpush2.msra.mxu0 %v3751
        %4581 = vmatprep.subr.mxu0 0.0
        %4582 = vmatpush2.msra.mxu0 %v3748
        %4583 = vmatprep.subr.mxu0 0.0
        %4584 = vmatpush2.msra.mxu0 %v3745
        %4585 = vmatprep.subr.mxu0 0.0
        %4586 = vmatpush2.msra.mxu0 %v3742
        %4587 = vmatprep.subr.mxu0 0.0
        %4588 = vmatpush2.msra.mxu0 %v3739
        %4589 = vmatprep.subr.mxu0 0.0
        %4590 = vmatpush2.msra.mxu0 %v3736
        %4591 = vmatprep.subr.mxu0 0.0
        %4592 = vmatpush2.msra.mxu0 %v3733
        %4593 = vmatprep.subr.mxu0 0.0
        %4594 = vmatpush2.msra.mxu0 %v3730
        %4595 = vmatprep.subr.mxu0 0.0
        %4596 = vmatpush2.msra.mxu0 %v3727
        %4597 = vmatprep.subr.mxu0 0.0
        %4598 = vmatpush2.msra.mxu0 %v3724
        %4599 = vmatprep.subr.mxu0 0.0
        %4600 = vmatpush2.msra.mxu0 %v3721
        %4601 = vmatprep.mubr.f32.mxu0 %v3636
        %4602 = vmatmul.mubr.f32.gmra.mxu0 %v3635
        %v4603 = vpop.f32.mrf.mxu0
        %v4604 = vadd.f32 0.0, %v4603
        %v4605 = vpop.f32.mrf.mxu0
        %4606 = vmatprep.mubr.f32.mxu0 %v3645
        %4607 = vmatmul.mubr.f32.gmra.mxu0 %v3644
        %v4608 = vpop.f32.mrf.mxu0
        %v4609 = vadd.f32 0.0, %v4608
        %v4610 = vpop.f32.mrf.mxu0
        %4611 = vmatprep.mubr.f32.mxu0 %v3654
        %4612 = vmatmul.mubr.f32.gmra.mxu0 %v3653
        %v4613 = vpop.f32.mrf.mxu0
        %v4614 = vadd.f32 0.0, %v4613
        %v4615 = vpop.f32.mrf.mxu0
        %4616 = vmatprep.mubr.f32.mxu0 %v3663
        %4617 = vmatmul.mubr.f32.gmra.mxu0 %v3662
        %v4618 = vpop.f32.mrf.mxu0
        %v4619 = vadd.f32 0.0, %v4618
        %v4620 = vpop.f32.mrf.mxu0
        %4621 = vdwg.mxu0
        %4622 = vmatprep.subr.mxu0 0.0
        %4623 = vmatpush1.msra.mxu0 %v3814
        %4624 = vmatprep.subr.mxu0 0.0
        %4625 = vmatpush1.msra.mxu0 %v3811
        %4626 = vmatprep.subr.mxu0 0.0
        %4627 = vmatpush1.msra.mxu0 %v3808
        %4628 = vmatprep.subr.mxu0 0.0
        %4629 = vmatpush1.msra.mxu0 %v3805
        %4630 = vmatprep.subr.mxu0 0.0
        %4631 = vmatpush1.msra.mxu0 %v3802
        %4632 = vmatprep.subr.mxu0 0.0
        %4633 = vmatpush1.msra.mxu0 %v3799
        %4634 = vmatprep.subr.mxu0 0.0
        %4635 = vmatpush1.msra.mxu0 %v3796
        %4636 = vmatprep.subr.mxu0 0.0
        %4637 = vmatpush1.msra.mxu0 %v3793
        %4638 = vmatprep.subr.mxu0 0.0
        %4639 = vmatpush1.msra.mxu0 %v3790
        %4640 = vmatprep.subr.mxu0 0.0
        %4641 = vmatpush1.msra.mxu0 %v3787
        %4642 = vmatprep.subr.mxu0 0.0
        %4643 = vmatpush1.msra.mxu0 %v3784
        %4644 = vmatprep.subr.mxu0 0.0
        %4645 = vmatpush1.msra.mxu0 %v3781
        %4646 = vmatprep.subr.mxu0 0.0
        %4647 = vmatpush1.msra.mxu0 %v3778
        %4648 = vmatprep.subr.mxu0 0.0
        %4649 = vmatpush1.msra.mxu0 %v3775
        %4650 = vmatprep.subr.mxu0 0.0
        %4651 = vmatpush1.msra.mxu0 %v3772
        %4652 = vmatprep.subr.mxu0 0.0
        %4653 = vmatpush1.msra.mxu0 %v3769
        %4654 = vmatprep.subr.mxu0 0.0
        %4655 = vmatpush2.msra.mxu0 %v3862
        %4656 = vmatprep.subr.mxu0 0.0
        %4657 = vmatpush2.msra.mxu0 %v3859
        %4658 = vmatprep.subr.mxu0 0.0
        %4659 = vmatpush2.msra.mxu0 %v3856
        %4660 = vmatprep.subr.mxu0 0.0
        %4661 = vmatpush2.msra.mxu0 %v3853
        %4662 = vmatprep.subr.mxu0 0.0
        %4663 = vmatpush2.msra.mxu0 %v3850
        %4664 = vmatprep.subr.mxu0 0.0
        %4665 = vmatpush2.msra.mxu0 %v3847
        %4666 = vmatprep.subr.mxu0 0.0
        %4667 = vmatpush2.msra.mxu0 %v3844
        %4668 = vmatprep.subr.mxu0 0.0
        %4669 = vmatpush2.msra.mxu0 %v3841
        %4670 = vmatprep.subr.mxu0 0.0
        %4671 = vmatpush2.msra.mxu0 %v3838
        %4672 = vmatprep.subr.mxu0 0.0
        %4673 = vmatpush2.msra.mxu0 %v3835
        %4674 = vmatprep.subr.mxu0 0.0
        %4675 = vmatpush2.msra.mxu0 %v3832
        %4676 = vmatprep.subr.mxu0 0.0
        %4677 = vmatpush2.msra.mxu0 %v3829
        %4678 = vmatprep.subr.mxu0 0.0
        %4679 = vmatpush2.msra.mxu0 %v3826
        %4680 = vmatprep.subr.mxu0 0.0
        %4681 = vmatpush2.msra.mxu0 %v3823
        %4682 = vmatprep.subr.mxu0 0.0
        %4683 = vmatpush2.msra.mxu0 %v3820
        %4684 = vmatprep.subr.mxu0 0.0
        %4685 = vmatpush2.msra.mxu0 %v3817
        %4686 = vmatprep.mubr.f32.mxu0 %v3638
        %4687 = vmatmul.mubr.f32.gmra.mxu0 %v3637
        %v4688 = vpop.f32.mrf.mxu0
        %v4689 = vadd.f32 %v4604, %v4688
        %v4690 = vpop.f32.mrf.mxu0
        %4691 = vmatprep.mubr.f32.mxu0 %v3647
        %4692 = vmatmul.mubr.f32.gmra.mxu0 %v3646
        %v4693 = vpop.f32.mrf.mxu0
        %v4694 = vadd.f32 %v4609, %v4693
        %v4695 = vpop.f32.mrf.mxu0
        %4696 = vmatprep.mubr.f32.mxu0 %v3656
        %4697 = vmatmul.mubr.f32.gmra.mxu0 %v3655
        %v4698 = vpop.f32.mrf.mxu0
        %v4699 = vadd.f32 %v4614, %v4698
        %v4700 = vpop.f32.mrf.mxu0
        %4701 = vmatprep.mubr.f32.mxu0 %v3665
        %4702 = vmatmul.mubr.f32.gmra.mxu0 %v3664
        %v4703 = vpop.f32.mrf.mxu0
        %v4704 = vadd.f32 %v4619, %v4703
        %v4705 = vpop.f32.mrf.mxu0
        %4706 = vdwg.mxu0
        %4707 = vmatprep.subr.mxu0 0.0
        %4708 = vmatpush1.msra.mxu0 %v3910
        %4709 = vmatprep.subr.mxu0 0.0
        %4710 = vmatpush1.msra.mxu0 %v3907
        %4711 = vmatprep.subr.mxu0 0.0
        %4712 = vmatpush1.msra.mxu0 %v3904
        %4713 = vmatprep.subr.mxu0 0.0
        %4714 = vmatpush1.msra.mxu0 %v3901
        %4715 = vmatprep.subr.mxu0 0.0
        %4716 = vmatpush1.msra.mxu0 %v3898
        %4717 = vmatprep.subr.mxu0 0.0
        %4718 = vmatpush1.msra.mxu0 %v3895
        %4719 = vmatprep.subr.mxu0 0.0
        %4720 = vmatpush1.msra.mxu0 %v3892
        %4721 = vmatprep.subr.mxu0 0.0
        %4722 = vmatpush1.msra.mxu0 %v3889
        %4723 = vmatprep.subr.mxu0 0.0
        %4724 = vmatpush1.msra.mxu0 %v3886
        %4725 = vmatprep.subr.mxu0 0.0
        %4726 = vmatpush1.msra.mxu0 %v3883
        %4727 = vmatprep.subr.mxu0 0.0
        %4728 = vmatpush1.msra.mxu0 %v3880
        %4729 = vmatprep.subr.mxu0 0.0
        %4730 = vmatpush1.msra.mxu0 %v3877
        %4731 = vmatprep.subr.mxu0 0.0
        %4732 = vmatpush1.msra.mxu0 %v3874
        %4733 = vmatprep.subr.mxu0 0.0
        %4734 = vmatpush1.msra.mxu0 %v3871
        %4735 = vmatprep.subr.mxu0 0.0
        %4736 = vmatpush1.msra.mxu0 %v3868
        %4737 = vmatprep.subr.mxu0 0.0
        %4738 = vmatpush1.msra.mxu0 %v3865
        %4739 = vmatprep.subr.mxu0 0.0
        %4740 = vmatpush2.msra.mxu0 %v3958
        %4741 = vmatprep.subr.mxu0 0.0
        %4742 = vmatpush2.msra.mxu0 %v3955
        %4743 = vmatprep.subr.mxu0 0.0
        %4744 = vmatpush2.msra.mxu0 %v3952
        %4745 = vmatprep.subr.mxu0 0.0
        %4746 = vmatpush2.msra.mxu0 %v3949
        %4747 = vmatprep.subr.mxu0 0.0
        %4748 = vmatpush2.msra.mxu0 %v3946
        %4749 = vmatprep.subr.mxu0 0.0
        %4750 = vmatpush2.msra.mxu0 %v3943
        %4751 = vmatprep.subr.mxu0 0.0
        %4752 = vmatpush2.msra.mxu0 %v3940
        %4753 = vmatprep.subr.mxu0 0.0
        %4754 = vmatpush2.msra.mxu0 %v3937
        %4755 = vmatprep.subr.mxu0 0.0
        %4756 = vmatpush2.msra.mxu0 %v3934
        %4757 = vmatprep.subr.mxu0 0.0
        %4758 = vmatpush2.msra.mxu0 %v3931
        %4759 = vmatprep.subr.mxu0 0.0
        %4760 = vmatpush2.msra.mxu0 %v3928
        %4761 = vmatprep.subr.mxu0 0.0
        %4762 = vmatpush2.msra.mxu0 %v3925
        %4763 = vmatprep.subr.mxu0 0.0
        %4764 = vmatpush2.msra.mxu0 %v3922
        %4765 = vmatprep.subr.mxu0 0.0
        %4766 = vmatpush2.msra.mxu0 %v3919
        %4767 = vmatprep.subr.mxu0 0.0
        %4768 = vmatpush2.msra.mxu0 %v3916
        %4769 = vmatprep.subr.mxu0 0.0
        %4770 = vmatpush2.msra.mxu0 %v3913
        %4771 = vmatprep.mubr.f32.mxu0 %v3640
        %4772 = vmatmul.mubr.f32.gmra.mxu0 %v3639
        %v4773 = vpop.f32.mrf.mxu0
        %v4774 = vadd.f32 %v4689, %v4773
        %v4775 = vpop.f32.mrf.mxu0
        %4776 = vmatprep.mubr.f32.mxu0 %v3649
        %4777 = vmatmul.mubr.f32.gmra.mxu0 %v3648
        %v4778 = vpop.f32.mrf.mxu0
        %v4779 = vadd.f32 %v4694, %v4778
        %v4780 = vpop.f32.mrf.mxu0
        %4781 = vmatprep.mubr.f32.mxu0 %v3658
        %4782 = vmatmul.mubr.f32.gmra.mxu0 %v3657
        %v4783 = vpop.f32.mrf.mxu0
        %v4784 = vadd.f32 %v4699, %v4783
        %v4785 = vpop.f32.mrf.mxu0
        %4786 = vmatprep.mubr.f32.mxu0 %v3667
        %4787 = vmatmul.mubr.f32.gmra.mxu0 %v3666
        %v4788 = vpop.f32.mrf.mxu0
        %v4789 = vadd.f32 %v4704, %v4788
        %v4790 = vpop.f32.mrf.mxu0
        %4791 = vdwg.mxu0
        %4792 = vmatprep.subr.mxu0 0.0
        %4793 = vmatpush1.msra.mxu0 %v4006
        %4794 = vmatprep.subr.mxu0 0.0
        %4795 = vmatpush1.msra.mxu0 %v4003
        %4796 = vmatprep.subr.mxu0 0.0
        %4797 = vmatpush1.msra.mxu0 %v4000
        %4798 = vmatprep.subr.mxu0 0.0
        %4799 = vmatpush1.msra.mxu0 %v3997
        %4800 = vmatprep.subr.mxu0 0.0
        %4801 = vmatpush1.msra.mxu0 %v3994
        %4802 = vmatprep.subr.mxu0 0.0
        %4803 = vmatpush1.msra.mxu0 %v3991
        %4804 = vmatprep.subr.mxu0 0.0
        %4805 = vmatpush1.msra.mxu0 %v3988
        %4806 = vmatprep.subr.mxu0 0.0
        %4807 = vmatpush1.msra.mxu0 %v3985
        %4808 = vmatprep.subr.mxu0 0.0
        %4809 = vmatpush1.msra.mxu0 %v3982
        %4810 = vmatprep.subr.mxu0 0.0
        %4811 = vmatpush1.msra.mxu0 %v3979
        %4812 = vmatprep.subr.mxu0 0.0
        %4813 = vmatpush1.msra.mxu0 %v3976
        %4814 = vmatprep.subr.mxu0 0.0
        %4815 = vmatpush1.msra.mxu0 %v3973
        %4816 = vmatprep.subr.mxu0 0.0
        %4817 = vmatpush1.msra.mxu0 %v3970
        %4818 = vmatprep.subr.mxu0 0.0
        %4819 = vmatpush1.msra.mxu0 %v3967
        %4820 = vmatprep.subr.mxu0 0.0
        %4821 = vmatpush1.msra.mxu0 %v3964
        %4822 = vmatprep.subr.mxu0 0.0
        %4823 = vmatpush1.msra.mxu0 %v3961
        %4824 = vmatprep.subr.mxu0 0.0
        %4825 = vmatpush2.msra.mxu0 %v4054
        %4826 = vmatprep.subr.mxu0 0.0
        %4827 = vmatpush2.msra.mxu0 %v4051
        %4828 = vmatprep.subr.mxu0 0.0
        %4829 = vmatpush2.msra.mxu0 %v4048
        %4830 = vmatprep.subr.mxu0 0.0
        %4831 = vmatpush2.msra.mxu0 %v4045
        %4832 = vmatprep.subr.mxu0 0.0
        %4833 = vmatpush2.msra.mxu0 %v4042
        %4834 = vmatprep.subr.mxu0 0.0
        %4835 = vmatpush2.msra.mxu0 %v4039
        %4836 = vmatprep.subr.mxu0 0.0
        %4837 = vmatpush2.msra.mxu0 %v4036
        %4838 = vmatprep.subr.mxu0 0.0
        %4839 = vmatpush2.msra.mxu0 %v4033
        %4840 = vmatprep.subr.mxu0 0.0
        %4841 = vmatpush2.msra.mxu0 %v4030
        %4842 = vmatprep.subr.mxu0 0.0
        %4843 = vmatpush2.msra.mxu0 %v4027
        %4844 = vmatprep.subr.mxu0 0.0
        %4845 = vmatpush2.msra.mxu0 %v4024
        %4846 = vmatprep.subr.mxu0 0.0
        %4847 = vmatpush2.msra.mxu0 %v4021
        %4848 = vmatprep.subr.mxu0 0.0
        %4849 = vmatpush2.msra.mxu0 %v4018
        %4850 = vmatprep.subr.mxu0 0.0
        %4851 = vmatpush2.msra.mxu0 %v4015
        %4852 = vmatprep.subr.mxu0 0.0
        %4853 = vmatpush2.msra.mxu0 %v4012
        %4854 = vmatprep.subr.mxu0 0.0
        %4855 = vmatpush2.msra.mxu0 %v4009
        %4856 = vmatprep.mubr.f32.mxu0 %v3642
        %4857 = vmatmul.mubr.f32.gmra.mxu0 %v3641
        %v4858 = vpop.f32.mrf.mxu0
        %v4859 = vadd.f32 %v4774, %v4858
        %v4860 = vpop.f32.mrf.mxu0
        %4861 = vmatprep.mubr.f32.mxu0 %v3651
        %4862 = vmatmul.mubr.f32.gmra.mxu0 %v3650
        %v4863 = vpop.f32.mrf.mxu0
        %v4864 = vadd.f32 %v4779, %v4863
        %v4865 = vpop.f32.mrf.mxu0
        %4866 = vmatprep.mubr.f32.mxu0 %v3660
        %4867 = vmatmul.mubr.f32.gmra.mxu0 %v3659
        %v4868 = vpop.f32.mrf.mxu0
        %v4869 = vadd.f32 %v4784, %v4868
        %v4870 = vpop.f32.mrf.mxu0
        %4871 = vmatprep.mubr.f32.mxu0 %v3669
        %4872 = vmatmul.mubr.f32.gmra.mxu0 %v3668
        %v4873 = vpop.f32.mrf.mxu0
        %v4874 = vadd.f32 %v4789, %v4873
        %v4875 = vpop.f32.mrf.mxu0
        %4876 = vdwg.mxu0
        %4877 = vmatprep.subr.mxu0 0.0
        %4878 = vmatpush1.msra.mxu0 0.0
        %4879 = vmatprep.subr.mxu0 0.0
        %4880 = vmatpush1.msra.mxu0 0.0
        %4881 = vmatprep.subr.mxu0 0.0
        %4882 = vmatpush1.msra.mxu0 0.0
        %4883 = vmatprep.subr.mxu0 0.0
        %4884 = vmatpush1.msra.mxu0 0.0
        %4885 = vmatprep.subr.mxu0 0.0
        %4886 = vmatpush1.msra.mxu0 0.0
        %4887 = vmatprep.subr.mxu0 0.0
        %4888 = vmatpush1.msra.mxu0 0.0
        %4889 = vmatprep.subr.mxu0 0.0
        %4890 = vmatpush1.msra.mxu0 0.0
        %4891 = vmatprep.subr.mxu0 0.0
        %4892 = vmatpush1.msra.mxu0 0.0
        %4893 = vmatprep.subr.mxu0 0.0
        %4894 = vmatpush1.msra.mxu0 %v4078
        %4895 = vmatprep.subr.mxu0 0.0
        %4896 = vmatpush1.msra.mxu0 %v4075
        %4897 = vmatprep.subr.mxu0 0.0
        %4898 = vmatpush1.msra.mxu0 %v4072
        %4899 = vmatprep.subr.mxu0 0.0
        %4900 = vmatpush1.msra.mxu0 %v4069
        %4901 = vmatprep.subr.mxu0 0.0
        %4902 = vmatpush1.msra.mxu0 %v4066
        %4903 = vmatprep.subr.mxu0 0.0
        %4904 = vmatpush1.msra.mxu0 %v4063
        %4905 = vmatprep.subr.mxu0 0.0
        %4906 = vmatpush1.msra.mxu0 %v4060
        %4907 = vmatprep.subr.mxu0 0.0
        %4908 = vmatpush1.msra.mxu0 %v4057
        %4909 = vmatprep.subr.mxu0 0.0
        %4910 = vmatpush2.msra.mxu0 0.0
        %4911 = vmatprep.subr.mxu0 0.0
        %4912 = vmatpush2.msra.mxu0 0.0
        %4913 = vmatprep.subr.mxu0 0.0
        %4914 = vmatpush2.msra.mxu0 0.0
        %4915 = vmatprep.subr.mxu0 0.0
        %4916 = vmatpush2.msra.mxu0 0.0
        %4917 = vmatprep.subr.mxu0 0.0
        %4918 = vmatpush2.msra.mxu0 0.0
        %4919 = vmatprep.subr.mxu0 0.0
        %4920 = vmatpush2.msra.mxu0 0.0
        %4921 = vmatprep.subr.mxu0 0.0
        %4922 = vmatpush2.msra.mxu0 0.0
        %4923 = vmatprep.subr.mxu0 0.0
        %4924 = vmatpush2.msra.mxu0 0.0
        %4925 = vmatprep.subr.mxu0 0.0
        %4926 = vmatpush2.msra.mxu0 0.0
        %4927 = vmatprep.subr.mxu0 0.0
        %4928 = vmatpush2.msra.mxu0 0.0
        %4929 = vmatprep.subr.mxu0 0.0
        %4930 = vmatpush2.msra.mxu0 0.0
        %4931 = vmatprep.subr.mxu0 0.0
        %4932 = vmatpush2.msra.mxu0 0.0
        %4933 = vmatprep.subr.mxu0 0.0
        %4934 = vmatpush2.msra.mxu0 0.0
        %4935 = vmatprep.subr.mxu0 0.0
        %4936 = vmatpush2.msra.mxu0 0.0
        %4937 = vmatprep.subr.mxu0 0.0
        %4938 = vmatpush2.msra.mxu0 0.0
        %4939 = vmatprep.subr.mxu0 0.0
        %4940 = vmatpush2.msra.mxu0 0.0
        %4941 = vmatprep.mubr.f32.mxu0 0.0
        %4942 = vmatmul.mubr.f32.gmra.mxu0 %v4081
        %v4943 = vpop.f32.mrf.mxu0
        %v4944 = vadd.f32 %v4859, %v4943
        %v4945 = vpop.f32.mrf.mxu0
        %4946 = vmatprep.mubr.f32.mxu0 0.0
        %4947 = vmatmul.mubr.f32.gmra.mxu0 %v4084
        %v4948 = vpop.f32.mrf.mxu0
        %v4949 = vadd.f32 %v4864, %v4948
        %v4950 = vpop.f32.mrf.mxu0
        %4951 = vmatprep.mubr.f32.mxu0 0.0
        %4952 = vmatmul.mubr.f32.gmra.mxu0 %v4087
        %v4953 = vpop.f32.mrf.mxu0
        %v4954 = vadd.f32 %v4869, %v4953
        %v4955 = vpop.f32.mrf.mxu0
        %4956 = vmatprep.mubr.f32.mxu0 0.0
        %4957 = vmatmul.mubr.f32.gmra.mxu0 %v4090
        %v4958 = vpop.f32.mrf.mxu0
        %v4959 = vadd.f32 %v4874, %v4958
        %v4960 = vpop.f32.mrf.mxu0
        %4961 = vdwg.mxu0
        %v4962 = vld [vmem:[%s2] sm:$0xff]
        %v4963 = vld [vmem:[%s2 + $0x8] sm:$0xff]
        %v4964 = vld [vmem:[%s2 + $0x10] sm:$0xff]
        %v4965 = vld [vmem:[%s2 + $0x18] sm:$0xff]
        %4967 = vset.pattern.permute.xlu0 0
        %4968 = vperm.xlu0 %4967, %v4962
        %v4969 = vpop.permute.xlu0 %4968
        %4972 = vset.pattern.permute.xlu0 0
        %4973 = vperm.xlu0 %4972, %v4963
        %v4974 = vpop.permute.xlu0 %4973
        %4977 = vset.pattern.permute.xlu0 0
        %4978 = vperm.xlu0 %4977, %v4964
        %v4979 = vpop.permute.xlu0 %4978
        %4982 = vset.pattern.permute.xlu0 0
        %4983 = vperm.xlu0 %4982, %v4965
        %v4984 = vpop.permute.xlu0 %4983
        %v4986 = vmul.f32 %v4515, %v4969
        %v4987 = vmul.f32 %v4517, %v4969
        %v4988 = vmul.f32 %v4944, %v4969
        %v4989 = vmul.f32 %v4521, %v4974
        %v4990 = vmul.f32 %v4523, %v4974
        %v4991 = vmul.f32 %v4949, %v4974
        %v4992 = vmul.f32 %v4527, %v4979
        %v4993 = vmul.f32 %v4529, %v4979
        %v4994 = vmul.f32 %v4954, %v4979
        %v4995 = vmul.f32 %v4533, %v4984
        %v4996 = vmul.f32 %v4535, %v4984
        %v4997 = vmul.f32 %v4959, %v4984
        %v4998 = vld [vmem:[%s3] sm:$0xff]
        %v4999 = vld [vmem:[%s3 + $0x8] sm:$0xff]
        %v5000 = vld [vmem:[%s3 + $0x10] sm:$0xff]
        %v5001 = vld [vmem:[%s3 + $0x18] sm:$0xff]
        %5003 = vset.pattern.permute.xlu0 0
        %5004 = vperm.xlu0 %5003, %v4998
        %v5005 = vpop.permute.xlu0 %5004
        %5008 = vset.pattern.permute.xlu0 0
        %5009 = vperm.xlu0 %5008, %v4999
        %v5010 = vpop.permute.xlu0 %5009
        %5013 = vset.pattern.permute.xlu0 0
        %5014 = vperm.xlu0 %5013, %v5000
        %v5015 = vpop.permute.xlu0 %5014
        %5018 = vset.pattern.permute.xlu0 0
        %5019 = vperm.xlu0 %5018, %v5001
        %v5020 = vpop.permute.xlu0 %5019
        %v5022 = vadd.f32 %v4986, %v5005
        %v5023 = vadd.f32 %v4987, %v5005
        %v5024 = vadd.f32 %v4988, %v5005
        %v5025 = vadd.f32 %v4989, %v5010
        %v5026 = vadd.f32 %v4990, %v5010
        %v5027 = vadd.f32 %v4991, %v5010
        %v5028 = vadd.f32 %v4992, %v5015
        %v5029 = vadd.f32 %v4993, %v5015
        %v5030 = vadd.f32 %v4994, %v5015
        %v5031 = vadd.f32 %v4995, %v5020
        %v5032 = vadd.f32 %v4996, %v5020
        %v5033 = vadd.f32 %v4997, %v5020
        %v5034 = vld [vmem:[%s202] sm:$0xff]
        %v5035 = vld [vmem:[%s202 + $0x8] sm:$0xff]
        %v5036 = vld [vmem:[%s202 + $0x10] sm:$0xff]
        %v5037 = vld [vmem:[%s202 + $0x18] sm:$0xff]
        %v5038 = vld [vmem:[%s202 + $0x20] sm:$0xff]
        %v5039 = vld [vmem:[%s202 + $0x28] sm:$0xff]
        %5040 = vst [vmem:[%s230] sm:$0xff] %v5034
        %5041 = vst [vmem:[%s230 + $0x8] sm:$0xff] %v5035
        %5042 = vst [vmem:[%s230 + $0x10] sm:$0xff] %v5036
        %5043 = vst [vmem:[%s230 + $0x18] sm:$0xff] %v5037
        %5044 = vst [vmem:[%s230 + $0x20] sm:$0xff] %v5038
        %5045 = vst [vmem:[%s230 + $0x28] sm:$0xff] %v5039
        %5046 = vst [vmem:[%s230 + $0x30] sm:$0xff] %v5022
        %5047 = vst [vmem:[%s230 + $0x38] sm:$0xff] %v5023
        %5048 = vst [vmem:[%s230 + $0x40] sm:$0xff] %v5024
        %5049 = vst [vmem:[%s230 + $0x48] sm:$0xff] %v5025
        %5050 = vst [vmem:[%s230 + $0x50] sm:$0xff] %v5026
        %5051 = vst [vmem:[%s230 + $0x58] sm:$0xff] %v5027
        %5052 = vst [vmem:[%s230 + $0x60] sm:$0xff] %v5028
        %5053 = vst [vmem:[%s230 + $0x68] sm:$0xff] %v5029
        %5054 = vst [vmem:[%s230 + $0x70] sm:$0xff] %v5030
        %5055 = vst [vmem:[%s230 + $0x78] sm:$0xff] %v5031
        %5056 = vst [vmem:[%s230 + $0x80] sm:$0xff] %v5032
        %5057 = vst [vmem:[%s230 + $0x88] sm:$0xff] %v5033
        %s5058 = sand.u32 %s119, 1
        %s5059 = scalar_lea.sflag [#allocation6], %s5058
        %s5060 = sand.u32 %s119, 1
        %s5061 = smul.addr %s5060, 144
        %s5062 = scalar_lea.vmem [#allocation9], %s5061
        // Predicated region
        $region45: #{tpu_custom_call.1} parent=35 // pred_check
          %p5063 = pneg %p129
        $region46: #{tpu_custom_call.1} parent=35 // pred_check_branch
          %5065 = sbr.rel (%p5063) target = $region48
        $region47: #{tpu_custom_call.1} parent=35 // pred_region
          %s5067 = ssub.s32 2304, 2304
          %5068 = vsyncadd %s5059, %s5067
          %s5069 = smul.addr %s22, 18
          %s5070 = smul.addr %s5069, 128
          %s5071 = scalar_lea.hbm %s4, %s5070
          %s5072 = sshll.u32 %s5062, 4
          %s5073 = int_to_ptr.vmem [resolvable:$true] %s5072
          %5078 = dma.vmem_to_hbm [thread:$0]  %s5073, 2304, %s5071, %s5059, 384, 384, 24
        $region48: #{tpu_custom_call.1} parent=35 // pred_fallthru
          _
      $region36: #{tpu_custom_call.1} parent=5 // pred_fallthru
        _
      %p5079 = scmp.le.s32.totalorder 2, %s17
      // Predicated region
      $region49: #{tpu_custom_call.1} parent=5 // pred_check
        %p5080 = pneg %p5079
      $region50: #{tpu_custom_call.1} parent=5 // pred_check_branch
        %5082 = sbr.rel (%p5080) target = $region52
      $region51: #{tpu_custom_call.1} parent=5 // pred_region
        %s5083 = ssub.s32 %s17, 2
        // Predicated region
        $region53: #{tpu_custom_call.1} parent=51 // pred_check
          %p5084 = pneg %p135
        $region54: #{tpu_custom_call.1} parent=51 // pred_check_branch
          %5086 = sbr.rel (%p5084) target = $region56
        $region55: #{tpu_custom_call.1} parent=51 // pred_region
          %s5087 = sand.u32 %s120, 1
          %s5088 = scalar_lea.sflag [#allocation6], %s5087
          %s5089 = sand.u32 %s120, 1
          %s5090 = smul.addr %s5089, 144
          %s5091 = scalar_lea.vmem [#allocation9], %s5090
          %5092 = dma.done %s5088, 2304
        $region56: #{tpu_custom_call.1} parent=51 // pred_fallthru
          _
      $region52: #{tpu_custom_call.1} parent=5 // pred_fallthru
        _
    $region6: #{tpu_custom_call.1} parent=1 // loop_footer
      %s21 = sadd.s32 1, %s17
    $region7: #{tpu_custom_call.1} parent=1 // loop_footer_branch
      %16 = sbr.rel target = $region3
    $region8: #{tpu_custom_call.1} parent=1 // loop_exit
      _
    %5093 = vsyncpa [#allocation5], 1
    %s5094 = scalar_lea.sflag [#allocation5], 1
    %5095 = vsyncpa %s5094, 1
    %5096 = vsyncpa [#allocation8], 1
    %5097 = vsyncpa [#allocation6], 1
    %s5098 = scalar_lea.sflag [#allocation6], 1
    %5099 = vsyncpa %s5098, 1

</llo_original>
